<compile_context>
chip_gen: v5e
topology: v5e:2x2
jax: 0.10.0
libtpu: 0.0.40
codegen_flags: <defaults>
</compile_context>

<pallas_src>
import functools
import numpy as np
import jax
import jax.numpy as jnp
from jax import lax
from jax.experimental import pallas as pl
from jax.experimental.pallas import tpu as pltpu


# ------------------------------ fused kernel --------------------------------

def _fused_kernel(x_ref, padj_ref, coords_ref, coords_t_ref, g_ref, l_ref, o_ref,
                  *, num_layers, bf, seq, cin, feat_dim, g_off, l_off):
    f32 = jnp.float32
    L, BF, S, C, F = num_layers, bf, seq, cin, feat_dim
    C3, F2 = 3 * C, 2 * F
    M = BF * S

    # ----- resident encoder + pool weights (one slab, static row/col slices) -----
    o_ew1, o_ew2, o_pw1, o_pw2, o_pwl, o_eb1, o_eb2, o_pb1, o_pb2, o_pbl = g_off
    ew1t = g_ref[o_ew1:o_ew1 + C,  0:C3]      # (C, 3C)
    ew2t = g_ref[o_ew2:o_ew2 + C3, 0:F]       # (3C, F)
    pw1t = g_ref[o_pw1:o_pw1 + F,  0:F2]      # (F, 2F)
    pw2t = g_ref[o_pw2:o_pw2 + F2, 0:F]       # (2F, F)
    pwl  = g_ref[o_pwl:o_pwl + 1,  0:F]       # (1, F)  pooling linear weight row
    eb1  = g_ref[o_eb1:o_eb1 + 1,  0:C3]
    eb2  = g_ref[o_eb2:o_eb2 + 1,  0:F]
    pb1  = g_ref[o_pb1:o_pb1 + 1,  0:F2]
    pb2  = g_ref[o_pb2:o_pb2 + 1,  0:F]
    pbl  = g_ref[o_pbl:o_pbl + 1,  0:1]

    # coordinate rows/columns for the in-kernel PositionAdjacency
    cx_row = coords_ref[0:1, :]               # (1, S)
    cy_row = coords_ref[1:2, :]
    cx_col = coords_t_ref[:, 0:1]             # (S, 1)
    cy_col = coords_t_ref[:, 1:2]

    # -------- VPRGNN encoder MLP([C, 3C, F]) applied per node (1x1 conv) --------
    # TODO(synk): dropout evaluated as identity (inference semantics).
    x = x_ref[...].reshape(M, C)
    h = jnp.maximum(jnp.dot(x, ew1t, preferred_element_type=f32) + eb1, 0.0)
    feat = jnp.dot(h, ew2t, preferred_element_type=f32) + eb2               # (M, F)

    # --------------------------------- GNN layers -------------------------------
    (r_a1, r_a2, r_wa, r_wr, r_wla, r_wlr,
     r_ab1, r_ab2, r_ba, r_br, r_bl) = l_off
    for l in range(L):
        # per-layer weight views from the stacked (L, rows, 2F) slab
        a1  = l_ref[l, r_a1:r_a1 + F,   0:F2]
        a2  = l_ref[l, r_a2:r_a2 + F2,  0:F]
        wa  = l_ref[l, r_wa:r_wa + F,   0:F]
        wr  = l_ref[l, r_wr:r_wr + F,   0:F]
        wla = l_ref[l, r_wla:r_wla + F, 0:F]
        wlr = l_ref[l, r_wlr:r_wlr + F, 0:F]
        ab1 = l_ref[l, r_ab1:r_ab1 + 1, 0:F2]
        ab2 = l_ref[l, r_ab2:r_ab2 + 1, 0:F]
        ba  = l_ref[l, r_ba:r_ba + 1,   0:F]
        br  = l_ref[l, r_br:r_br + 1,   0:F]
        bl  = l_ref[l, r_bl:r_bl + 1,   0:F]

        # --- PositionAdjacency: adj_r[i,j] = exp(-d^T P d), L1-normalized rows ---
        m0, m1 = padj_ref[l, 0], padj_ref[l, 1]
        p00, p01x2, p11 = padj_ref[l, 2], padj_ref[l, 3], padj_ref[l, 4]
        d0 = cx_col - cx_row - m0                                           # (S, S)
        d1 = cy_col - cy_row - m1
        kq = jnp.exp(-(p00 * d0 * d0 + p01x2 * d0 * d1 + p11 * d1 * d1))
        adj_r = kq / jnp.maximum(jnp.sum(kq, axis=-1, keepdims=True), 1e-12)

        # --- Attention: adj_a = softmax(mlp(feat) @ mlp(feat)^T, axis=-1) --------
        ah = jnp.maximum(jnp.dot(feat, a1, preferred_element_type=f32) + ab1, 0.0)
        af = jnp.dot(ah, a2, preferred_element_type=f32) + ab2              # (M, F)
        af3 = af.reshape(BF, S, F)
        feat3 = feat.reshape(BF, S, F)
        scores = jnp.einsum('bqd,bkd->bqk', af3, af3,
                            preferred_element_type=f32)                     # (BF, S, S)
        scores = scores - jnp.max(scores, axis=-1, keepdims=True)
        es = jnp.exp(scores)
        adj_a = es / jnp.sum(es, axis=-1, keepdims=True)

        # --- graph convolutions (per element) + fused linear(cat(.,.)) -----------
        fa = jnp.einsum('bqk,bkd->bqd', adj_a, feat3,
                        preferred_element_type=f32).reshape(M, F)
        adj_rb = jnp.broadcast_to(adj_r, (BF, S, S))
        fr = jnp.einsum('bqk,bkd->bqd', adj_rb, feat3,
                        preferred_element_type=f32).reshape(M, F)
        ga = jnp.maximum(jnp.dot(fa, wa, preferred_element_type=f32) + ba, 0.0)
        gr = jnp.maximum(jnp.dot(fr, wr, preferred_element_type=f32) + br, 0.0)
        # cat([ga, gr]) @ Wl^T  ==  ga @ Wl[:, :F]^T + gr @ Wl[:, F:]^T
        feat = (jnp.dot(ga, wla, preferred_element_type=f32)
                + jnp.dot(gr, wlr, preferred_element_type=f32) + bl)        # (M, F)

    # -------------------- AttnPooling + L2 normalization ------------------------
    ph = jnp.maximum(jnp.dot(feat, pw1t, preferred_element_type=f32) + pb1, 0.0)
    ph = jnp.dot(ph, pw2t, preferred_element_type=f32) + pb2                # (M, F)
    for b in range(BF):
        ph_b = ph[b * S:(b + 1) * S, :]                                     # (S, F)
        feat_b = feat[b * S:(b + 1) * S, :]                                 # (S, F)
        # logits in LANE layout (1, S): lgt[0, s] = pwl . ph_b[s] + pbl
        lgt = lax.dot_general(pwl, ph_b, (((1,), (1,)), ((), ())),
                              preferred_element_type=f32) + pbl             # (1, S)
        lgt = lgt - jnp.max(lgt, axis=-1, keepdims=True)
        e = jnp.exp(lgt)
        w = e / jnp.sum(e, axis=-1, keepdims=True)                          # (1, S)
        agg = jnp.dot(w, feat_b, preferred_element_type=f32)                # (1, F) MXU
        nrm = jnp.maximum(jnp.sqrt(jnp.sum(agg * agg, axis=-1, keepdims=True)), 1e-12)
        o_ref[b] = (agg / nrm).astype(o_ref.dtype)


# -------------------------------- JAX glue -----------------------------------

def _pack_rows(mats, width):
    """Stack 2-D matrices top-to-bottom, zero-padding lanes to `width` columns."""
    rows, offs, r = [], [], 0
    for m in mats:
        m = jnp.asarray(m, jnp.float32)
        rows.append(jnp.pad(m, ((0, 0), (0, width - m.shape[1]))))
        offs.append(r)
        r += m.shape[0]
    return jnp.concatenate(rows, axis=0), tuple(offs)


def make_coords(H, W):
    """normalized_coordinates(): (2, S) normalized [x, y] per node."""
    gh, gw = jnp.meshgrid(jnp.arange(H, dtype=jnp.float32),
                          jnp.arange(W, dtype=jnp.float32), indexing="ij")
    gh = (gh - H // 2) / (H * 0.7)
    gw = (gw - W // 2) / (W * 0.7)
    return jnp.stack([gw, gh]).reshape(2, -1)            # (2, S)


def graph_layer_forward(feature_map, params):
    # feature_map: NCHW [N, descriptor_dim, H, W]
    N, C, H, W = feature_map.shape
    S = H * W
    x = jnp.transpose(feature_map.reshape(N, C, S), (0, 2, 1))       # (N, S, C)

    enc, pool, layers = params["encoder"], params["pool"], params["layers"]
    L = len(layers)
    F = enc["w2"].shape[0]
    F2, C3 = 2 * F, 3 * C

    # PositionAdjacency precision-matrix scalars per layer (SMEM input):
    # prec = [[a^2, a*b], [a*b, b^2 + c^2]] with a=exp(lc0), b=lc1, c=exp(lc2)
    prows = []
    for lp in layers:
        a = jnp.exp(lp["logChol"][0])
        b = lp["logChol"][1]
        c = jnp.exp(lp["logChol"][2])
        prows.append(jnp.stack([lp["mean"][0], lp["mean"][1],
                                a * a, 2.0 * a * b, b * b + c * c]))
    padj = jnp.stack(prows).astype(jnp.float32)                      # (L, 5)

    coords = make_coords(H, W)                                       # (2, S)
    coords_t = coords.T                                              # (S, 2)

    # One slab for encoder + pooling weights/biases (batch-invariant, resident).
    gslab, g_off = _pack_rows(
        [enc["w1"].T, enc["w2"].T, pool["w1"].T, pool["w2"].T, pool["wl"],
         enc["b1"].reshape(1, -1), enc["b2"].reshape(1, -1),
         pool["b1"].reshape(1, -1), pool["b2"].reshape(1, -1),
         pool["bl"].reshape(1, 1)],
        max(C3, F2))

    # One stacked (L, rows, 2F) slab for all per-layer weights/biases.
    def layer_rows(lp):
        wlt = lp["wl"].T                                             # (2F, F)
        return [lp["attn_w1"].T, lp["attn_w2"].T, lp["wa"].T, lp["wr"].T,
                wlt[:F, :], wlt[F:, :],
                lp["attn_b1"].reshape(1, -1), lp["attn_b2"].reshape(1, -1),
                lp["ba"].reshape(1, -1), lp["br"].reshape(1, -1),
                lp["bl"].reshape(1, -1)]
    packed = [_pack_rows(layer_rows(lp), F2) for lp in layers]
    lslab = jnp.stack([p[0] for p in packed])                        # (L, rows, 2F)
    l_off = packed[0][1]

    # Batch folding: BF elements per grid step -> M = BF*S rows per shared-weight
    # matmul, while (for even N) two "parallel" steps remain so both v7x
    # TensorCores stay busy (v5e/v6e are single-TC, any split is fine there).
    BF = N // 2 if (N >= 2 and N % 2 == 0) else 1
    NB = N // BF

    # VMEM scaling guard: (BF,S,S) scores/adjacencies grow as S^2; v7x has only
    # 64 MiB VMEM (32 MiB scoped default).  Fail loudly instead of OOM-ing; at
    # that point the attention block needs S-tiling (flash-style online softmax).
    work_bytes = 4 * (5 * BF * S * S + 8 * BF * S * F2
                      + 2 * (gslab.size + lslab.size) + 4 * BF * S * C)
    assert work_bytes < 32 * 1024 * 1024, \
        "S^2 working set too large for a fully-resident kernel; tile the S axis."

    kernel = functools.partial(_fused_kernel, num_layers=L, bf=BF, seq=S, cin=C,
                               feat_dim=F, g_off=g_off, l_off=l_off)
    out = pl.pallas_call(
        kernel,
        out_shape=jax.ShapeDtypeStruct((N, 1, F), x.dtype),
        grid=(NB,),
        in_specs=[
            pl.BlockSpec((BF, S, C), lambda i: (i, 0, 0)),            # per-step batch
            pl.BlockSpec(memory_space=pltpu.MemorySpace.SMEM),        # (L, 5) scalars
            pl.BlockSpec((2, S), lambda i: (0, 0)),                   # coords (resident)
            pl.BlockSpec((S, 2), lambda i: (0, 0)),
            pl.BlockSpec(gslab.shape, lambda i: (0, 0)),              # enc + pool slab
            pl.BlockSpec(lslab.shape, lambda i: (0, 0, 0)),           # per-layer slab
        ],
        out_specs=pl.BlockSpec((BF, 1, F), lambda i: (i, 0, 0)),
        compiler_params=pltpu.CompilerParams(
            dimension_semantics=("parallel",),
            vmem_limit_bytes=32 * 1024 * 1024),
    )(x, padj, coords, coords_t, gslab, lslab)
    return out[:, 0, :]


def init_params(key, descriptor_dim, num_layers):
    D = descriptor_dim
    F = 2 * D
    kiter = iter(jax.random.split(key, 8 + 16 * num_layers))

    def linear(cout, cin):
        bound = 1.0 / np.sqrt(cin)
        w = jax.random.uniform(next(kiter), (cout, cin), jnp.float32, -bound, bound)
        b = jax.random.uniform(next(kiter), (cout,), jnp.float32, -bound, bound)
        return w, b

    enc_w1, enc_b1 = linear(3 * D, D)
    enc_w2, enc_b2 = linear(F, 3 * D)
    params = {"encoder": {"w1": enc_w1, "b1": enc_b1, "w2": enc_w2, "b2": enc_b2}}

    layers = []
    for _ in range(num_layers):
        aw1, ab1 = linear(2 * F, F)      # Attention.mlp: F -> 2F
        aw2, ab2 = linear(F, 2 * F)      #                2F -> F
        wa, ba = linear(F, F)            # GC_a.linear
        wr, br = linear(F, F)            # GC_r.linear
        wl, bl = linear(F, 2 * F)        # GCNLayer.linear (cat -> F)
        layers.append(dict(attn_w1=aw1, attn_b1=ab1, attn_w2=aw2, attn_b2=ab2,
                           wa=wa, ba=ba, wr=wr, br=br, wl=wl, bl=bl,
                           mean=jnp.zeros((2,), jnp.float32),
                           logChol=jnp.full((3,), -2.3, jnp.float32)))
    params["layers"] = layers

    pw1, pb1 = linear(2 * F, F)          # AttnPooling.mlp: F -> 2F
    pw2, pb2 = linear(F, 2 * F)          #                  2F -> F
    plw, plb = linear(1, F)              # AttnPooling.linear: F -> 1
    params["pool"] = {"w1": pw1, "b1": pb1, "w2": pw2, "b2": pb2, "wl": plw, "bl": plb}
    return params


if __name__ == "__main__":
    config = {"descriptor_dim": 16, "GNN_layers": 2}
    N, D, H, W = 2, config["descriptor_dim"], 8, 8

    key = jax.random.PRNGKey(0)
    kx, kp = jax.random.split(key)
    feature_map = jax.random.normal(kx, (N, D, H, W), jnp.float32)
    params = init_params(kp, D, config["GNN_layers"])

    fwd = jax.jit(graph_layer_forward)
    out = fwd(feature_map, params)
    jax.block_until_ready(out)
    assert out.shape == (N, 2 * D), out.shape
    assert bool(jnp.all(jnp.isfinite(out)))
    print("KERNEL_OK")
</pallas_src>

<mosaic_0001>
module attributes {stable_mosaic.version = 11 : i64} {
  func.func @_fused_kernel(%arg0: i32, %arg1: memref<1x64x16xf32, #tpu.memory_space<vmem>>, %arg2: memref<2x5xf32, #tpu.memory_space<smem>>, %arg3: memref<2x64xf32, #tpu.memory_space<vmem>>, %arg4: memref<64x2xf32, #tpu.memory_space<vmem>>, %arg5: memref<166x64xf32, #tpu.memory_space<vmem>>, %arg6: memref<2x229x64xf32, #tpu.memory_space<vmem>>, %arg7: memref<1x1x32xf32, #tpu.memory_space<vmem>>) attributes {dimension_semantics = [#tpu.dimension_semantics<parallel>], iteration_bounds = array<i64: 2>, scalar_prefetch = 0 : i64, scratch_operands = 0 : i64, tpu.core_type = #tpu.core_type<tc>, window_params = [{transform_indices = @transform_0, window_bounds = array<i64: 1, 64, 16>}, {transform_indices = @transform_1, window_bounds = array<i64: 2, 5>}, {pipeline_mode = #tpu.pipeline_mode<synchronous>, transform_indices = @transform_2, window_bounds = array<i64: 2, 64>}, {pipeline_mode = #tpu.pipeline_mode<synchronous>, transform_indices = @transform_3, window_bounds = array<i64: 64, 2>}, {pipeline_mode = #tpu.pipeline_mode<synchronous>, transform_indices = @transform_4, window_bounds = array<i64: 166, 64>}, {pipeline_mode = #tpu.pipeline_mode<synchronous>, transform_indices = @transform_5, window_bounds = array<i64: 2, 229, 64>}, {transform_indices = @transform_6, window_bounds = array<i64: 1, 1, 32>}]} {
    %c0 = arith.constant 0 : index
    %c0_0 = arith.constant 0 : index
    %0 = vector.load %arg5[%c0, %c0_0] : memref<166x64xf32, #tpu.memory_space<vmem>>, vector<16x48xf32>
    %c16 = arith.constant 16 : index
    %c0_1 = arith.constant 0 : index
    %1 = vector.load %arg5[%c16, %c0_1] : memref<166x64xf32, #tpu.memory_space<vmem>>, vector<48x32xf32>
    %c64 = arith.constant 64 : index
    %c0_2 = arith.constant 0 : index
    %2 = vector.load %arg5[%c64, %c0_2] : memref<166x64xf32, #tpu.memory_space<vmem>>, vector<32x64xf32>
    %c96 = arith.constant 96 : index
    %c0_3 = arith.constant 0 : index
    %3 = vector.load %arg5[%c96, %c0_3] : memref<166x64xf32, #tpu.memory_space<vmem>>, vector<64x32xf32>
    %c160 = arith.constant 160 : index
    %c0_4 = arith.constant 0 : index
    %4 = vector.load %arg5[%c160, %c0_4] : memref<166x64xf32, #tpu.memory_space<vmem>>, vector<1x32xf32>
    %c161 = arith.constant 161 : index
    %c0_5 = arith.constant 0 : index
    %5 = vector.load %arg5[%c161, %c0_5] : memref<166x64xf32, #tpu.memory_space<vmem>>, vector<1x48xf32>
    %c162 = arith.constant 162 : index
    %c0_6 = arith.constant 0 : index
    %6 = vector.load %arg5[%c162, %c0_6] : memref<166x64xf32, #tpu.memory_space<vmem>>, vector<1x32xf32>
    %c163 = arith.constant 163 : index
    %c0_7 = arith.constant 0 : index
    %7 = vector.load %arg5[%c163, %c0_7] : memref<166x64xf32, #tpu.memory_space<vmem>>, vector<1x64xf32>
    %c164 = arith.constant 164 : index
    %c0_8 = arith.constant 0 : index
    %8 = vector.load %arg5[%c164, %c0_8] : memref<166x64xf32, #tpu.memory_space<vmem>>, vector<1x32xf32>
    %c165 = arith.constant 165 : index
    %c0_9 = arith.constant 0 : index
    %9 = vector.load %arg5[%c165, %c0_9] : memref<166x64xf32, #tpu.memory_space<vmem>>, vector<1x1xf32>
    %c0_10 = arith.constant 0 : index
    %c0_11 = arith.constant 0 : index
    %10 = vector.load %arg3[%c0_10, %c0_11] : memref<2x64xf32, #tpu.memory_space<vmem>>, vector<1x64xf32>
    %c1 = arith.constant 1 : index
    %c0_12 = arith.constant 0 : index
    %11 = vector.load %arg3[%c1, %c0_12] : memref<2x64xf32, #tpu.memory_space<vmem>>, vector<1x64xf32>
    %c0_13 = arith.constant 0 : index
    %c0_14 = arith.constant 0 : index
    %12 = vector.load %arg4[%c0_13, %c0_14] : memref<64x2xf32, #tpu.memory_space<vmem>>, vector<64x1xf32>
    %c0_15 = arith.constant 0 : index
    %c1_16 = arith.constant 1 : index
    %13 = vector.load %arg4[%c0_15, %c1_16] : memref<64x2xf32, #tpu.memory_space<vmem>>, vector<64x1xf32>
    %c0_17 = arith.constant 0 : index
    %c0_18 = arith.constant 0 : index
    %c0_19 = arith.constant 0 : index
    %14 = vector.load %arg1[%c0_17, %c0_18, %c0_19] : memref<1x64x16xf32, #tpu.memory_space<vmem>>, vector<1x64x16xf32>
    %15 = vector.shape_cast %14 : vector<1x64x16xf32> to vector<64x16xf32>
    %cst = arith.constant dense<0.000000e+00> : vector<64x48xf32>
    %16 = tpu.matmul %15, %0, %cst {dimension_numbers = #tpu.dot_dimension_numbers<[1], [0], [0], [1], [0, 0, 1, 1], [], []>} : vector<64x16xf32>, vector<16x48xf32>, vector<64x48xf32> -> vector<64x48xf32>
    %17 = vector.broadcast %5 : vector<1x48xf32> to vector<64x48xf32>
    %18 = arith.addf %16, %17 : vector<64x48xf32>
    %cst_20 = arith.constant 0.000000e+00 : f32
    %19 = vector.broadcast %cst_20 : f32 to vector<64x48xf32>
    %20 = arith.maximumf %18, %19 : vector<64x48xf32>
    %cst_21 = arith.constant dense<0.000000e+00> : vector<64x32xf32>
    %21 = tpu.matmul %20, %1, %cst_21 {dimension_numbers = #tpu.dot_dimension_numbers<[1], [0], [0], [1], [0, 0, 1, 1], [], []>} : vector<64x48xf32>, vector<48x32xf32>, vector<64x32xf32> -> vector<64x32xf32>
    %22 = vector.broadcast %6 : vector<1x32xf32> to vector<64x32xf32>
    %23 = arith.addf %21, %22 : vector<64x32xf32>
    %c0_22 = arith.constant 0 : index
    %c0_23 = arith.constant 0 : index
    %c0_24 = arith.constant 0 : index
    %24 = vector.load %arg6[%c0_22, %c0_23, %c0_24] : memref<2x229x64xf32, #tpu.memory_space<vmem>>, vector<1x32x64xf32>
    %25 = vector.shape_cast %24 : vector<1x32x64xf32> to vector<32x64xf32>
    %c0_25 = arith.constant 0 : index
    %c32 = arith.constant 32 : index
    %c0_26 = arith.constant 0 : index
    %26 = vector.load %arg6[%c0_25, %c32, %c0_26] : memref<2x229x64xf32, #tpu.memory_space<vmem>>, vector<1x64x32xf32>
    %27 = vector.shape_cast %26 : vector<1x64x32xf32> to vector<64x32xf32>
    %c0_27 = arith.constant 0 : index
    %c96_28 = arith.constant 96 : index
    %c0_29 = arith.constant 0 : index
    %28 = vector.load %arg6[%c0_27, %c96_28, %c0_29] : memref<2x229x64xf32, #tpu.memory_space<vmem>>, vector<1x32x32xf32>
    %29 = vector.shape_cast %28 : vector<1x32x32xf32> to vector<32x32xf32>
    %c0_30 = arith.constant 0 : index
    %c128 = arith.constant 128 : index
    %c0_31 = arith.constant 0 : index
    %30 = vector.load %arg6[%c0_30, %c128, %c0_31] : memref<2x229x64xf32, #tpu.memory_space<vmem>>, vector<1x32x32xf32>
    %31 = vector.shape_cast %30 : vector<1x32x32xf32> to vector<32x32xf32>
    %c0_32 = arith.constant 0 : index
    %c160_33 = arith.constant 160 : index
    %c0_34 = arith.constant 0 : index
    %32 = vector.load %arg6[%c0_32, %c160_33, %c0_34] : memref<2x229x64xf32, #tpu.memory_space<vmem>>, vector<1x32x32xf32>
    %33 = vector.shape_cast %32 : vector<1x32x32xf32> to vector<32x32xf32>
    %c0_35 = arith.constant 0 : index
    %c192 = arith.constant 192 : index
    %c0_36 = arith.constant 0 : index
    %34 = vector.load %arg6[%c0_35, %c192, %c0_36] : memref<2x229x64xf32, #tpu.memory_space<vmem>>, vector<1x32x32xf32>
    %35 = vector.shape_cast %34 : vector<1x32x32xf32> to vector<32x32xf32>
    %c0_37 = arith.constant 0 : index
    %c224 = arith.constant 224 : index
    %c0_38 = arith.constant 0 : index
    %36 = vector.load %arg6[%c0_37, %c224, %c0_38] : memref<2x229x64xf32, #tpu.memory_space<vmem>>, vector<1x1x64xf32>
    %37 = vector.shape_cast %36 : vector<1x1x64xf32> to vector<1x64xf32>
    %c0_39 = arith.constant 0 : index
    %c225 = arith.constant 225 : index
    %c0_40 = arith.constant 0 : index
    %38 = vector.load %arg6[%c0_39, %c225, %c0_40] : memref<2x229x64xf32, #tpu.memory_space<vmem>>, vector<1x1x32xf32>
    %39 = vector.shape_cast %38 : vector<1x1x32xf32> to vector<1x32xf32>
    %c0_41 = arith.constant 0 : index
    %c226 = arith.constant 226 : index
    %c0_42 = arith.constant 0 : index
    %40 = vector.load %arg6[%c0_41, %c226, %c0_42] : memref<2x229x64xf32, #tpu.memory_space<vmem>>, vector<1x1x32xf32>
    %41 = vector.shape_cast %40 : vector<1x1x32xf32> to vector<1x32xf32>
    %c0_43 = arith.constant 0 : index
    %c227 = arith.constant 227 : index
    %c0_44 = arith.constant 0 : index
    %42 = vector.load %arg6[%c0_43, %c227, %c0_44] : memref<2x229x64xf32, #tpu.memory_space<vmem>>, vector<1x1x32xf32>
    %43 = vector.shape_cast %42 : vector<1x1x32xf32> to vector<1x32xf32>
    %c0_45 = arith.constant 0 : index
    %c228 = arith.constant 228 : index
    %c0_46 = arith.constant 0 : index
    %44 = vector.load %arg6[%c0_45, %c228, %c0_46] : memref<2x229x64xf32, #tpu.memory_space<vmem>>, vector<1x1x32xf32>
    %45 = vector.shape_cast %44 : vector<1x1x32xf32> to vector<1x32xf32>
    %c0_47 = arith.constant 0 : index
    %c0_48 = arith.constant 0 : index
    %46 = memref.load %arg2[%c0_47, %c0_48] : memref<2x5xf32, #tpu.memory_space<smem>>
    %c0_49 = arith.constant 0 : index
    %c1_50 = arith.constant 1 : index
    %47 = memref.load %arg2[%c0_49, %c1_50] : memref<2x5xf32, #tpu.memory_space<smem>>
    %c0_51 = arith.constant 0 : index
    %c2 = arith.constant 2 : index
    %48 = memref.load %arg2[%c0_51, %c2] : memref<2x5xf32, #tpu.memory_space<smem>>
    %c0_52 = arith.constant 0 : index
    %c3 = arith.constant 3 : index
    %49 = memref.load %arg2[%c0_52, %c3] : memref<2x5xf32, #tpu.memory_space<smem>>
    %c0_53 = arith.constant 0 : index
    %c4 = arith.constant 4 : index
    %50 = memref.load %arg2[%c0_53, %c4] : memref<2x5xf32, #tpu.memory_space<smem>>
    %51 = vector.broadcast %12 : vector<64x1xf32> to vector<64x64xf32>
    %52 = vector.broadcast %10 : vector<1x64xf32> to vector<64x64xf32>
    %53 = arith.subf %51, %52 : vector<64x64xf32>
    %54 = vector.broadcast %46 : f32 to vector<64x64xf32>
    %55 = arith.subf %53, %54 : vector<64x64xf32>
    %56 = vector.broadcast %13 : vector<64x1xf32> to vector<64x64xf32>
    %57 = vector.broadcast %11 : vector<1x64xf32> to vector<64x64xf32>
    %58 = arith.subf %56, %57 : vector<64x64xf32>
    %59 = vector.broadcast %47 : f32 to vector<64x64xf32>
    %60 = arith.subf %58, %59 : vector<64x64xf32>
    %61 = vector.broadcast %48 : f32 to vector<64x64xf32>
    %62 = arith.mulf %61, %55 : vector<64x64xf32>
    %63 = arith.mulf %62, %55 : vector<64x64xf32>
    %64 = vector.broadcast %49 : f32 to vector<64x64xf32>
    %65 = arith.mulf %64, %55 : vector<64x64xf32>
    %66 = arith.mulf %65, %60 : vector<64x64xf32>
    %67 = arith.addf %63, %66 : vector<64x64xf32>
    %68 = vector.broadcast %50 : f32 to vector<64x64xf32>
    %69 = arith.mulf %68, %60 : vector<64x64xf32>
    %70 = arith.mulf %69, %60 : vector<64x64xf32>
    %71 = arith.addf %67, %70 : vector<64x64xf32>
    %cst_54 = arith.constant 0.000000e+00 : f32
    %72 = vector.broadcast %cst_54 : f32 to vector<64x64xf32>
    %73 = arith.subf %72, %71 : vector<64x64xf32>
    %74 = math.exp %73 : vector<64x64xf32>
    %cst_55 = arith.constant dense<0.000000e+00> : vector<64xf32>
    %75 = vector.multi_reduction <add>, %74, %cst_55 [1] : vector<64x64xf32> to vector<64xf32>
    %76 = vector.shape_cast %75 : vector<64xf32> to vector<64x1xf32>
    %cst_56 = arith.constant 9.99999996E-13 : f32
    %77 = vector.broadcast %cst_56 : f32 to vector<64x1xf32>
    %78 = arith.maximumf %76, %77 : vector<64x1xf32>
    %79 = vector.broadcast %78 : vector<64x1xf32> to vector<64x64xf32>
    %80 = arith.divf %74, %79 : vector<64x64xf32>
    %cst_57 = arith.constant dense<0.000000e+00> : vector<64x64xf32>
    %81 = tpu.matmul %23, %25, %cst_57 {dimension_numbers = #tpu.dot_dimension_numbers<[1], [0], [0], [1], [0, 0, 1, 1], [], []>} : vector<64x32xf32>, vector<32x64xf32>, vector<64x64xf32> -> vector<64x64xf32>
    %82 = vector.broadcast %37 : vector<1x64xf32> to vector<64x64xf32>
    %83 = arith.addf %81, %82 : vector<64x64xf32>
    %cst_58 = arith.constant 0.000000e+00 : f32
    %84 = vector.broadcast %cst_58 : f32 to vector<64x64xf32>
    %85 = arith.maximumf %83, %84 : vector<64x64xf32>
    %cst_59 = arith.constant dense<0.000000e+00> : vector<64x32xf32>
    %86 = tpu.matmul %85, %27, %cst_59 {dimension_numbers = #tpu.dot_dimension_numbers<[1], [0], [0], [1], [0, 0, 1, 1], [], []>} : vector<64x64xf32>, vector<64x32xf32>, vector<64x32xf32> -> vector<64x32xf32>
    %87 = vector.broadcast %39 : vector<1x32xf32> to vector<64x32xf32>
    %88 = arith.addf %86, %87 : vector<64x32xf32>
    %89 = vector.shape_cast %88 : vector<64x32xf32> to vector<1x64x32xf32>
    %90 = vector.shape_cast %23 : vector<64x32xf32> to vector<1x64x32xf32>
    "tpu.trace_start"() <{level = 10 : i32, message = "bqd,bkd->bqk"}> : () -> ()
    %cst_60 = arith.constant dense<0.000000e+00> : vector<1x64x64xf32>
    %91 = tpu.matmul %89, %89, %cst_60 {dimension_numbers = #tpu.dot_dimension_numbers<[2], [2], [1], [1], [0, 0, 0, 1, 1, 1], [0], [0]>} : vector<1x64x32xf32>, vector<1x64x32xf32>, vector<1x64x64xf32> -> vector<1x64x64xf32>
    "tpu.trace_stop"() : () -> ()
    %cst_61 = arith.constant dense<0xFF800000> : vector<1x64xf32>
    %92 = vector.multi_reduction <maximumf>, %91, %cst_61 [2] : vector<1x64x64xf32> to vector<1x64xf32>
    %93 = vector.shape_cast %92 : vector<1x64xf32> to vector<1x64x1xf32>
    %94 = vector.broadcast %93 : vector<1x64x1xf32> to vector<1x64x64xf32>
    %95 = arith.subf %91, %94 : vector<1x64x64xf32>
    %96 = math.exp %95 : vector<1x64x64xf32>
    %cst_62 = arith.constant dense<0.000000e+00> : vector<1x64xf32>
    %97 = vector.multi_reduction <add>, %96, %cst_62 [2] : vector<1x64x64xf32> to vector<1x64xf32>
    %98 = vector.shape_cast %97 : vector<1x64xf32> to vector<1x64x1xf32>
    %99 = vector.broadcast %98 : vector<1x64x1xf32> to vector<1x64x64xf32>
    %100 = arith.divf %96, %99 : vector<1x64x64xf32>
    "tpu.trace_start"() <{level = 10 : i32, message = "bqk,bkd->bqd"}> : () -> ()
    %cst_63 = arith.constant dense<0.000000e+00> : vector<1x64x32xf32>
    %101 = tpu.matmul %100, %90, %cst_63 {dimension_numbers = #tpu.dot_dimension_numbers<[2], [1], [1], [2], [0, 0, 0, 1, 1, 2], [0], [0]>} : vector<1x64x64xf32>, vector<1x64x32xf32>, vector<1x64x32xf32> -> vector<1x64x32xf32>
    "tpu.trace_stop"() : () -> ()
    %102 = vector.shape_cast %101 : vector<1x64x32xf32> to vector<64x32xf32>
    %103 = vector.shape_cast %80 : vector<64x64xf32> to vector<1x64x64xf32>
    "tpu.trace_start"() <{level = 10 : i32, message = "bqk,bkd->bqd"}> : () -> ()
    %cst_64 = arith.constant dense<0.000000e+00> : vector<1x64x32xf32>
    %104 = tpu.matmul %103, %90, %cst_64 {dimension_numbers = #tpu.dot_dimension_numbers<[2], [1], [1], [2], [0, 0, 0, 1, 1, 2], [0], [0]>} : vector<1x64x64xf32>, vector<1x64x32xf32>, vector<1x64x32xf32> -> vector<1x64x32xf32>
    "tpu.trace_stop"() : () -> ()
    %105 = vector.shape_cast %104 : vector<1x64x32xf32> to vector<64x32xf32>
    %cst_65 = arith.constant dense<0.000000e+00> : vector<64x32xf32>
    %106 = tpu.matmul %102, %29, %cst_65 {dimension_numbers = #tpu.dot_dimension_numbers<[1], [0], [0], [1], [0, 0, 1, 1], [], []>} : vector<64x32xf32>, vector<32x32xf32>, vector<64x32xf32> -> vector<64x32xf32>
    %107 = vector.broadcast %41 : vector<1x32xf32> to vector<64x32xf32>
    %108 = arith.addf %106, %107 : vector<64x32xf32>
    %cst_66 = arith.constant 0.000000e+00 : f32
    %109 = vector.broadcast %cst_66 : f32 to vector<64x32xf32>
    %110 = arith.maximumf %108, %109 : vector<64x32xf32>
    %cst_67 = arith.constant dense<0.000000e+00> : vector<64x32xf32>
    %111 = tpu.matmul %105, %31, %cst_67 {dimension_numbers = #tpu.dot_dimension_numbers<[1], [0], [0], [1], [0, 0, 1, 1], [], []>} : vector<64x32xf32>, vector<32x32xf32>, vector<64x32xf32> -> vector<64x32xf32>
    %112 = vector.broadcast %43 : vector<1x32xf32> to vector<64x32xf32>
    %113 = arith.addf %111, %112 : vector<64x32xf32>
    %cst_68 = arith.constant 0.000000e+00 : f32
    %114 = vector.broadcast %cst_68 : f32 to vector<64x32xf32>
    %115 = arith.maximumf %113, %114 : vector<64x32xf32>
    %cst_69 = arith.constant dense<0.000000e+00> : vector<64x32xf32>
    %116 = tpu.matmul %110, %33, %cst_69 {dimension_numbers = #tpu.dot_dimension_numbers<[1], [0], [0], [1], [0, 0, 1, 1], [], []>} : vector<64x32xf32>, vector<32x32xf32>, vector<64x32xf32> -> vector<64x32xf32>
    %cst_70 = arith.constant dense<0.000000e+00> : vector<64x32xf32>
    %117 = tpu.matmul %115, %35, %cst_70 {dimension_numbers = #tpu.dot_dimension_numbers<[1], [0], [0], [1], [0, 0, 1, 1], [], []>} : vector<64x32xf32>, vector<32x32xf32>, vector<64x32xf32> -> vector<64x32xf32>
    %118 = arith.addf %116, %117 : vector<64x32xf32>
    %119 = vector.broadcast %45 : vector<1x32xf32> to vector<64x32xf32>
    %120 = arith.addf %118, %119 : vector<64x32xf32>
    %c1_71 = arith.constant 1 : index
    %c0_72 = arith.constant 0 : index
    %c0_73 = arith.constant 0 : index
    %121 = vector.load %arg6[%c1_71, %c0_72, %c0_73] : memref<2x229x64xf32, #tpu.memory_space<vmem>>, vector<1x32x64xf32>
    %122 = vector.shape_cast %121 : vector<1x32x64xf32> to vector<32x64xf32>
    %c1_74 = arith.constant 1 : index
    %c32_75 = arith.constant 32 : index
    %c0_76 = arith.constant 0 : index
    %123 = vector.load %arg6[%c1_74, %c32_75, %c0_76] : memref<2x229x64xf32, #tpu.memory_space<vmem>>, vector<1x64x32xf32>
    %124 = vector.shape_cast %123 : vector<1x64x32xf32> to vector<64x32xf32>
    %c1_77 = arith.constant 1 : index
    %c96_78 = arith.constant 96 : index
    %c0_79 = arith.constant 0 : index
    %125 = vector.load %arg6[%c1_77, %c96_78, %c0_79] : memref<2x229x64xf32, #tpu.memory_space<vmem>>, vector<1x32x32xf32>
    %126 = vector.shape_cast %125 : vector<1x32x32xf32> to vector<32x32xf32>
    %c1_80 = arith.constant 1 : index
    %c128_81 = arith.constant 128 : index
    %c0_82 = arith.constant 0 : index
    %127 = vector.load %arg6[%c1_80, %c128_81, %c0_82] : memref<2x229x64xf32, #tpu.memory_space<vmem>>, vector<1x32x32xf32>
    %128 = vector.shape_cast %127 : vector<1x32x32xf32> to vector<32x32xf32>
    %c1_83 = arith.constant 1 : index
    %c160_84 = arith.constant 160 : index
    %c0_85 = arith.constant 0 : index
    %129 = vector.load %arg6[%c1_83, %c160_84, %c0_85] : memref<2x229x64xf32, #tpu.memory_space<vmem>>, vector<1x32x32xf32>
    %130 = vector.shape_cast %129 : vector<1x32x32xf32> to vector<32x32xf32>
    %c1_86 = arith.constant 1 : index
    %c192_87 = arith.constant 192 : index
    %c0_88 = arith.constant 0 : index
    %131 = vector.load %arg6[%c1_86, %c192_87, %c0_88] : memref<2x229x64xf32, #tpu.memory_space<vmem>>, vector<1x32x32xf32>
    %132 = vector.shape_cast %131 : vector<1x32x32xf32> to vector<32x32xf32>
    %c1_89 = arith.constant 1 : index
    %c224_90 = arith.constant 224 : index
    %c0_91 = arith.constant 0 : index
    %133 = vector.load %arg6[%c1_89, %c224_90, %c0_91] : memref<2x229x64xf32, #tpu.memory_space<vmem>>, vector<1x1x64xf32>
    %134 = vector.shape_cast %133 : vector<1x1x64xf32> to vector<1x64xf32>
    %c1_92 = arith.constant 1 : index
    %c225_93 = arith.constant 225 : index
    %c0_94 = arith.constant 0 : index
    %135 = vector.load %arg6[%c1_92, %c225_93, %c0_94] : memref<2x229x64xf32, #tpu.memory_space<vmem>>, vector<1x1x32xf32>
    %136 = vector.shape_cast %135 : vector<1x1x32xf32> to vector<1x32xf32>
    %c1_95 = arith.constant 1 : index
    %c226_96 = arith.constant 226 : index
    %c0_97 = arith.constant 0 : index
    %137 = vector.load %arg6[%c1_95, %c226_96, %c0_97] : memref<2x229x64xf32, #tpu.memory_space<vmem>>, vector<1x1x32xf32>
    %138 = vector.shape_cast %137 : vector<1x1x32xf32> to vector<1x32xf32>
    %c1_98 = arith.constant 1 : index
    %c227_99 = arith.constant 227 : index
    %c0_100 = arith.constant 0 : index
    %139 = vector.load %arg6[%c1_98, %c227_99, %c0_100] : memref<2x229x64xf32, #tpu.memory_space<vmem>>, vector<1x1x32xf32>
    %140 = vector.shape_cast %139 : vector<1x1x32xf32> to vector<1x32xf32>
    %c1_101 = arith.constant 1 : index
    %c228_102 = arith.constant 228 : index
    %c0_103 = arith.constant 0 : index
    %141 = vector.load %arg6[%c1_101, %c228_102, %c0_103] : memref<2x229x64xf32, #tpu.memory_space<vmem>>, vector<1x1x32xf32>
    %142 = vector.shape_cast %141 : vector<1x1x32xf32> to vector<1x32xf32>
    %c1_104 = arith.constant 1 : index
    %c0_105 = arith.constant 0 : index
    %143 = memref.load %arg2[%c1_104, %c0_105] : memref<2x5xf32, #tpu.memory_space<smem>>
    %c1_106 = arith.constant 1 : index
    %c1_107 = arith.constant 1 : index
    %144 = memref.load %arg2[%c1_106, %c1_107] : memref<2x5xf32, #tpu.memory_space<smem>>
    %c1_108 = arith.constant 1 : index
    %c2_109 = arith.constant 2 : index
    %145 = memref.load %arg2[%c1_108, %c2_109] : memref<2x5xf32, #tpu.memory_space<smem>>
    %c1_110 = arith.constant 1 : index
    %c3_111 = arith.constant 3 : index
    %146 = memref.load %arg2[%c1_110, %c3_111] : memref<2x5xf32, #tpu.memory_space<smem>>
    %c1_112 = arith.constant 1 : index
    %c4_113 = arith.constant 4 : index
    %147 = memref.load %arg2[%c1_112, %c4_113] : memref<2x5xf32, #tpu.memory_space<smem>>
    %148 = vector.broadcast %12 : vector<64x1xf32> to vector<64x64xf32>
    %149 = vector.broadcast %10 : vector<1x64xf32> to vector<64x64xf32>
    %150 = arith.subf %148, %149 : vector<64x64xf32>
    %151 = vector.broadcast %143 : f32 to vector<64x64xf32>
    %152 = arith.subf %150, %151 : vector<64x64xf32>
    %153 = vector.broadcast %13 : vector<64x1xf32> to vector<64x64xf32>
    %154 = vector.broadcast %11 : vector<1x64xf32> to vector<64x64xf32>
    %155 = arith.subf %153, %154 : vector<64x64xf32>
    %156 = vector.broadcast %144 : f32 to vector<64x64xf32>
    %157 = arith.subf %155, %156 : vector<64x64xf32>
    %158 = vector.broadcast %145 : f32 to vector<64x64xf32>
    %159 = arith.mulf %158, %152 : vector<64x64xf32>
    %160 = arith.mulf %159, %152 : vector<64x64xf32>
    %161 = vector.broadcast %146 : f32 to vector<64x64xf32>
    %162 = arith.mulf %161, %152 : vector<64x64xf32>
    %163 = arith.mulf %162, %157 : vector<64x64xf32>
    %164 = arith.addf %160, %163 : vector<64x64xf32>
    %165 = vector.broadcast %147 : f32 to vector<64x64xf32>
    %166 = arith.mulf %165, %157 : vector<64x64xf32>
    %167 = arith.mulf %166, %157 : vector<64x64xf32>
    %168 = arith.addf %164, %167 : vector<64x64xf32>
    %cst_114 = arith.constant 0.000000e+00 : f32
    %169 = vector.broadcast %cst_114 : f32 to vector<64x64xf32>
    %170 = arith.subf %169, %168 : vector<64x64xf32>
    %171 = math.exp %170 : vector<64x64xf32>
    %cst_115 = arith.constant dense<0.000000e+00> : vector<64xf32>
    %172 = vector.multi_reduction <add>, %171, %cst_115 [1] : vector<64x64xf32> to vector<64xf32>
    %173 = vector.shape_cast %172 : vector<64xf32> to vector<64x1xf32>
    %cst_116 = arith.constant 9.99999996E-13 : f32
    %174 = vector.broadcast %cst_116 : f32 to vector<64x1xf32>
    %175 = arith.maximumf %173, %174 : vector<64x1xf32>
    %176 = vector.broadcast %175 : vector<64x1xf32> to vector<64x64xf32>
    %177 = arith.divf %171, %176 : vector<64x64xf32>
    %cst_117 = arith.constant dense<0.000000e+00> : vector<64x64xf32>
    %178 = tpu.matmul %120, %122, %cst_117 {dimension_numbers = #tpu.dot_dimension_numbers<[1], [0], [0], [1], [0, 0, 1, 1], [], []>} : vector<64x32xf32>, vector<32x64xf32>, vector<64x64xf32> -> vector<64x64xf32>
    %179 = vector.broadcast %134 : vector<1x64xf32> to vector<64x64xf32>
    %180 = arith.addf %178, %179 : vector<64x64xf32>
    %cst_118 = arith.constant 0.000000e+00 : f32
    %181 = vector.broadcast %cst_118 : f32 to vector<64x64xf32>
    %182 = arith.maximumf %180, %181 : vector<64x64xf32>
    %cst_119 = arith.constant dense<0.000000e+00> : vector<64x32xf32>
    %183 = tpu.matmul %182, %124, %cst_119 {dimension_numbers = #tpu.dot_dimension_numbers<[1], [0], [0], [1], [0, 0, 1, 1], [], []>} : vector<64x64xf32>, vector<64x32xf32>, vector<64x32xf32> -> vector<64x32xf32>
    %184 = vector.broadcast %136 : vector<1x32xf32> to vector<64x32xf32>
    %185 = arith.addf %183, %184 : vector<64x32xf32>
    %186 = vector.shape_cast %185 : vector<64x32xf32> to vector<1x64x32xf32>
    %187 = vector.shape_cast %120 : vector<64x32xf32> to vector<1x64x32xf32>
    "tpu.trace_start"() <{level = 10 : i32, message = "bqd,bkd->bqk"}> : () -> ()
    %cst_120 = arith.constant dense<0.000000e+00> : vector<1x64x64xf32>
    %188 = tpu.matmul %186, %186, %cst_120 {dimension_numbers = #tpu.dot_dimension_numbers<[2], [2], [1], [1], [0, 0, 0, 1, 1, 1], [0], [0]>} : vector<1x64x32xf32>, vector<1x64x32xf32>, vector<1x64x64xf32> -> vector<1x64x64xf32>
    "tpu.trace_stop"() : () -> ()
    %cst_121 = arith.constant dense<0xFF800000> : vector<1x64xf32>
    %189 = vector.multi_reduction <maximumf>, %188, %cst_121 [2] : vector<1x64x64xf32> to vector<1x64xf32>
    %190 = vector.shape_cast %189 : vector<1x64xf32> to vector<1x64x1xf32>
    %191 = vector.broadcast %190 : vector<1x64x1xf32> to vector<1x64x64xf32>
    %192 = arith.subf %188, %191 : vector<1x64x64xf32>
    %193 = math.exp %192 : vector<1x64x64xf32>
    %cst_122 = arith.constant dense<0.000000e+00> : vector<1x64xf32>
    %194 = vector.multi_reduction <add>, %193, %cst_122 [2] : vector<1x64x64xf32> to vector<1x64xf32>
    %195 = vector.shape_cast %194 : vector<1x64xf32> to vector<1x64x1xf32>
    %196 = vector.broadcast %195 : vector<1x64x1xf32> to vector<1x64x64xf32>
    %197 = arith.divf %193, %196 : vector<1x64x64xf32>
    "tpu.trace_start"() <{level = 10 : i32, message = "bqk,bkd->bqd"}> : () -> ()
    %cst_123 = arith.constant dense<0.000000e+00> : vector<1x64x32xf32>
    %198 = tpu.matmul %197, %187, %cst_123 {dimension_numbers = #tpu.dot_dimension_numbers<[2], [1], [1], [2], [0, 0, 0, 1, 1, 2], [0], [0]>} : vector<1x64x64xf32>, vector<1x64x32xf32>, vector<1x64x32xf32> -> vector<1x64x32xf32>
    "tpu.trace_stop"() : () -> ()
    %199 = vector.shape_cast %198 : vector<1x64x32xf32> to vector<64x32xf32>
    %200 = vector.shape_cast %177 : vector<64x64xf32> to vector<1x64x64xf32>
    "tpu.trace_start"() <{level = 10 : i32, message = "bqk,bkd->bqd"}> : () -> ()
    %cst_124 = arith.constant dense<0.000000e+00> : vector<1x64x32xf32>
    %201 = tpu.matmul %200, %187, %cst_124 {dimension_numbers = #tpu.dot_dimension_numbers<[2], [1], [1], [2], [0, 0, 0, 1, 1, 2], [0], [0]>} : vector<1x64x64xf32>, vector<1x64x32xf32>, vector<1x64x32xf32> -> vector<1x64x32xf32>
    "tpu.trace_stop"() : () -> ()
    %202 = vector.shape_cast %201 : vector<1x64x32xf32> to vector<64x32xf32>
    %cst_125 = arith.constant dense<0.000000e+00> : vector<64x32xf32>
    %203 = tpu.matmul %199, %126, %cst_125 {dimension_numbers = #tpu.dot_dimension_numbers<[1], [0], [0], [1], [0, 0, 1, 1], [], []>} : vector<64x32xf32>, vector<32x32xf32>, vector<64x32xf32> -> vector<64x32xf32>
    %204 = vector.broadcast %138 : vector<1x32xf32> to vector<64x32xf32>
    %205 = arith.addf %203, %204 : vector<64x32xf32>
    %cst_126 = arith.constant 0.000000e+00 : f32
    %206 = vector.broadcast %cst_126 : f32 to vector<64x32xf32>
    %207 = arith.maximumf %205, %206 : vector<64x32xf32>
    %cst_127 = arith.constant dense<0.000000e+00> : vector<64x32xf32>
    %208 = tpu.matmul %202, %128, %cst_127 {dimension_numbers = #tpu.dot_dimension_numbers<[1], [0], [0], [1], [0, 0, 1, 1], [], []>} : vector<64x32xf32>, vector<32x32xf32>, vector<64x32xf32> -> vector<64x32xf32>
    %209 = vector.broadcast %140 : vector<1x32xf32> to vector<64x32xf32>
    %210 = arith.addf %208, %209 : vector<64x32xf32>
    %cst_128 = arith.constant 0.000000e+00 : f32
    %211 = vector.broadcast %cst_128 : f32 to vector<64x32xf32>
    %212 = arith.maximumf %210, %211 : vector<64x32xf32>
    %cst_129 = arith.constant dense<0.000000e+00> : vector<64x32xf32>
    %213 = tpu.matmul %207, %130, %cst_129 {dimension_numbers = #tpu.dot_dimension_numbers<[1], [0], [0], [1], [0, 0, 1, 1], [], []>} : vector<64x32xf32>, vector<32x32xf32>, vector<64x32xf32> -> vector<64x32xf32>
    %cst_130 = arith.constant dense<0.000000e+00> : vector<64x32xf32>
    %214 = tpu.matmul %212, %132, %cst_130 {dimension_numbers = #tpu.dot_dimension_numbers<[1], [0], [0], [1], [0, 0, 1, 1], [], []>} : vector<64x32xf32>, vector<32x32xf32>, vector<64x32xf32> -> vector<64x32xf32>
    %215 = arith.addf %213, %214 : vector<64x32xf32>
    %216 = vector.broadcast %142 : vector<1x32xf32> to vector<64x32xf32>
    %217 = arith.addf %215, %216 : vector<64x32xf32>
    %cst_131 = arith.constant dense<0.000000e+00> : vector<64x64xf32>
    %218 = tpu.matmul %217, %2, %cst_131 {dimension_numbers = #tpu.dot_dimension_numbers<[1], [0], [0], [1], [0, 0, 1, 1], [], []>} : vector<64x32xf32>, vector<32x64xf32>, vector<64x64xf32> -> vector<64x64xf32>
    %219 = vector.broadcast %7 : vector<1x64xf32> to vector<64x64xf32>
    %220 = arith.addf %218, %219 : vector<64x64xf32>
    %cst_132 = arith.constant 0.000000e+00 : f32
    %221 = vector.broadcast %cst_132 : f32 to vector<64x64xf32>
    %222 = arith.maximumf %220, %221 : vector<64x64xf32>
    %cst_133 = arith.constant dense<0.000000e+00> : vector<64x32xf32>
    %223 = tpu.matmul %222, %3, %cst_133 {dimension_numbers = #tpu.dot_dimension_numbers<[1], [0], [0], [1], [0, 0, 1, 1], [], []>} : vector<64x64xf32>, vector<64x32xf32>, vector<64x32xf32> -> vector<64x32xf32>
    %224 = vector.broadcast %8 : vector<1x32xf32> to vector<64x32xf32>
    %225 = arith.addf %223, %224 : vector<64x32xf32>
    %cst_134 = arith.constant dense<0.000000e+00> : vector<1x64xf32>
    %226 = tpu.matmul %4, %225, %cst_134 {dimension_numbers = #tpu.dot_dimension_numbers<[1], [1], [0], [0], [0, 0, 1, 0], [], []>} : vector<1x32xf32>, vector<64x32xf32>, vector<1x64xf32> -> vector<1x64xf32>
    %227 = vector.broadcast %9 : vector<1x1xf32> to vector<1x64xf32>
    %228 = arith.addf %226, %227 : vector<1x64xf32>
    %cst_135 = arith.constant dense<0xFF800000> : vector<1xf32>
    %229 = vector.multi_reduction <maximumf>, %228, %cst_135 [1] : vector<1x64xf32> to vector<1xf32>
    %230 = vector.shape_cast %229 : vector<1xf32> to vector<1x1xf32>
    %231 = vector.broadcast %230 : vector<1x1xf32> to vector<1x64xf32>
    %232 = arith.subf %228, %231 : vector<1x64xf32>
    %233 = math.exp %232 : vector<1x64xf32>
    %cst_136 = arith.constant dense<0.000000e+00> : vector<1xf32>
    %234 = vector.multi_reduction <add>, %233, %cst_136 [1] : vector<1x64xf32> to vector<1xf32>
    %235 = vector.shape_cast %234 : vector<1xf32> to vector<1x1xf32>
    %236 = vector.broadcast %235 : vector<1x1xf32> to vector<1x64xf32>
    %237 = arith.divf %233, %236 : vector<1x64xf32>
    %cst_137 = arith.constant dense<0.000000e+00> : vector<1x32xf32>
    %238 = tpu.matmul %237, %217, %cst_137 {dimension_numbers = #tpu.dot_dimension_numbers<[1], [0], [0], [1], [0, 0, 1, 1], [], []>} : vector<1x64xf32>, vector<64x32xf32>, vector<1x32xf32> -> vector<1x32xf32>
    %239 = arith.mulf %238, %238 : vector<1x32xf32>
    %cst_138 = arith.constant dense<0.000000e+00> : vector<1xf32>
    %240 = vector.multi_reduction <add>, %239, %cst_138 [1] : vector<1x32xf32> to vector<1xf32>
    %241 = vector.shape_cast %240 : vector<1xf32> to vector<1x1xf32>
    %242 = math.sqrt %241 : vector<1x1xf32>
    %cst_139 = arith.constant 9.99999996E-13 : f32
    %243 = vector.broadcast %cst_139 : f32 to vector<1x1xf32>
    %244 = arith.maximumf %242, %243 : vector<1x1xf32>
    %245 = vector.broadcast %244 : vector<1x1xf32> to vector<1x32xf32>
    %246 = arith.divf %238, %245 : vector<1x32xf32>
    %c0_140 = arith.constant 0 : index
    %c0_141 = arith.constant 0 : index
    %c0_142 = arith.constant 0 : index
    %247 = vector.load %arg7[%c0_140, %c0_141, %c0_142] : memref<1x1x32xf32, #tpu.memory_space<vmem>>, vector<1x1x32xf32>
    %248 = vector.shape_cast %247 : vector<1x1x32xf32> to vector<1x32xf32>
    %249 = vector.shape_cast %246 : vector<1x32xf32> to vector<1x1x32xf32>
    tpu.vector_store %arg7[%c0_140, %c0_141, %c0_142], %249 {strides = array<i32>} : memref<1x1x32xf32, #tpu.memory_space<vmem>>, vector<1x1x32xf32>,
    return
  }
  func.func @transform_0(%arg0: i32) -> (i32, i32, i32) {
    %c0_i32 = arith.constant 0 : i32
    %c0_i32_0 = arith.constant 0 : i32
    %c0_i32_1 = arith.constant 0 : i32
    return %arg0, %c0_i32, %c0_i32_0 : i32, i32, i32
  }
  func.func @transform_1(%arg0: i32) -> (i32, i32) {
    %c0_i32 = arith.constant 0 : i32
    %c0_i32_0 = arith.constant 0 : i32
    %c0_i32_1 = arith.constant 0 : i32
    return %c0_i32, %c0_i32_0 : i32, i32
  }
  func.func @transform_2(%arg0: i32) -> (i32, i32) {
    %c0_i32 = arith.constant 0 : i32
    %c0_i32_0 = arith.constant 0 : i32
    %c0_i32_1 = arith.constant 0 : i32
    return %c0_i32, %c0_i32_0 : i32, i32
  }
  func.func @transform_3(%arg0: i32) -> (i32, i32) {
    %c0_i32 = arith.constant 0 : i32
    %c0_i32_0 = arith.constant 0 : i32
    %c0_i32_1 = arith.constant 0 : i32
    return %c0_i32, %c0_i32_0 : i32, i32
  }
  func.func @transform_4(%arg0: i32) -> (i32, i32) {
    %c0_i32 = arith.constant 0 : i32
    %c0_i32_0 = arith.constant 0 : i32
    %c0_i32_1 = arith.constant 0 : i32
    return %c0_i32, %c0_i32_0 : i32, i32
  }
  func.func @transform_5(%arg0: i32) -> (i32, i32, i32) {
    %c0_i32 = arith.constant 0 : i32
    %c0_i32_0 = arith.constant 0 : i32
    %c0_i32_1 = arith.constant 0 : i32
    %c0_i32_2 = arith.constant 0 : i32
    return %c0_i32, %c0_i32_0, %c0_i32_1 : i32, i32, i32
  }
  func.func @transform_6(%arg0: i32) -> (i32, i32, i32) {
    %c0_i32 = arith.constant 0 : i32
    %c0_i32_0 = arith.constant 0 : i32
    %c0_i32_1 = arith.constant 0 : i32
    return %arg0, %c0_i32, %c0_i32_0 : i32, i32, i32
  }
}

</mosaic_0001>

<llo_original>
// kernel: graph_layer_forward.1
$region0: #{graph_layer_forward.1}
  #allocation0 [shape = 'u32[]', space=smem, size = 0x4, offset = 0x4, fixed_abs, tag = 'smem constant byte address 0x4 - core index']
  #allocation1 [shape = 'u32[72,128]{1,0:T(1,128)}', space=vmem, size = 0x9000, scoped, tag = 'internal scratch']
  %s0 = inlined_call_operand.vmem [shape: f32[2,64,16], index: 0, kind: input, shape index: {}]
  %s1 = inlined_call_operand.vmem [shape: f32[2,5], index: 1, kind: input, shape index: {}]
  %s2 = inlined_call_operand.vmem [shape: f32[2,64], index: 2, kind: input, shape index: {}]
  %s3 = inlined_call_operand.vmem [shape: f32[64,2], index: 3, kind: input, shape index: {}]
  %s4 = inlined_call_operand.vmem [shape: f32[166,64], index: 4, kind: input, shape index: {}]
  %s5 = inlined_call_operand.vmem [shape: f32[2,229,64], index: 5, kind: input, shape index: {}]
  %s6 = inlined_call_operand.hbm [shape: f32[2,1,32], index: 6, kind: output, shape index: {}]
  %s7 = sld [smem:[#allocation0]]
  $region61: #{graph_layer_forward.1} parent=0
    _
  %s9 = ssub.s32 1, %s7
  %s10 = scalar_select 0, %s9, %s7
  $region1: #{graph_layer_forward.1} parent=0
    #allocation2 [shape = 'u8[1024]{0}', space=smem, size = 0x400, scoped, tag = 'input window, operand 1, single buffered']
    #allocation3 [shape = 's32[2]{0}', space=sflag, size = 0x8, scoped, tag = 'scoped memory for graph_layer_forward.1']
    #allocation4 [shape = 's32[2]{0}', space=sflag, size = 0x8, scoped, tag = 'scoped memory for graph_layer_forward.1']
    #allocation5 [shape = 'u8[1024]{0}', space=vmem, size = 0x400, scoped, tag = 'output window, operand 0']
    %11 = vsyncpa [#allocation4], 0
    %12 = vsyncpa [#allocation3], 0
    %s13 = scalar_lea.sflag [#allocation3], 1
    %14 = vsyncpa %s13, 0
    loop: start=0, step=1, limit=4
    $region2: #{graph_layer_forward.1} parent=1 // loop_pre_header
      _
    $region3: #{graph_layer_forward.1} parent=1 // loop_header
      %s16 = sphi 0, %s20
      %p17 = scmp.ge.s32.totalorder %s16, 4
      %s26 = sphi 0, %s28
      %s29 = sphi 0, %s26
      %s30 = sphi 0, %s29
      %s46 = sphi 0, %s30
      %s50 = sphi 0, %s50
      %s52 = sphi 0, %s50
      %s53 = sphi 0, %s52
      %s67 = sphi 0, %s53
      %s71 = sphi 0, %s71
      %s73 = sphi 0, %s71
      %s74 = sphi 0, %s73
      %s88 = sphi 0, %s74
      %s92 = sphi 0, %s92
      %s94 = sphi 0, %s92
      %s95 = sphi 0, %s94
      %s109 = sphi 0, %s95
      %s113 = sphi 0, %s113
      %s115 = sphi 0, %s113
      %s116 = sphi 0, %s115
      %s130 = sphi 0, %s116
      %s134 = sphi 0, %s134
      %s136 = sphi 0, %s134
      %s137 = sphi 0, %s136
      %s151 = sphi 0, %s137
      %s157 = sphi 0, %s159
      %s160 = sphi 0, %s157
      %s161 = sphi 0, %s160
      %s177 = sphi 0, %s161
    $region4: #{graph_layer_forward.1} parent=1 // loop_header_branch
      %19 = sbr.rel (%p17) target = $region8
    $region5: #{graph_layer_forward.1} parent=1 // loop_body
      %s21 = ssub.s32 %s16, 1
      %s22 = ssub.s32 %s16, 2
      %s23 = sadd.s32 %s16, 1
      %s24 = ssub.s32 %s16, %s23
      %p25 = scmp.eq.s32.totalorder %s24, 0
      %s27 = sadd.s32 %s26, 1
      %s28 = scalar_select %p25, %s26, %s27
      %p31 = pneg %p25
      %p32 = scmp.eq.s32.totalorder %s16, 1
      %p33 = por %p31, %p32
      %p34 = scmp.ne.s32.totalorder %s26, %s29
      %p35 = scmp.eq.s32.totalorder %s16, 0
      %p36 = por %p34, %p35
      %p37 = scmp.ne.s32.totalorder %s26, %s29
      %p38 = scmp.eq.s32.totalorder %s21, 1
      %p39 = por %p37, %p38
      %p40 = scmp.ne.s32.totalorder %s29, %s30
      %p41 = scmp.eq.s32.totalorder %s21, 0
      %p42 = por %p40, %p41
      %p43 = scmp.ne.s32.totalorder %s29, %s30
      %p44 = scmp.eq.s32.totalorder %s22, 1
      %p45 = por %p43, %p44
      %p47 = scmp.ne.s32.totalorder %s30, %s46
      %p48 = scmp.eq.s32.totalorder %s22, 0
      %p49 = por %p47, %p48
      %s51 = sadd.s32 %s50, 1
      %p54 = scmp.eq.s32.totalorder %s16, 1
      %p55 = scmp.ne.s32.totalorder %s50, %s52
      %p56 = scmp.eq.s32.totalorder %s16, 0
      %p57 = por %p55, %p56
      %p58 = scmp.ne.s32.totalorder %s50, %s52
      %p59 = scmp.eq.s32.totalorder %s21, 1
      %p60 = por %p58, %p59
      %p61 = scmp.ne.s32.totalorder %s52, %s53
      %p62 = scmp.eq.s32.totalorder %s21, 0
      %p63 = por %p61, %p62
      %p64 = scmp.ne.s32.totalorder %s52, %s53
      %p65 = scmp.eq.s32.totalorder %s22, 1
      %p66 = por %p64, %p65
      %p68 = scmp.ne.s32.totalorder %s53, %s67
      %p69 = scmp.eq.s32.totalorder %s22, 0
      %p70 = por %p68, %p69
      %s72 = sadd.s32 %s71, 1
      %p75 = scmp.eq.s32.totalorder %s16, 1
      %p76 = scmp.ne.s32.totalorder %s71, %s73
      %p77 = scmp.eq.s32.totalorder %s16, 0
      %p78 = por %p76, %p77
      %p79 = scmp.ne.s32.totalorder %s71, %s73
      %p80 = scmp.eq.s32.totalorder %s21, 1
      %p81 = por %p79, %p80
      %p82 = scmp.ne.s32.totalorder %s73, %s74
      %p83 = scmp.eq.s32.totalorder %s21, 0
      %p84 = por %p82, %p83
      %p85 = scmp.ne.s32.totalorder %s73, %s74
      %p86 = scmp.eq.s32.totalorder %s22, 1
      %p87 = por %p85, %p86
      %p89 = scmp.ne.s32.totalorder %s74, %s88
      %p90 = scmp.eq.s32.totalorder %s22, 0
      %p91 = por %p89, %p90
      %s93 = sadd.s32 %s92, 1
      %p96 = scmp.eq.s32.totalorder %s16, 1
      %p97 = scmp.ne.s32.totalorder %s92, %s94
      %p98 = scmp.eq.s32.totalorder %s16, 0
      %p99 = por %p97, %p98
      %p100 = scmp.ne.s32.totalorder %s92, %s94
      %p101 = scmp.eq.s32.totalorder %s21, 1
      %p102 = por %p100, %p101
      %p103 = scmp.ne.s32.totalorder %s94, %s95
      %p104 = scmp.eq.s32.totalorder %s21, 0
      %p105 = por %p103, %p104
      %p106 = scmp.ne.s32.totalorder %s94, %s95
      %p107 = scmp.eq.s32.totalorder %s22, 1
      %p108 = por %p106, %p107
      %p110 = scmp.ne.s32.totalorder %s95, %s109
      %p111 = scmp.eq.s32.totalorder %s22, 0
      %p112 = por %p110, %p111
      %s114 = sadd.s32 %s113, 1
      %p117 = scmp.eq.s32.totalorder %s16, 1
      %p118 = scmp.ne.s32.totalorder %s113, %s115
      %p119 = scmp.eq.s32.totalorder %s16, 0
      %p120 = por %p118, %p119
      %p121 = scmp.ne.s32.totalorder %s113, %s115
      %p122 = scmp.eq.s32.totalorder %s21, 1
      %p123 = por %p121, %p122
      %p124 = scmp.ne.s32.totalorder %s115, %s116
      %p125 = scmp.eq.s32.totalorder %s21, 0
      %p126 = por %p124, %p125
      %p127 = scmp.ne.s32.totalorder %s115, %s116
      %p128 = scmp.eq.s32.totalorder %s22, 1
      %p129 = por %p127, %p128
      %p131 = scmp.ne.s32.totalorder %s116, %s130
      %p132 = scmp.eq.s32.totalorder %s22, 0
      %p133 = por %p131, %p132
      %s135 = sadd.s32 %s134, 1
      %p138 = scmp.eq.s32.totalorder %s16, 1
      %p139 = scmp.ne.s32.totalorder %s134, %s136
      %p140 = scmp.eq.s32.totalorder %s16, 0
      %p141 = por %p139, %p140
      %p142 = scmp.ne.s32.totalorder %s134, %s136
      %p143 = scmp.eq.s32.totalorder %s21, 1
      %p144 = por %p142, %p143
      %p145 = scmp.ne.s32.totalorder %s136, %s137
      %p146 = scmp.eq.s32.totalorder %s21, 0
      %p147 = por %p145, %p146
      %p148 = scmp.ne.s32.totalorder %s136, %s137
      %p149 = scmp.eq.s32.totalorder %s22, 1
      %p150 = por %p148, %p149
      %p152 = scmp.ne.s32.totalorder %s137, %s151
      %p153 = scmp.eq.s32.totalorder %s22, 0
      %p154 = por %p152, %p153
      %s155 = ssub.s32 %s16, %s23
      %p156 = scmp.eq.s32.totalorder %s155, 0
      %s158 = sadd.s32 %s157, 1
      %s159 = scalar_select %p156, %s157, %s158
      %p162 = pneg %p156
      %p163 = scmp.eq.s32.totalorder %s16, 1
      %p164 = por %p162, %p163
      %p165 = scmp.ne.s32.totalorder %s157, %s160
      %p166 = scmp.eq.s32.totalorder %s16, 0
      %p167 = por %p165, %p166
      %p168 = scmp.ne.s32.totalorder %s157, %s160
      %p169 = scmp.eq.s32.totalorder %s21, 1
      %p170 = por %p168, %p169
      %p171 = scmp.ne.s32.totalorder %s160, %s161
      %p172 = scmp.eq.s32.totalorder %s21, 0
      %p173 = por %p171, %p172
      %p174 = scmp.ne.s32.totalorder %s160, %s161
      %p175 = scmp.eq.s32.totalorder %s22, 1
      %p176 = por %p174, %p175
      %p178 = scmp.ne.s32.totalorder %s161, %s177
      %p179 = scmp.eq.s32.totalorder %s22, 0
      %p180 = por %p178, %p179
      %p181 = scmp.le.s32.totalorder 1, %s16
      %p182 = scmp.lt.s32.totalorder %s16, 3
      %p183 = pnand %p181, %p182
      %p184 = pneg %p183
      // Predicated region
      $region9: #{graph_layer_forward.1} parent=5 // pred_check
        _
      $region10: #{graph_layer_forward.1} parent=5 // pred_check_branch
        %186 = sbr.rel (%p183) target = $region12
      $region11: #{graph_layer_forward.1} parent=5 // pred_region
        %s187 = ssub.s32 %s16, 1
        // Predicated region
        $region13: #{graph_layer_forward.1} parent=11 // pred_check
          %p188 = pneg %p63
        $region14: #{graph_layer_forward.1} parent=11 // pred_check_branch
          %190 = sbr.rel (%p188) target = $region16
        $region15: #{graph_layer_forward.1} parent=11 // pred_region
          %192 = vsyncadd [#allocation4], 0
          %s194 = sshll.u32 %s1, 4
          %s195 = int_to_ptr.vmem [resolvable:$true] %s194
          %197 = dma.vmem_to_smem %s195, 32, [#allocation2], [#allocation4]
        $region16: #{graph_layer_forward.1} parent=11 // pred_fallthru
          _
        // Predicated region
        $region17: #{graph_layer_forward.1} parent=11 // pred_check
          %p198 = pneg %p84
        $region18: #{graph_layer_forward.1} parent=11 // pred_check_branch
          %200 = sbr.rel (%p198) target = $region20
        $region19: #{graph_layer_forward.1} parent=11 // pred_region
          _
        $region20: #{graph_layer_forward.1} parent=11 // pred_fallthru
          _
        // Predicated region
        $region21: #{graph_layer_forward.1} parent=11 // pred_check
          %p201 = pneg %p105
        $region22: #{graph_layer_forward.1} parent=11 // pred_check_branch
          %203 = sbr.rel (%p201) target = $region24
        $region23: #{graph_layer_forward.1} parent=11 // pred_region
          _
        $region24: #{graph_layer_forward.1} parent=11 // pred_fallthru
          _
        // Predicated region
        $region25: #{graph_layer_forward.1} parent=11 // pred_check
          %p204 = pneg %p126
        $region26: #{graph_layer_forward.1} parent=11 // pred_check_branch
          %206 = sbr.rel (%p204) target = $region28
        $region27: #{graph_layer_forward.1} parent=11 // pred_region
          _
        $region28: #{graph_layer_forward.1} parent=11 // pred_fallthru
          _
        // Predicated region
        $region29: #{graph_layer_forward.1} parent=11 // pred_check
          %p207 = pneg %p147
        $region30: #{graph_layer_forward.1} parent=11 // pred_check_branch
          %209 = sbr.rel (%p207) target = $region32
        $region31: #{graph_layer_forward.1} parent=11 // pred_region
          _
        $region32: #{graph_layer_forward.1} parent=11 // pred_fallthru
          _
      $region12: #{graph_layer_forward.1} parent=5 // pred_fallthru
        _
      %p210 = scmp.lt.s32.totalorder %s16, 2
      // Predicated region
      $region33: #{graph_layer_forward.1} parent=5 // pred_check
        %p211 = pneg %p210
      $region34: #{graph_layer_forward.1} parent=5 // pred_check_branch
        %213 = sbr.rel (%p211) target = $region36
      $region35: #{graph_layer_forward.1} parent=5 // pred_region
        // Predicated region
        $region37: #{graph_layer_forward.1} parent=35 // pred_check
          %p214 = pneg %p36
        $region38: #{graph_layer_forward.1} parent=35 // pred_check_branch
          %216 = sbr.rel (%p214) target = $region40
        $region39: #{graph_layer_forward.1} parent=35 // pred_region
          %p217 = scmp.lt.s32.totalorder %s16, 1
          %s218 = scalar_select %p217, %s16, 1
          %s219 = smul.addr %s218, 8
          %s220 = smul.addr %s219, 8
          %s221 = scalar_lea.vmem %s0, %s220
        $region40: #{graph_layer_forward.1} parent=35 // pred_fallthru
          _
      $region36: #{graph_layer_forward.1} parent=5 // pred_fallthru
        _
      %p222 = scmp.le.s32.totalorder 1, %s16
      %p223 = scmp.lt.s32.totalorder %s16, 3
      %p224 = pnand %p222, %p223
      %p225 = pneg %p224
      // Predicated region
      $region41: #{graph_layer_forward.1} parent=5 // pred_check
        _
      $region42: #{graph_layer_forward.1} parent=5 // pred_check_branch
        %227 = sbr.rel (%p224) target = $region44
      $region43: #{graph_layer_forward.1} parent=5 // pred_region
        %s228 = ssub.s32 %s16, 1
        // Predicated region
        $region45: #{graph_layer_forward.1} parent=43 // pred_check
          %p229 = pneg %p63
        $region46: #{graph_layer_forward.1} parent=43 // pred_check_branch
          %231 = sbr.rel (%p229) target = $region48
        $region47: #{graph_layer_forward.1} parent=43 // pred_region
          %233 = dma.done [#allocation4], 32
        $region48: #{graph_layer_forward.1} parent=43 // pred_fallthru
          _
        %234 = sfence
        %p235 = scmp.lt.s32.totalorder %s21, 1
        %s236 = scalar_select %p235, %s21, 1
        %s237 = smul.addr %s236, 8
        %s238 = smul.addr %s237, 8
        %s239 = scalar_lea.vmem %s0, %s238
        %p240 = pneg %p42
        %p241 = pneg %p39
        %p242 = pneg %p63
        %p243 = pneg %p60
        %p244 = pneg %p84
        %p245 = pneg %p81
        %p246 = pneg %p105
        %p247 = pneg %p102
        %p248 = pneg %p126
        %p249 = pneg %p123
        %p250 = pneg %p147
        %p251 = pneg %p144
        %p252 = pneg %p173
        %p253 = pneg %p170
        %s254 = sand.u32 %s160, 1
        %s255 = scalar_lea.sflag [#allocation3], %s254
        %s256 = sand.u32 %s160, 1
        %s257 = scalar_lea.vmem [#allocation5], %s256
        %p258 = scmp.lt.s32.totalorder %s21, 1
        %s259 = scalar_select %p258, %s21, 1
        %s260 = smul.addr %s259, 8
        %s261 = smul.addr %s260, 8
        %s262 = scalar_lea.vmem %s0, %s261
        %v263 = vld [vmem:[%s4] sm:$0xff]
        %v264 = vld [vmem:[%s4 + $0x8] sm:$0xff]
        %v265 = vld [vmem:[%s4 + $0x10] sm:$0xff]
        %v266 = vld [vmem:[%s4 + $0x18] sm:$0xff]
        %v267 = vld [vmem:[%s4 + $0x20] sm:$0xff]
        %v268 = vld [vmem:[%s4 + $0x28] sm:$0xff]
        %v269 = vld [vmem:[%s4 + $0x30] sm:$0xff]
        %v270 = vld [vmem:[%s4 + $0x38] sm:$0xff]
        %v271 = vld [vmem:[%s4 + $0x40] sm:$0xff]
        %v272 = vld [vmem:[%s4 + $0x48] sm:$0xff]
        %v273 = vld [vmem:[%s4 + $0x50] sm:$0xff]
        %v274 = vld [vmem:[%s4 + $0x58] sm:$0xff]
        %v275 = vld [vmem:[%s4 + $0x60] sm:$0xff]
        %v276 = vld [vmem:[%s4 + $0x68] sm:$0xff]
        %v277 = vld [vmem:[%s4 + $0x70] sm:$0xff]
        %v278 = vld [vmem:[%s4 + $0x78] sm:$0xff]
        %v279 = vld [vmem:[%s4 + $0x80] sm:$0xff]
        %v280 = vld [vmem:[%s4 + $0x88] sm:$0xff]
        %v281 = vld [vmem:[%s4 + $0x90] sm:$0xff]
        %v282 = vld [vmem:[%s4 + $0x98] sm:$0xff]
        %v283 = vld [vmem:[%s4 + $0xa0] sm:$0x1]
        %v284 = vld [vmem:[%s4 + $0xa1] sm:$0x1]
        %v285 = vld [vmem:[%s4 + $0xa2] sm:$0x1]
        %v286 = vld [vmem:[%s4 + $0xa3] sm:$0x1]
        %v287 = vld [vmem:[%s4 + $0xa4] sm:$0x1]
        %v288 = vld [vmem:[%s4 + $0xa5] sm:$0x1]
        %v289 = vld [vmem:[%s2] sm:$0x1]
        %v290 = vld [vmem:[%s2 + $0x1] sm:$0x1]
        %v291 = vld [vmem:[%s3] sm:$0xff]
        %v292 = vld [vmem:[%s3 + $0x8] sm:$0xff]
        %v293 = vld [vmem:[%s3 + $0x10] sm:$0xff]
        %v294 = vld [vmem:[%s3 + $0x18] sm:$0xff]
        %v295 = vld [vmem:[%s3 + $0x20] sm:$0xff]
        %v296 = vld [vmem:[%s3 + $0x28] sm:$0xff]
        %v297 = vld [vmem:[%s3 + $0x30] sm:$0xff]
        %v298 = vld [vmem:[%s3 + $0x38] sm:$0xff]
        %v299 = vld [vmem:[%s262] sm:$0xff]
        %v300 = vld [vmem:[%s262 + $0x8] sm:$0xff]
        %v301 = vld [vmem:[%s262 + $0x10] sm:$0xff]
        %v302 = vld [vmem:[%s262 + $0x18] sm:$0xff]
        %v303 = vld [vmem:[%s262 + $0x20] sm:$0xff]
        %v304 = vld [vmem:[%s262 + $0x28] sm:$0xff]
        %v305 = vld [vmem:[%s262 + $0x30] sm:$0xff]
        %v306 = vld [vmem:[%s262 + $0x38] sm:$0xff]
        %v307 = vperm.slane %v284, 0
        %vm308 = vcmask 130048
        %v310 = vsel %vm308, %v299, 0
        %v313 = vsel %vm308, %v300, 0
        %v316 = vsel %vm308, %v301, 0
        %v319 = vsel %vm308, %v302, 0
        %v322 = vsel %vm308, %v303, 0
        %v325 = vsel %vm308, %v304, 0
        %v328 = vsel %vm308, %v305, 0
        %v331 = vsel %vm308, %v306, 0
        %333 = vmatpush.msra.mxu0 0.0
        %334 = vmatpush.msra.mxu0 0.0
        %335 = vmatpush.msra.mxu0 0.0
        %336 = vmatpush.msra.mxu0 0.0
        %337 = vmatpush.msra.mxu0 0.0
        %338 = vmatpush.msra.mxu0 0.0
        %339 = vmatpush.msra.mxu0 0.0
        %340 = vmatpush.msra.mxu0 0.0
        %341 = vmatpush.msra.mxu0 0.0
        %342 = vmatpush.msra.mxu0 0.0
        %343 = vmatpush.msra.mxu0 0.0
        %344 = vmatpush.msra.mxu0 0.0
        %345 = vmatpush.msra.mxu0 0.0
        %346 = vmatpush.msra.mxu0 0.0
        %347 = vmatpush.msra.mxu0 %v264
        %348 = vmatpush.msra.mxu0 %v263
        %349 = vmatmul.f32.gmra.mxu0 %v310
        %v350 = vpop.f32.mrf.mxu0
        %v351 = vadd.f32 %v307, %v350
        %352 = vmatmul.f32.gmra.mxu0 %v313
        %v353 = vpop.f32.mrf.mxu0
        %v354 = vadd.f32 %v307, %v353
        %355 = vmatmul.f32.gmra.mxu0 %v316
        %v356 = vpop.f32.mrf.mxu0
        %v357 = vadd.f32 %v307, %v356
        %358 = vmatmul.f32.gmra.mxu0 %v319
        %v359 = vpop.f32.mrf.mxu0
        %v360 = vadd.f32 %v307, %v359
        %361 = vmatmul.f32.gmra.mxu0 %v322
        %v362 = vpop.f32.mrf.mxu0
        %v363 = vadd.f32 %v307, %v362
        %364 = vmatmul.f32.gmra.mxu0 %v325
        %v365 = vpop.f32.mrf.mxu0
        %v366 = vadd.f32 %v307, %v365
        %367 = vmatmul.f32.gmra.mxu0 %v328
        %v368 = vpop.f32.mrf.mxu0
        %v369 = vadd.f32 %v307, %v368
        %370 = vmatmul.f32.gmra.mxu0 %v331
        %v371 = vpop.f32.mrf.mxu0
        %v372 = vadd.f32 %v307, %v371
        %373 = vdwg.mxu0
        %v374 = vmax.f32 %v351, 0.0
        %v375 = vmax.f32 %v354, 0.0
        %v376 = vmax.f32 %v357, 0.0
        %v377 = vmax.f32 %v360, 0.0
        %v378 = vmax.f32 %v363, 0.0
        %v379 = vmax.f32 %v366, 0.0
        %v380 = vmax.f32 %v369, 0.0
        %v381 = vmax.f32 %v372, 0.0
        %v382 = vperm.slane %v285, 0
        %vm383 = vcmask 392192
        %v385 = vsel %vm383, %v374, 0
        %v388 = vsel %vm383, %v375, 0
        %v391 = vsel %vm383, %v376, 0
        %v394 = vsel %vm383, %v377, 0
        %v397 = vsel %vm383, %v378, 0
        %v400 = vsel %vm383, %v379, 0
        %v403 = vsel %vm383, %v380, 0
        %v406 = vsel %vm383, %v381, 0
        %408 = vmatpush.msra.mxu0 0.0
        %409 = vmatpush.msra.mxu0 0.0
        %410 = vmatpush.msra.mxu0 0.0
        %411 = vmatpush.msra.mxu0 0.0
        %412 = vmatpush.msra.mxu0 0.0
        %413 = vmatpush.msra.mxu0 0.0
        %414 = vmatpush.msra.mxu0 0.0
        %415 = vmatpush.msra.mxu0 0.0
        %416 = vmatpush.msra.mxu0 0.0
        %417 = vmatpush.msra.mxu0 0.0
        %418 = vmatpush.msra.mxu0 %v270
        %419 = vmatpush.msra.mxu0 %v269
        %420 = vmatpush.msra.mxu0 %v268
        %421 = vmatpush.msra.mxu0 %v267
        %422 = vmatpush.msra.mxu0 %v266
        %423 = vmatpush.msra.mxu0 %v265
        %424 = vmatmul.f32.gmra.mxu0 %v385
        %v425 = vpop.f32.mrf.mxu0
        %v426 = vadd.f32 %v382, %v425
        %427 = vmatmul.f32.gmra.mxu0 %v388
        %v428 = vpop.f32.mrf.mxu0
        %v429 = vadd.f32 %v382, %v428
        %430 = vmatmul.f32.gmra.mxu0 %v391
        %v431 = vpop.f32.mrf.mxu0
        %v432 = vadd.f32 %v382, %v431
        %433 = vmatmul.f32.gmra.mxu0 %v394
        %v434 = vpop.f32.mrf.mxu0
        %v435 = vadd.f32 %v382, %v434
        %436 = vmatmul.f32.gmra.mxu0 %v397
        %v437 = vpop.f32.mrf.mxu0
        %v438 = vadd.f32 %v382, %v437
        %439 = vmatmul.f32.gmra.mxu0 %v400
        %v440 = vpop.f32.mrf.mxu0
        %v441 = vadd.f32 %v382, %v440
        %442 = vmatmul.f32.gmra.mxu0 %v403
        %v443 = vpop.f32.mrf.mxu0
        %v444 = vadd.f32 %v382, %v443
        %445 = vmatmul.f32.gmra.mxu0 %v406
        %v446 = vpop.f32.mrf.mxu0
        %v447 = vadd.f32 %v382, %v446
        %448 = vdwg.mxu0
        %v449 = vld [vmem:[%s5] sm:$0xff]
        %v450 = vld [vmem:[%s5 + $0x8] sm:$0xff]
        %v451 = vld [vmem:[%s5 + $0x10] sm:$0xff]
        %v452 = vld [vmem:[%s5 + $0x18] sm:$0xff]
        %v453 = vld [vmem:[%s5 + $0x20] sm:$0xff]
        %v454 = vld [vmem:[%s5 + $0x28] sm:$0xff]
        %v455 = vld [vmem:[%s5 + $0x30] sm:$0xff]
        %v456 = vld [vmem:[%s5 + $0x38] sm:$0xff]
        %v457 = vld [vmem:[%s5 + $0x40] sm:$0xff]
        %v458 = vld [vmem:[%s5 + $0x48] sm:$0xff]
        %v459 = vld [vmem:[%s5 + $0x50] sm:$0xff]
        %v460 = vld [vmem:[%s5 + $0x58] sm:$0xff]
        %v461 = vld [vmem:[%s5 + $0x60] sm:$0xff]
        %v462 = vld [vmem:[%s5 + $0x68] sm:$0xff]
        %v463 = vld [vmem:[%s5 + $0x70] sm:$0xff]
        %v464 = vld [vmem:[%s5 + $0x78] sm:$0xff]
        %v465 = vld [vmem:[%s5 + $0x80] sm:$0xff]
        %v466 = vld [vmem:[%s5 + $0x88] sm:$0xff]
        %v467 = vld [vmem:[%s5 + $0x90] sm:$0xff]
        %v468 = vld [vmem:[%s5 + $0x98] sm:$0xff]
        %v469 = vld [vmem:[%s5 + $0xa0] sm:$0xff]
        %v470 = vld [vmem:[%s5 + $0xa8] sm:$0xff]
        %v471 = vld [vmem:[%s5 + $0xb0] sm:$0xff]
        %v472 = vld [vmem:[%s5 + $0xb8] sm:$0xff]
        %v473 = vld [vmem:[%s5 + $0xc0] sm:$0xff]
        %v474 = vld [vmem:[%s5 + $0xc8] sm:$0xff]
        %v475 = vld [vmem:[%s5 + $0xd0] sm:$0xff]
        %v476 = vld [vmem:[%s5 + $0xd8] sm:$0xff]
        %v477 = vld [vmem:[%s5 + $0xe0] sm:$0x1]
        %v478 = vld [vmem:[%s5 + $0xe1] sm:$0x1]
        %v479 = vld [vmem:[%s5 + $0xe2] sm:$0x1]
        %v480 = vld [vmem:[%s5 + $0xe3] sm:$0x1]
        %v481 = vld [vmem:[%s5 + $0xe4] sm:$0x1]
        %s482 = sld [smem:[#allocation2]]
        %s483 = sld [smem:[#allocation2 + $0x1]]
        %s484 = sld [smem:[#allocation2 + $0x2]]
        %s485 = sld [smem:[#allocation2 + $0x3]]
        %s486 = sld [smem:[#allocation2 + $0x4]]
        %488 = vset.pattern.permute.xlu0 0
        %489 = vperm.xlu0 %488, %v291
        %v490 = vpop.permute.xlu0 %489
        %493 = vset.pattern.permute.xlu0 0
        %494 = vperm.xlu0 %493, %v292
        %v495 = vpop.permute.xlu0 %494
        %498 = vset.pattern.permute.xlu0 0
        %499 = vperm.xlu0 %498, %v293
        %v500 = vpop.permute.xlu0 %499
        %503 = vset.pattern.permute.xlu0 0
        %504 = vperm.xlu0 %503, %v294
        %v505 = vpop.permute.xlu0 %504
        %508 = vset.pattern.permute.xlu0 0
        %509 = vperm.xlu0 %508, %v295
        %v510 = vpop.permute.xlu0 %509
        %513 = vset.pattern.permute.xlu0 0
        %514 = vperm.xlu0 %513, %v296
        %v515 = vpop.permute.xlu0 %514
        %518 = vset.pattern.permute.xlu0 0
        %519 = vperm.xlu0 %518, %v297
        %v520 = vpop.permute.xlu0 %519
        %523 = vset.pattern.permute.xlu0 0
        %524 = vperm.xlu0 %523, %v298
        %v525 = vpop.permute.xlu0 %524
        %v527 = vperm.slane %v289, 0
        %v528 = vsub.f32 %v490, %v527
        %v529 = vsub.f32 %v495, %v527
        %v530 = vsub.f32 %v500, %v527
        %v531 = vsub.f32 %v505, %v527
        %v532 = vsub.f32 %v510, %v527
        %v533 = vsub.f32 %v515, %v527
        %v534 = vsub.f32 %v520, %v527
        %v535 = vsub.f32 %v525, %v527
        %v536 = vstv %s482
        %v537 = vsub.f32 %v528, %v536
        %v538 = vsub.f32 %v529, %v536
        %v539 = vsub.f32 %v530, %v536
        %v540 = vsub.f32 %v531, %v536
        %v541 = vsub.f32 %v532, %v536
        %v542 = vsub.f32 %v533, %v536
        %v543 = vsub.f32 %v534, %v536
        %v544 = vsub.f32 %v535, %v536
        %545 = vset.pattern.permute.xlu0 1
        %546 = vperm.xlu0 %545, %v291
        %v547 = vpop.permute.xlu0 %546
        %549 = vset.pattern.permute.xlu0 1
        %550 = vperm.xlu0 %549, %v292
        %v551 = vpop.permute.xlu0 %550
        %553 = vset.pattern.permute.xlu0 1
        %554 = vperm.xlu0 %553, %v293
        %v555 = vpop.permute.xlu0 %554
        %557 = vset.pattern.permute.xlu0 1
        %558 = vperm.xlu0 %557, %v294
        %v559 = vpop.permute.xlu0 %558
        %561 = vset.pattern.permute.xlu0 1
        %562 = vperm.xlu0 %561, %v295
        %v563 = vpop.permute.xlu0 %562
        %565 = vset.pattern.permute.xlu0 1
        %566 = vperm.xlu0 %565, %v296
        %v567 = vpop.permute.xlu0 %566
        %569 = vset.pattern.permute.xlu0 1
        %570 = vperm.xlu0 %569, %v297
        %v571 = vpop.permute.xlu0 %570
        %573 = vset.pattern.permute.xlu0 1
        %574 = vperm.xlu0 %573, %v298
        %v575 = vpop.permute.xlu0 %574
        %v577 = vperm.slane %v290, 0
        %v578 = vsub.f32 %v547, %v577
        %v579 = vsub.f32 %v551, %v577
        %v580 = vsub.f32 %v555, %v577
        %v581 = vsub.f32 %v559, %v577
        %v582 = vsub.f32 %v563, %v577
        %v583 = vsub.f32 %v567, %v577
        %v584 = vsub.f32 %v571, %v577
        %v585 = vsub.f32 %v575, %v577
        %v586 = vstv %s483
        %v587 = vsub.f32 %v578, %v586
        %v588 = vsub.f32 %v579, %v586
        %v589 = vsub.f32 %v580, %v586
        %v590 = vsub.f32 %v581, %v586
        %v591 = vsub.f32 %v582, %v586
        %v592 = vsub.f32 %v583, %v586
        %v593 = vsub.f32 %v584, %v586
        %v594 = vsub.f32 %v585, %v586
        %v595 = vstv %s484
        %v596 = vmul.f32 %v595, %v537
        %v597 = vmul.f32 %v595, %v538
        %v598 = vmul.f32 %v595, %v539
        %v599 = vmul.f32 %v595, %v540
        %v600 = vmul.f32 %v595, %v541
        %v601 = vmul.f32 %v595, %v542
        %v602 = vmul.f32 %v595, %v543
        %v603 = vmul.f32 %v595, %v544
        %v604 = vmul.f32 %v596, %v537
        %v605 = vmul.f32 %v597, %v538
        %v606 = vmul.f32 %v598, %v539
        %v607 = vmul.f32 %v599, %v540
        %v608 = vmul.f32 %v600, %v541
        %v609 = vmul.f32 %v601, %v542
        %v610 = vmul.f32 %v602, %v543
        %v611 = vmul.f32 %v603, %v544
        %v612 = vstv %s485
        %v613 = vmul.f32 %v612, %v537
        %v614 = vmul.f32 %v612, %v538
        %v615 = vmul.f32 %v612, %v539
        %v616 = vmul.f32 %v612, %v540
        %v617 = vmul.f32 %v612, %v541
        %v618 = vmul.f32 %v612, %v542
        %v619 = vmul.f32 %v612, %v543
        %v620 = vmul.f32 %v612, %v544
        %v621 = vmul.f32 %v613, %v587
        %v622 = vmul.f32 %v614, %v588
        %v623 = vmul.f32 %v615, %v589
        %v624 = vmul.f32 %v616, %v590
        %v625 = vmul.f32 %v617, %v591
        %v626 = vmul.f32 %v618, %v592
        %v627 = vmul.f32 %v619, %v593
        %v628 = vmul.f32 %v620, %v594
        %v629 = vadd.f32 %v604, %v621
        %v630 = vadd.f32 %v605, %v622
        %v631 = vadd.f32 %v606, %v623
        %v632 = vadd.f32 %v607, %v624
        %v633 = vadd.f32 %v608, %v625
        %v634 = vadd.f32 %v609, %v626
        %v635 = vadd.f32 %v610, %v627
        %v636 = vadd.f32 %v611, %v628
        %v637 = vstv %s486
        %v638 = vmul.f32 %v637, %v587
        %v639 = vmul.f32 %v637, %v588
        %v640 = vmul.f32 %v637, %v589
        %v641 = vmul.f32 %v637, %v590
        %v642 = vmul.f32 %v637, %v591
        %v643 = vmul.f32 %v637, %v592
        %v644 = vmul.f32 %v637, %v593
        %v645 = vmul.f32 %v637, %v594
        %v646 = vmul.f32 %v638, %v587
        %v647 = vmul.f32 %v639, %v588
        %v648 = vmul.f32 %v640, %v589
        %v649 = vmul.f32 %v641, %v590
        %v650 = vmul.f32 %v642, %v591
        %v651 = vmul.f32 %v643, %v592
        %v652 = vmul.f32 %v644, %v593
        %v653 = vmul.f32 %v645, %v594
        %v654 = vadd.f32 %v629, %v646
        %v655 = vadd.f32 %v630, %v647
        %v656 = vadd.f32 %v631, %v648
        %v657 = vadd.f32 %v632, %v649
        %v658 = vadd.f32 %v633, %v650
        %v659 = vadd.f32 %v634, %v651
        %v660 = vadd.f32 %v635, %v652
        %v661 = vadd.f32 %v636, %v653
        %v662 = vsub.f32 0.0, %v654
        %v663 = vsub.f32 0.0, %v655
        %v664 = vsub.f32 0.0, %v656
        %v665 = vsub.f32 0.0, %v657
        %v666 = vsub.f32 0.0, %v658
        %v667 = vsub.f32 0.0, %v659
        %v668 = vsub.f32 0.0, %v660
        %v669 = vsub.f32 0.0, %v661
        %v670 = vmul.f32 %v662, 1.442695
        %v671 = vpow.pop %v670
        %v672 = vmul.f32 %v663, 1.442695
        %v673 = vpow.pop %v672
        %v674 = vmul.f32 %v664, 1.442695
        %v675 = vpow.pop %v674
        %v676 = vmul.f32 %v665, 1.442695
        %v677 = vpow.pop %v676
        %v678 = vmul.f32 %v666, 1.442695
        %v679 = vpow.pop %v678
        %v680 = vmul.f32 %v667, 1.442695
        %v681 = vpow.pop %v680
        %v682 = vmul.f32 %v668, 1.442695
        %v683 = vpow.pop %v682
        %v684 = vmul.f32 %v669, 1.442695
        %v685 = vpow.pop %v684
        %vm686 = vcmask 523264
        %v687 = vsel %vm686, %v671, 0.0
        %688 = vadd.xlane.f32.xlu0 %v687
        %v689 = vpop.xlane.xlu0 %688
        %v690 = vsel %vm686, %v673, 0.0
        %691 = vadd.xlane.f32.xlu0 %v690
        %v692 = vpop.xlane.xlu0 %691
        %v693 = vsel %vm686, %v675, 0.0
        %694 = vadd.xlane.f32.xlu0 %v693
        %v695 = vpop.xlane.xlu0 %694
        %v696 = vsel %vm686, %v677, 0.0
        %697 = vadd.xlane.f32.xlu0 %v696
        %v698 = vpop.xlane.xlu0 %697
        %v699 = vsel %vm686, %v679, 0.0
        %700 = vadd.xlane.f32.xlu0 %v699
        %v701 = vpop.xlane.xlu0 %700
        %v702 = vsel %vm686, %v681, 0.0
        %703 = vadd.xlane.f32.xlu0 %v702
        %v704 = vpop.xlane.xlu0 %703
        %v705 = vsel %vm686, %v683, 0.0
        %706 = vadd.xlane.f32.xlu0 %v705
        %v707 = vpop.xlane.xlu0 %706
        %v708 = vsel %vm686, %v685, 0.0
        %709 = vadd.xlane.f32.xlu0 %v708
        %v710 = vpop.xlane.xlu0 %709
        %v711 = vmax.f32 %v689, 1e-12
        %v712 = vmax.f32 %v692, 1e-12
        %v713 = vmax.f32 %v695, 1e-12
        %v714 = vmax.f32 %v698, 1e-12
        %v715 = vmax.f32 %v701, 1e-12
        %v716 = vmax.f32 %v704, 1e-12
        %v717 = vmax.f32 %v707, 1e-12
        %v718 = vmax.f32 %v710, 1e-12
        %v719 = vrcp.pop %v711
        %v720 = vmul.f32 %v711, %v719
        %v721 = vsub.f32 1.0, %v720
        %v722 = vmul.f32 %v719, %v721
        %v723 = vadd.f32 %v719, %v722
        %vm724 = vweird.f32 %v711
        %vm725 = vweird.f32 %v719
        %vm726 = vmor %vm724, %vm725
        %v727 = vsel %vm726, %v719, %v723
        %v728 = vand.u32 2147483647, %v711
        %vm729 = vcmp.eq.f32.partialorder %v728, 8.507059e+37
        %v730 = vand.u32 %v711, 2147483648
        %v731 = vor.u32 1.1754944e-38, %v730
        %v732 = vsel %vm729, %v731, %v727
        %v733 = vmul.f32 %v671, %v732
        %v734 = vrcp.pop %v712
        %v735 = vmul.f32 %v712, %v734
        %v736 = vsub.f32 1.0, %v735
        %v737 = vmul.f32 %v734, %v736
        %v738 = vadd.f32 %v734, %v737
        %vm739 = vweird.f32 %v712
        %vm740 = vweird.f32 %v734
        %vm741 = vmor %vm739, %vm740
        %v742 = vsel %vm741, %v734, %v738
        %v743 = vand.u32 2147483647, %v712
        %vm744 = vcmp.eq.f32.partialorder %v743, 8.507059e+37
        %v745 = vand.u32 %v712, 2147483648
        %v746 = vor.u32 1.1754944e-38, %v745
        %v747 = vsel %vm744, %v746, %v742
        %v748 = vmul.f32 %v673, %v747
        %v749 = vrcp.pop %v713
        %v750 = vmul.f32 %v713, %v749
        %v751 = vsub.f32 1.0, %v750
        %v752 = vmul.f32 %v749, %v751
        %v753 = vadd.f32 %v749, %v752
        %vm754 = vweird.f32 %v713
        %vm755 = vweird.f32 %v749
        %vm756 = vmor %vm754, %vm755
        %v757 = vsel %vm756, %v749, %v753
        %v758 = vand.u32 2147483647, %v713
        %vm759 = vcmp.eq.f32.partialorder %v758, 8.507059e+37
        %v760 = vand.u32 %v713, 2147483648
        %v761 = vor.u32 1.1754944e-38, %v760
        %v762 = vsel %vm759, %v761, %v757
        %v763 = vmul.f32 %v675, %v762
        %v764 = vrcp.pop %v714
        %v765 = vmul.f32 %v714, %v764
        %v766 = vsub.f32 1.0, %v765
        %v767 = vmul.f32 %v764, %v766
        %v768 = vadd.f32 %v764, %v767
        %vm769 = vweird.f32 %v714
        %vm770 = vweird.f32 %v764
        %vm771 = vmor %vm769, %vm770
        %v772 = vsel %vm771, %v764, %v768
        %v773 = vand.u32 2147483647, %v714
        %vm774 = vcmp.eq.f32.partialorder %v773, 8.507059e+37
        %v775 = vand.u32 %v714, 2147483648
        %v776 = vor.u32 1.1754944e-38, %v775
        %v777 = vsel %vm774, %v776, %v772
        %v778 = vmul.f32 %v677, %v777
        %v779 = vrcp.pop %v715
        %v780 = vmul.f32 %v715, %v779
        %v781 = vsub.f32 1.0, %v780
        %v782 = vmul.f32 %v779, %v781
        %v783 = vadd.f32 %v779, %v782
        %vm784 = vweird.f32 %v715
        %vm785 = vweird.f32 %v779
        %vm786 = vmor %vm784, %vm785
        %v787 = vsel %vm786, %v779, %v783
        %v788 = vand.u32 2147483647, %v715
        %vm789 = vcmp.eq.f32.partialorder %v788, 8.507059e+37
        %v790 = vand.u32 %v715, 2147483648
        %v791 = vor.u32 1.1754944e-38, %v790
        %v792 = vsel %vm789, %v791, %v787
        %v793 = vmul.f32 %v679, %v792
        %v794 = vrcp.pop %v716
        %v795 = vmul.f32 %v716, %v794
        %v796 = vsub.f32 1.0, %v795
        %v797 = vmul.f32 %v794, %v796
        %v798 = vadd.f32 %v794, %v797
        %vm799 = vweird.f32 %v716
        %vm800 = vweird.f32 %v794
        %vm801 = vmor %vm799, %vm800
        %v802 = vsel %vm801, %v794, %v798
        %v803 = vand.u32 2147483647, %v716
        %vm804 = vcmp.eq.f32.partialorder %v803, 8.507059e+37
        %v805 = vand.u32 %v716, 2147483648
        %v806 = vor.u32 1.1754944e-38, %v805
        %v807 = vsel %vm804, %v806, %v802
        %v808 = vmul.f32 %v681, %v807
        %v809 = vrcp.pop %v717
        %v810 = vmul.f32 %v717, %v809
        %v811 = vsub.f32 1.0, %v810
        %v812 = vmul.f32 %v809, %v811
        %v813 = vadd.f32 %v809, %v812
        %vm814 = vweird.f32 %v717
        %vm815 = vweird.f32 %v809
        %vm816 = vmor %vm814, %vm815
        %v817 = vsel %vm816, %v809, %v813
        %v818 = vand.u32 2147483647, %v717
        %vm819 = vcmp.eq.f32.partialorder %v818, 8.507059e+37
        %v820 = vand.u32 %v717, 2147483648
        %v821 = vor.u32 1.1754944e-38, %v820
        %v822 = vsel %vm819, %v821, %v817
        %v823 = vmul.f32 %v683, %v822
        %v824 = vrcp.pop %v718
        %v825 = vmul.f32 %v718, %v824
        %v826 = vsub.f32 1.0, %v825
        %v827 = vmul.f32 %v824, %v826
        %v828 = vadd.f32 %v824, %v827
        %vm829 = vweird.f32 %v718
        %vm830 = vweird.f32 %v824
        %vm831 = vmor %vm829, %vm830
        %v832 = vsel %vm831, %v824, %v828
        %v833 = vand.u32 2147483647, %v718
        %vm834 = vcmp.eq.f32.partialorder %v833, 8.507059e+37
        %v835 = vand.u32 %v718, 2147483648
        %v836 = vor.u32 1.1754944e-38, %v835
        %v837 = vsel %vm834, %v836, %v832
        %v838 = vmul.f32 %v685, %v837
        %v839 = vperm.slane %v477, 0
        %vm840 = vcmask 261120
        %v842 = vsel %vm840, %v426, 0
        %v845 = vsel %vm840, %v429, 0
        %v848 = vsel %vm840, %v432, 0
        %v851 = vsel %vm840, %v435, 0
        %v854 = vsel %vm840, %v438, 0
        %v857 = vsel %vm840, %v441, 0
        %v860 = vsel %vm840, %v444, 0
        %v863 = vsel %vm840, %v447, 0
        %865 = vmatpush.msra.mxu0 0.0
        %866 = vmatpush.msra.mxu0 0.0
        %867 = vmatpush.msra.mxu0 0.0
        %868 = vmatpush.msra.mxu0 0.0
        %869 = vmatpush.msra.mxu0 0.0
        %870 = vmatpush.msra.mxu0 0.0
        %871 = vmatpush.msra.mxu0 0.0
        %872 = vmatpush.msra.mxu0 0.0
        %873 = vmatpush.msra.mxu0 0.0
        %874 = vmatpush.msra.mxu0 0.0
        %875 = vmatpush.msra.mxu0 0.0
        %876 = vmatpush.msra.mxu0 0.0
        %877 = vmatpush.msra.mxu0 %v452
        %878 = vmatpush.msra.mxu0 %v451
        %879 = vmatpush.msra.mxu0 %v450
        %880 = vmatpush.msra.mxu0 %v449
        %881 = vmatmul.f32.gmra.mxu0 %v842
        %v882 = vpop.f32.mrf.mxu0
        %v883 = vadd.f32 %v839, %v882
        %884 = vmatmul.f32.gmra.mxu0 %v845
        %v885 = vpop.f32.mrf.mxu0
        %v886 = vadd.f32 %v839, %v885
        %887 = vmatmul.f32.gmra.mxu0 %v848
        %v888 = vpop.f32.mrf.mxu0
        %v889 = vadd.f32 %v839, %v888
        %890 = vmatmul.f32.gmra.mxu0 %v851
        %v891 = vpop.f32.mrf.mxu0
        %v892 = vadd.f32 %v839, %v891
        %893 = vmatmul.f32.gmra.mxu0 %v854
        %v894 = vpop.f32.mrf.mxu0
        %v895 = vadd.f32 %v839, %v894
        %896 = vmatmul.f32.gmra.mxu0 %v857
        %v897 = vpop.f32.mrf.mxu0
        %v898 = vadd.f32 %v839, %v897
        %899 = vmatmul.f32.gmra.mxu0 %v860
        %v900 = vpop.f32.mrf.mxu0
        %v901 = vadd.f32 %v839, %v900
        %902 = vmatmul.f32.gmra.mxu0 %v863
        %v903 = vpop.f32.mrf.mxu0
        %v904 = vadd.f32 %v839, %v903
        %905 = vdwg.mxu0
        %v906 = vmax.f32 %v883, 0.0
        %v907 = vmax.f32 %v886, 0.0
        %v908 = vmax.f32 %v889, 0.0
        %v909 = vmax.f32 %v892, 0.0
        %v910 = vmax.f32 %v895, 0.0
        %v911 = vmax.f32 %v898, 0.0
        %v912 = vmax.f32 %v901, 0.0
        %v913 = vmax.f32 %v904, 0.0
        %v914 = vperm.slane %v478, 0
        %v916 = vsel %vm686, %v906, 0
        %v919 = vsel %vm686, %v907, 0
        %v922 = vsel %vm686, %v908, 0
        %v925 = vsel %vm686, %v909, 0
        %v928 = vsel %vm686, %v910, 0
        %v931 = vsel %vm686, %v911, 0
        %v934 = vsel %vm686, %v912, 0
        %v937 = vsel %vm686, %v913, 0
        %939 = vmatpush.msra.mxu0 0.0
        %940 = vmatpush.msra.mxu0 0.0
        %941 = vmatpush.msra.mxu0 0.0
        %942 = vmatpush.msra.mxu0 0.0
        %943 = vmatpush.msra.mxu0 0.0
        %944 = vmatpush.msra.mxu0 0.0
        %945 = vmatpush.msra.mxu0 0.0
        %946 = vmatpush.msra.mxu0 0.0
        %947 = vmatpush.msra.mxu0 %v460
        %948 = vmatpush.msra.mxu0 %v459
        %949 = vmatpush.msra.mxu0 %v458
        %950 = vmatpush.msra.mxu0 %v457
        %951 = vmatpush.msra.mxu0 %v456
        %952 = vmatpush.msra.mxu0 %v455
        %953 = vmatpush.msra.mxu0 %v454
        %954 = vmatpush.msra.mxu0 %v453
        %955 = vmatmul.f32.gmra.mxu0 %v916
        %v956 = vpop.f32.mrf.mxu0
        %v957 = vadd.f32 %v914, %v956
        %958 = vmatmul.f32.gmra.mxu0 %v919
        %v959 = vpop.f32.mrf.mxu0
        %v960 = vadd.f32 %v914, %v959
        %961 = vmatmul.f32.gmra.mxu0 %v922
        %v962 = vpop.f32.mrf.mxu0
        %v963 = vadd.f32 %v914, %v962
        %964 = vmatmul.f32.gmra.mxu0 %v925
        %v965 = vpop.f32.mrf.mxu0
        %v966 = vadd.f32 %v914, %v965
        %967 = vmatmul.f32.gmra.mxu0 %v928
        %v968 = vpop.f32.mrf.mxu0
        %v969 = vadd.f32 %v914, %v968
        %970 = vmatmul.f32.gmra.mxu0 %v931
        %v971 = vpop.f32.mrf.mxu0
        %v972 = vadd.f32 %v914, %v971
        %973 = vmatmul.f32.gmra.mxu0 %v934
        %v974 = vpop.f32.mrf.mxu0
        %v975 = vadd.f32 %v914, %v974
        %976 = vmatmul.f32.gmra.mxu0 %v937
        %v977 = vpop.f32.mrf.mxu0
        %v978 = vadd.f32 %v914, %v977
        %979 = vdwg.mxu0
        %v981 = vsel %vm840, %v957, 0
        %v984 = vsel %vm840, %v960, 0
        %v987 = vsel %vm840, %v963, 0
        %v990 = vsel %vm840, %v966, 0
        %v993 = vsel %vm840, %v969, 0
        %v996 = vsel %vm840, %v972, 0
        %v999 = vsel %vm840, %v975, 0
        %v1002 = vsel %vm840, %v978, 0
        %1004 = vmatpush.xpose.msra.mxu0 0.0
        %1005 = vmatpush.xpose.msra.mxu0 0.0
        %1006 = vmatpush.xpose.msra.mxu0 0.0
        %1007 = vmatpush.xpose.msra.mxu0 0.0
        %1008 = vmatpush.xpose.msra.mxu0 0.0
        %1009 = vmatpush.xpose.msra.mxu0 0.0
        %1010 = vmatpush.xpose.msra.mxu0 0.0
        %1011 = vmatpush.xpose.msra.mxu0 0.0
        %1012 = vmatpush.xpose.msra.mxu0 %v1002
        %1013 = vmatpush.xpose.msra.mxu0 %v999
        %1014 = vmatpush.xpose.msra.mxu0 %v996
        %1015 = vmatpush.xpose.msra.mxu0 %v993
        %1016 = vmatpush.xpose.msra.mxu0 %v990
        %1017 = vmatpush.xpose.msra.mxu0 %v987
        %1018 = vmatpush.xpose.msra.mxu0 %v984
        %1019 = vmatpush.xpose.msra.mxu0 %v981
        %1020 = vmatmul.f32.gmra.mxu0 %v981
        %v1021 = vpop.f32.mrf.mxu0
        %v1022 = vadd.f32 0.0, %v1021
        %1023 = vmatmul.f32.gmra.mxu0 %v984
        %v1024 = vpop.f32.mrf.mxu0
        %v1025 = vadd.f32 0.0, %v1024
        %1026 = vmatmul.f32.gmra.mxu0 %v987
        %v1027 = vpop.f32.mrf.mxu0
        %v1028 = vadd.f32 0.0, %v1027
        %1029 = vmatmul.f32.gmra.mxu0 %v990
        %v1030 = vpop.f32.mrf.mxu0
        %v1031 = vadd.f32 0.0, %v1030
        %1032 = vmatmul.f32.gmra.mxu0 %v993
        %v1033 = vpop.f32.mrf.mxu0
        %v1034 = vadd.f32 0.0, %v1033
        %1035 = vmatmul.f32.gmra.mxu0 %v996
        %v1036 = vpop.f32.mrf.mxu0
        %v1037 = vadd.f32 0.0, %v1036
        %1038 = vmatmul.f32.gmra.mxu0 %v999
        %v1039 = vpop.f32.mrf.mxu0
        %v1040 = vadd.f32 0.0, %v1039
        %1041 = vmatmul.f32.gmra.mxu0 %v1002
        %v1042 = vpop.f32.mrf.mxu0
        %v1043 = vadd.f32 0.0, %v1042
        %1044 = vdwg.mxu0
        %v1045 = vsel %vm686, %v1022, -inf
        %1046 = vmax.xlane.f32.xlu0 %v1045
        %v1047 = vpop.xlane.xlu0 %1046
        %v1048 = vsel %vm686, %v1025, -inf
        %1049 = vmax.xlane.f32.xlu0 %v1048
        %v1050 = vpop.xlane.xlu0 %1049
        %v1051 = vsel %vm686, %v1028, -inf
        %1052 = vmax.xlane.f32.xlu0 %v1051
        %v1053 = vpop.xlane.xlu0 %1052
        %v1054 = vsel %vm686, %v1031, -inf
        %1055 = vmax.xlane.f32.xlu0 %v1054
        %v1056 = vpop.xlane.xlu0 %1055
        %v1057 = vsel %vm686, %v1034, -inf
        %1058 = vmax.xlane.f32.xlu0 %v1057
        %v1059 = vpop.xlane.xlu0 %1058
        %v1060 = vsel %vm686, %v1037, -inf
        %1061 = vmax.xlane.f32.xlu0 %v1060
        %v1062 = vpop.xlane.xlu0 %1061
        %v1063 = vsel %vm686, %v1040, -inf
        %1064 = vmax.xlane.f32.xlu0 %v1063
        %v1065 = vpop.xlane.xlu0 %1064
        %v1066 = vsel %vm686, %v1043, -inf
        %1067 = vmax.xlane.f32.xlu0 %v1066
        %v1068 = vpop.xlane.xlu0 %1067
        %v1069 = vsub.f32 %v1022, %v1047
        %v1070 = vsub.f32 %v1025, %v1050
        %v1071 = vsub.f32 %v1028, %v1053
        %v1072 = vsub.f32 %v1031, %v1056
        %v1073 = vsub.f32 %v1034, %v1059
        %v1074 = vsub.f32 %v1037, %v1062
        %v1075 = vsub.f32 %v1040, %v1065
        %v1076 = vsub.f32 %v1043, %v1068
        %v1077 = vmul.f32 %v1069, 1.442695
        %v1078 = vpow.pop %v1077
        %v1079 = vmul.f32 %v1070, 1.442695
        %v1080 = vpow.pop %v1079
        %v1081 = vmul.f32 %v1071, 1.442695
        %v1082 = vpow.pop %v1081
        %v1083 = vmul.f32 %v1072, 1.442695
        %v1084 = vpow.pop %v1083
        %v1085 = vmul.f32 %v1073, 1.442695
        %v1086 = vpow.pop %v1085
        %v1087 = vmul.f32 %v1074, 1.442695
        %v1088 = vpow.pop %v1087
        %v1089 = vmul.f32 %v1075, 1.442695
        %v1090 = vpow.pop %v1089
        %v1091 = vmul.f32 %v1076, 1.442695
        %v1092 = vpow.pop %v1091
        %v1093 = vsel %vm686, %v1078, 0.0
        %1094 = vadd.xlane.f32.xlu0 %v1093
        %v1095 = vpop.xlane.xlu0 %1094
        %v1096 = vsel %vm686, %v1080, 0.0
        %1097 = vadd.xlane.f32.xlu0 %v1096
        %v1098 = vpop.xlane.xlu0 %1097
        %v1099 = vsel %vm686, %v1082, 0.0
        %1100 = vadd.xlane.f32.xlu0 %v1099
        %v1101 = vpop.xlane.xlu0 %1100
        %v1102 = vsel %vm686, %v1084, 0.0
        %1103 = vadd.xlane.f32.xlu0 %v1102
        %v1104 = vpop.xlane.xlu0 %1103
        %v1105 = vsel %vm686, %v1086, 0.0
        %1106 = vadd.xlane.f32.xlu0 %v1105
        %v1107 = vpop.xlane.xlu0 %1106
        %v1108 = vsel %vm686, %v1088, 0.0
        %1109 = vadd.xlane.f32.xlu0 %v1108
        %v1110 = vpop.xlane.xlu0 %1109
        %v1111 = vsel %vm686, %v1090, 0.0
        %1112 = vadd.xlane.f32.xlu0 %v1111
        %v1113 = vpop.xlane.xlu0 %1112
        %v1114 = vsel %vm686, %v1092, 0.0
        %1115 = vadd.xlane.f32.xlu0 %v1114
        %v1116 = vpop.xlane.xlu0 %1115
        %v1117 = vrcp.pop %v1095
        %v1118 = vmul.f32 %v1095, %v1117
        %v1119 = vsub.f32 1.0, %v1118
        %v1120 = vmul.f32 %v1117, %v1119
        %v1121 = vadd.f32 %v1117, %v1120
        %vm1122 = vweird.f32 %v1095
        %vm1123 = vweird.f32 %v1117
        %vm1124 = vmor %vm1122, %vm1123
        %v1125 = vsel %vm1124, %v1117, %v1121
        %v1126 = vand.u32 2147483647, %v1095
        %vm1127 = vcmp.eq.f32.partialorder %v1126, 8.507059e+37
        %v1128 = vand.u32 %v1095, 2147483648
        %v1129 = vor.u32 1.1754944e-38, %v1128
        %v1130 = vsel %vm1127, %v1129, %v1125
        %v1131 = vmul.f32 %v1078, %v1130
        %v1132 = vrcp.pop %v1098
        %v1133 = vmul.f32 %v1098, %v1132
        %v1134 = vsub.f32 1.0, %v1133
        %v1135 = vmul.f32 %v1132, %v1134
        %v1136 = vadd.f32 %v1132, %v1135
        %vm1137 = vweird.f32 %v1098
        %vm1138 = vweird.f32 %v1132
        %vm1139 = vmor %vm1137, %vm1138
        %v1140 = vsel %vm1139, %v1132, %v1136
        %v1141 = vand.u32 2147483647, %v1098
        %vm1142 = vcmp.eq.f32.partialorder %v1141, 8.507059e+37
        %v1143 = vand.u32 %v1098, 2147483648
        %v1144 = vor.u32 1.1754944e-38, %v1143
        %v1145 = vsel %vm1142, %v1144, %v1140
        %v1146 = vmul.f32 %v1080, %v1145
        %v1147 = vrcp.pop %v1101
        %v1148 = vmul.f32 %v1101, %v1147
        %v1149 = vsub.f32 1.0, %v1148
        %v1150 = vmul.f32 %v1147, %v1149
        %v1151 = vadd.f32 %v1147, %v1150
        %vm1152 = vweird.f32 %v1101
        %vm1153 = vweird.f32 %v1147
        %vm1154 = vmor %vm1152, %vm1153
        %v1155 = vsel %vm1154, %v1147, %v1151
        %v1156 = vand.u32 2147483647, %v1101
        %vm1157 = vcmp.eq.f32.partialorder %v1156, 8.507059e+37
        %v1158 = vand.u32 %v1101, 2147483648
        %v1159 = vor.u32 1.1754944e-38, %v1158
        %v1160 = vsel %vm1157, %v1159, %v1155
        %v1161 = vmul.f32 %v1082, %v1160
        %v1162 = vrcp.pop %v1104
        %v1163 = vmul.f32 %v1104, %v1162
        %v1164 = vsub.f32 1.0, %v1163
        %v1165 = vmul.f32 %v1162, %v1164
        %v1166 = vadd.f32 %v1162, %v1165
        %vm1167 = vweird.f32 %v1104
        %vm1168 = vweird.f32 %v1162
        %vm1169 = vmor %vm1167, %vm1168
        %v1170 = vsel %vm1169, %v1162, %v1166
        %v1171 = vand.u32 2147483647, %v1104
        %vm1172 = vcmp.eq.f32.partialorder %v1171, 8.507059e+37
        %v1173 = vand.u32 %v1104, 2147483648
        %v1174 = vor.u32 1.1754944e-38, %v1173
        %v1175 = vsel %vm1172, %v1174, %v1170
        %v1176 = vmul.f32 %v1084, %v1175
        %v1177 = vrcp.pop %v1107
        %v1178 = vmul.f32 %v1107, %v1177
        %v1179 = vsub.f32 1.0, %v1178
        %v1180 = vmul.f32 %v1177, %v1179
        %v1181 = vadd.f32 %v1177, %v1180
        %vm1182 = vweird.f32 %v1107
        %vm1183 = vweird.f32 %v1177
        %vm1184 = vmor %vm1182, %vm1183
        %v1185 = vsel %vm1184, %v1177, %v1181
        %v1186 = vand.u32 2147483647, %v1107
        %vm1187 = vcmp.eq.f32.partialorder %v1186, 8.507059e+37
        %v1188 = vand.u32 %v1107, 2147483648
        %v1189 = vor.u32 1.1754944e-38, %v1188
        %v1190 = vsel %vm1187, %v1189, %v1185
        %v1191 = vmul.f32 %v1086, %v1190
        %v1192 = vrcp.pop %v1110
        %v1193 = vmul.f32 %v1110, %v1192
        %v1194 = vsub.f32 1.0, %v1193
        %v1195 = vmul.f32 %v1192, %v1194
        %v1196 = vadd.f32 %v1192, %v1195
        %vm1197 = vweird.f32 %v1110
        %vm1198 = vweird.f32 %v1192
        %vm1199 = vmor %vm1197, %vm1198
        %v1200 = vsel %vm1199, %v1192, %v1196
        %v1201 = vand.u32 2147483647, %v1110
        %vm1202 = vcmp.eq.f32.partialorder %v1201, 8.507059e+37
        %v1203 = vand.u32 %v1110, 2147483648
        %v1204 = vor.u32 1.1754944e-38, %v1203
        %v1205 = vsel %vm1202, %v1204, %v1200
        %v1206 = vmul.f32 %v1088, %v1205
        %v1207 = vrcp.pop %v1113
        %v1208 = vmul.f32 %v1113, %v1207
        %v1209 = vsub.f32 1.0, %v1208
        %v1210 = vmul.f32 %v1207, %v1209
        %v1211 = vadd.f32 %v1207, %v1210
        %vm1212 = vweird.f32 %v1113
        %vm1213 = vweird.f32 %v1207
        %vm1214 = vmor %vm1212, %vm1213
        %v1215 = vsel %vm1214, %v1207, %v1211
        %v1216 = vand.u32 2147483647, %v1113
        %vm1217 = vcmp.eq.f32.partialorder %v1216, 8.507059e+37
        %v1218 = vand.u32 %v1113, 2147483648
        %v1219 = vor.u32 1.1754944e-38, %v1218
        %v1220 = vsel %vm1217, %v1219, %v1215
        %v1221 = vmul.f32 %v1090, %v1220
        %v1222 = vrcp.pop %v1116
        %v1223 = vmul.f32 %v1116, %v1222
        %v1224 = vsub.f32 1.0, %v1223
        %v1225 = vmul.f32 %v1222, %v1224
        %v1226 = vadd.f32 %v1222, %v1225
        %vm1227 = vweird.f32 %v1116
        %vm1228 = vweird.f32 %v1222
        %vm1229 = vmor %vm1227, %vm1228
        %v1230 = vsel %vm1229, %v1222, %v1226
        %v1231 = vand.u32 2147483647, %v1116
        %vm1232 = vcmp.eq.f32.partialorder %v1231, 8.507059e+37
        %v1233 = vand.u32 %v1116, 2147483648
        %v1234 = vor.u32 1.1754944e-38, %v1233
        %v1235 = vsel %vm1232, %v1234, %v1230
        %v1236 = vmul.f32 %v1092, %v1235
        %v1238 = vsel %vm686, %v1131, 0
        %v1241 = vsel %vm686, %v1146, 0
        %v1244 = vsel %vm686, %v1161, 0
        %v1247 = vsel %vm686, %v1176, 0
        %v1250 = vsel %vm686, %v1191, 0
        %v1253 = vsel %vm686, %v1206, 0
        %v1256 = vsel %vm686, %v1221, 0
        %v1259 = vsel %vm686, %v1236, 0
        %1261 = vmatpush.msra.mxu0 0.0
        %1262 = vmatpush.msra.mxu0 0.0
        %1263 = vmatpush.msra.mxu0 0.0
        %1264 = vmatpush.msra.mxu0 0.0
        %1265 = vmatpush.msra.mxu0 0.0
        %1266 = vmatpush.msra.mxu0 0.0
        %1267 = vmatpush.msra.mxu0 0.0
        %1268 = vmatpush.msra.mxu0 0.0
        %1269 = vmatpush.msra.mxu0 %v447
        %1270 = vmatpush.msra.mxu0 %v444
        %1271 = vmatpush.msra.mxu0 %v441
        %1272 = vmatpush.msra.mxu0 %v438
        %1273 = vmatpush.msra.mxu0 %v435
        %1274 = vmatpush.msra.mxu0 %v432
        %1275 = vmatpush.msra.mxu0 %v429
        %1276 = vmatpush.msra.mxu0 %v426
        %1277 = vmatmul.f32.gmra.mxu0 %v1238
        %v1278 = vpop.f32.mrf.mxu0
        %v1279 = vadd.f32 0.0, %v1278
        %1280 = vmatmul.f32.gmra.mxu0 %v1241
        %v1281 = vpop.f32.mrf.mxu0
        %v1282 = vadd.f32 0.0, %v1281
        %1283 = vmatmul.f32.gmra.mxu0 %v1244
        %v1284 = vpop.f32.mrf.mxu0
        %v1285 = vadd.f32 0.0, %v1284
        %1286 = vmatmul.f32.gmra.mxu0 %v1247
        %v1287 = vpop.f32.mrf.mxu0
        %v1288 = vadd.f32 0.0, %v1287
        %1289 = vmatmul.f32.gmra.mxu0 %v1250
        %v1290 = vpop.f32.mrf.mxu0
        %v1291 = vadd.f32 0.0, %v1290
        %1292 = vmatmul.f32.gmra.mxu0 %v1253
        %v1293 = vpop.f32.mrf.mxu0
        %v1294 = vadd.f32 0.0, %v1293
        %1295 = vmatmul.f32.gmra.mxu0 %v1256
        %v1296 = vpop.f32.mrf.mxu0
        %v1297 = vadd.f32 0.0, %v1296
        %1298 = vmatmul.f32.gmra.mxu0 %v1259
        %v1299 = vpop.f32.mrf.mxu0
        %v1300 = vadd.f32 0.0, %v1299
        %1301 = vdwg.mxu0
        %v1303 = vsel %vm686, %v733, 0
        %v1306 = vsel %vm686, %v748, 0
        %v1309 = vsel %vm686, %v763, 0
        %v1312 = vsel %vm686, %v778, 0
        %v1315 = vsel %vm686, %v793, 0
        %v1318 = vsel %vm686, %v808, 0
        %v1321 = vsel %vm686, %v823, 0
        %v1324 = vsel %vm686, %v838, 0
        %1326 = vmatpush.msra.mxu0 0.0
        %1327 = vmatpush.msra.mxu0 0.0
        %1328 = vmatpush.msra.mxu0 0.0
        %1329 = vmatpush.msra.mxu0 0.0
        %1330 = vmatpush.msra.mxu0 0.0
        %1331 = vmatpush.msra.mxu0 0.0
        %1332 = vmatpush.msra.mxu0 0.0
        %1333 = vmatpush.msra.mxu0 0.0
        %1334 = vmatpush.msra.mxu0 %v447
        %1335 = vmatpush.msra.mxu0 %v444
        %1336 = vmatpush.msra.mxu0 %v441
        %1337 = vmatpush.msra.mxu0 %v438
        %1338 = vmatpush.msra.mxu0 %v435
        %1339 = vmatpush.msra.mxu0 %v432
        %1340 = vmatpush.msra.mxu0 %v429
        %1341 = vmatpush.msra.mxu0 %v426
        %1342 = vmatmul.f32.gmra.mxu0 %v1303
        %v1343 = vpop.f32.mrf.mxu0
        %v1344 = vadd.f32 0.0, %v1343
        %1345 = vmatmul.f32.gmra.mxu0 %v1306
        %v1346 = vpop.f32.mrf.mxu0
        %v1347 = vadd.f32 0.0, %v1346
        %1348 = vmatmul.f32.gmra.mxu0 %v1309
        %v1349 = vpop.f32.mrf.mxu0
        %v1350 = vadd.f32 0.0, %v1349
        %1351 = vmatmul.f32.gmra.mxu0 %v1312
        %v1352 = vpop.f32.mrf.mxu0
        %v1353 = vadd.f32 0.0, %v1352
        %1354 = vmatmul.f32.gmra.mxu0 %v1315
        %v1355 = vpop.f32.mrf.mxu0
        %v1356 = vadd.f32 0.0, %v1355
        %1357 = vmatmul.f32.gmra.mxu0 %v1318
        %v1358 = vpop.f32.mrf.mxu0
        %v1359 = vadd.f32 0.0, %v1358
        %1360 = vmatmul.f32.gmra.mxu0 %v1321
        %v1361 = vpop.f32.mrf.mxu0
        %v1362 = vadd.f32 0.0, %v1361
        %1363 = vmatmul.f32.gmra.mxu0 %v1324
        %v1364 = vpop.f32.mrf.mxu0
        %v1365 = vadd.f32 0.0, %v1364
        %1366 = vdwg.mxu0
        %v1367 = vperm.slane %v479, 0
        %v1369 = vsel %vm840, %v1279, 0
        %v1372 = vsel %vm840, %v1282, 0
        %v1375 = vsel %vm840, %v1285, 0
        %v1378 = vsel %vm840, %v1288, 0
        %v1381 = vsel %vm840, %v1291, 0
        %v1384 = vsel %vm840, %v1294, 0
        %v1387 = vsel %vm840, %v1297, 0
        %v1390 = vsel %vm840, %v1300, 0
        %1392 = vmatpush.msra.mxu0 0.0
        %1393 = vmatpush.msra.mxu0 0.0
        %1394 = vmatpush.msra.mxu0 0.0
        %1395 = vmatpush.msra.mxu0 0.0
        %1396 = vmatpush.msra.mxu0 0.0
        %1397 = vmatpush.msra.mxu0 0.0
        %1398 = vmatpush.msra.mxu0 0.0
        %1399 = vmatpush.msra.mxu0 0.0
        %1400 = vmatpush.msra.mxu0 0.0
        %1401 = vmatpush.msra.mxu0 0.0
        %1402 = vmatpush.msra.mxu0 0.0
        %1403 = vmatpush.msra.mxu0 0.0
        %1404 = vmatpush.msra.mxu0 %v464
        %1405 = vmatpush.msra.mxu0 %v463
        %1406 = vmatpush.msra.mxu0 %v462
        %1407 = vmatpush.msra.mxu0 %v461
        %1408 = vmatmul.f32.gmra.mxu0 %v1369
        %v1409 = vpop.f32.mrf.mxu0
        %v1410 = vadd.f32 %v1367, %v1409
        %1411 = vmatmul.f32.gmra.mxu0 %v1372
        %v1412 = vpop.f32.mrf.mxu0
        %v1413 = vadd.f32 %v1367, %v1412
        %1414 = vmatmul.f32.gmra.mxu0 %v1375
        %v1415 = vpop.f32.mrf.mxu0
        %v1416 = vadd.f32 %v1367, %v1415
        %1417 = vmatmul.f32.gmra.mxu0 %v1378
        %v1418 = vpop.f32.mrf.mxu0
        %v1419 = vadd.f32 %v1367, %v1418
        %1420 = vmatmul.f32.gmra.mxu0 %v1381
        %v1421 = vpop.f32.mrf.mxu0
        %v1422 = vadd.f32 %v1367, %v1421
        %1423 = vmatmul.f32.gmra.mxu0 %v1384
        %v1424 = vpop.f32.mrf.mxu0
        %v1425 = vadd.f32 %v1367, %v1424
        %1426 = vmatmul.f32.gmra.mxu0 %v1387
        %v1427 = vpop.f32.mrf.mxu0
        %v1428 = vadd.f32 %v1367, %v1427
        %1429 = vmatmul.f32.gmra.mxu0 %v1390
        %v1430 = vpop.f32.mrf.mxu0
        %v1431 = vadd.f32 %v1367, %v1430
        %1432 = vdwg.mxu0
        %v1433 = vmax.f32 %v1410, 0.0
        %v1434 = vmax.f32 %v1413, 0.0
        %v1435 = vmax.f32 %v1416, 0.0
        %v1436 = vmax.f32 %v1419, 0.0
        %v1437 = vmax.f32 %v1422, 0.0
        %v1438 = vmax.f32 %v1425, 0.0
        %v1439 = vmax.f32 %v1428, 0.0
        %v1440 = vmax.f32 %v1431, 0.0
        %v1441 = vperm.slane %v480, 0
        %v1443 = vsel %vm840, %v1344, 0
        %v1446 = vsel %vm840, %v1347, 0
        %v1449 = vsel %vm840, %v1350, 0
        %v1452 = vsel %vm840, %v1353, 0
        %v1455 = vsel %vm840, %v1356, 0
        %v1458 = vsel %vm840, %v1359, 0
        %v1461 = vsel %vm840, %v1362, 0
        %v1464 = vsel %vm840, %v1365, 0
        %1466 = vmatpush.msra.mxu0 0.0
        %1467 = vmatpush.msra.mxu0 0.0
        %1468 = vmatpush.msra.mxu0 0.0
        %1469 = vmatpush.msra.mxu0 0.0
        %1470 = vmatpush.msra.mxu0 0.0
        %1471 = vmatpush.msra.mxu0 0.0
        %1472 = vmatpush.msra.mxu0 0.0
        %1473 = vmatpush.msra.mxu0 0.0
        %1474 = vmatpush.msra.mxu0 0.0
        %1475 = vmatpush.msra.mxu0 0.0
        %1476 = vmatpush.msra.mxu0 0.0
        %1477 = vmatpush.msra.mxu0 0.0
        %1478 = vmatpush.msra.mxu0 %v468
        %1479 = vmatpush.msra.mxu0 %v467
        %1480 = vmatpush.msra.mxu0 %v466
        %1481 = vmatpush.msra.mxu0 %v465
        %1482 = vmatmul.f32.gmra.mxu0 %v1443
        %v1483 = vpop.f32.mrf.mxu0
        %v1484 = vadd.f32 %v1441, %v1483
        %1485 = vmatmul.f32.gmra.mxu0 %v1446
        %v1486 = vpop.f32.mrf.mxu0
        %v1487 = vadd.f32 %v1441, %v1486
        %1488 = vmatmul.f32.gmra.mxu0 %v1449
        %v1489 = vpop.f32.mrf.mxu0
        %v1490 = vadd.f32 %v1441, %v1489
        %1491 = vmatmul.f32.gmra.mxu0 %v1452
        %v1492 = vpop.f32.mrf.mxu0
        %v1493 = vadd.f32 %v1441, %v1492
        %1494 = vmatmul.f32.gmra.mxu0 %v1455
        %v1495 = vpop.f32.mrf.mxu0
        %v1496 = vadd.f32 %v1441, %v1495
        %1497 = vmatmul.f32.gmra.mxu0 %v1458
        %v1498 = vpop.f32.mrf.mxu0
        %v1499 = vadd.f32 %v1441, %v1498
        %1500 = vmatmul.f32.gmra.mxu0 %v1461
        %v1501 = vpop.f32.mrf.mxu0
        %v1502 = vadd.f32 %v1441, %v1501
        %1503 = vmatmul.f32.gmra.mxu0 %v1464
        %v1504 = vpop.f32.mrf.mxu0
        %v1505 = vadd.f32 %v1441, %v1504
        %1506 = vdwg.mxu0
        %v1507 = vmax.f32 %v1484, 0.0
        %v1508 = vmax.f32 %v1487, 0.0
        %v1509 = vmax.f32 %v1490, 0.0
        %v1510 = vmax.f32 %v1493, 0.0
        %v1511 = vmax.f32 %v1496, 0.0
        %v1512 = vmax.f32 %v1499, 0.0
        %v1513 = vmax.f32 %v1502, 0.0
        %v1514 = vmax.f32 %v1505, 0.0
        %v1516 = vsel %vm840, %v1507, 0
        %v1519 = vsel %vm840, %v1508, 0
        %v1522 = vsel %vm840, %v1509, 0
        %v1525 = vsel %vm840, %v1510, 0
        %v1528 = vsel %vm840, %v1511, 0
        %v1531 = vsel %vm840, %v1512, 0
        %v1534 = vsel %vm840, %v1513, 0
        %v1537 = vsel %vm840, %v1514, 0
        %1539 = vmatpush.msra.mxu0 0.0
        %1540 = vmatpush.msra.mxu0 0.0
        %1541 = vmatpush.msra.mxu0 0.0
        %1542 = vmatpush.msra.mxu0 0.0
        %1543 = vmatpush.msra.mxu0 0.0
        %1544 = vmatpush.msra.mxu0 0.0
        %1545 = vmatpush.msra.mxu0 0.0
        %1546 = vmatpush.msra.mxu0 0.0
        %1547 = vmatpush.msra.mxu0 0.0
        %1548 = vmatpush.msra.mxu0 0.0
        %1549 = vmatpush.msra.mxu0 0.0
        %1550 = vmatpush.msra.mxu0 0.0
        %1551 = vmatpush.msra.mxu0 %v476
        %1552 = vmatpush.msra.mxu0 %v475
        %1553 = vmatpush.msra.mxu0 %v474
        %1554 = vmatpush.msra.mxu0 %v473
        %1555 = vmatmul.f32.gmra.mxu0 %v1516
        %v1556 = vpop.f32.mrf.mxu0
        %v1557 = vadd.f32 0.0, %v1556
        %1558 = vmatmul.f32.gmra.mxu0 %v1519
        %v1559 = vpop.f32.mrf.mxu0
        %v1560 = vadd.f32 0.0, %v1559
        %1561 = vmatmul.f32.gmra.mxu0 %v1522
        %v1562 = vpop.f32.mrf.mxu0
        %v1563 = vadd.f32 0.0, %v1562
        %1564 = vmatmul.f32.gmra.mxu0 %v1525
        %v1565 = vpop.f32.mrf.mxu0
        %v1566 = vadd.f32 0.0, %v1565
        %1567 = vmatmul.f32.gmra.mxu0 %v1528
        %v1568 = vpop.f32.mrf.mxu0
        %v1569 = vadd.f32 0.0, %v1568
        %1570 = vmatmul.f32.gmra.mxu0 %v1531
        %v1571 = vpop.f32.mrf.mxu0
        %v1572 = vadd.f32 0.0, %v1571
        %1573 = vmatmul.f32.gmra.mxu0 %v1534
        %v1574 = vpop.f32.mrf.mxu0
        %v1575 = vadd.f32 0.0, %v1574
        %1576 = vmatmul.f32.gmra.mxu0 %v1537
        %v1577 = vpop.f32.mrf.mxu0
        %v1578 = vadd.f32 0.0, %v1577
        %1579 = vdwg.mxu0
        %v1581 = vsel %vm840, %v1433, 0
        %v1584 = vsel %vm840, %v1434, 0
        %v1587 = vsel %vm840, %v1435, 0
        %v1590 = vsel %vm840, %v1436, 0
        %v1593 = vsel %vm840, %v1437, 0
        %v1596 = vsel %vm840, %v1438, 0
        %v1599 = vsel %vm840, %v1439, 0
        %v1602 = vsel %vm840, %v1440, 0
        %1604 = vmatpush.msra.mxu0 0.0
        %1605 = vmatpush.msra.mxu0 0.0
        %1606 = vmatpush.msra.mxu0 0.0
        %1607 = vmatpush.msra.mxu0 0.0
        %1608 = vmatpush.msra.mxu0 0.0
        %1609 = vmatpush.msra.mxu0 0.0
        %1610 = vmatpush.msra.mxu0 0.0
        %1611 = vmatpush.msra.mxu0 0.0
        %1612 = vmatpush.msra.mxu0 0.0
        %1613 = vmatpush.msra.mxu0 0.0
        %1614 = vmatpush.msra.mxu0 0.0
        %1615 = vmatpush.msra.mxu0 0.0
        %1616 = vmatpush.msra.mxu0 %v472
        %1617 = vmatpush.msra.mxu0 %v471
        %1618 = vmatpush.msra.mxu0 %v470
        %1619 = vmatpush.msra.mxu0 %v469
        %1620 = vmatmul.f32.gmra.mxu0 %v1581
        %v1621 = vpop.f32.mrf.mxu0
        %v1622 = vadd.f32 %v1557, %v1621
        %1623 = vmatmul.f32.gmra.mxu0 %v1584
        %v1624 = vpop.f32.mrf.mxu0
        %v1625 = vadd.f32 %v1560, %v1624
        %1626 = vmatmul.f32.gmra.mxu0 %v1587
        %v1627 = vpop.f32.mrf.mxu0
        %v1628 = vadd.f32 %v1563, %v1627
        %1629 = vmatmul.f32.gmra.mxu0 %v1590
        %v1630 = vpop.f32.mrf.mxu0
        %v1631 = vadd.f32 %v1566, %v1630
        %1632 = vmatmul.f32.gmra.mxu0 %v1593
        %v1633 = vpop.f32.mrf.mxu0
        %v1634 = vadd.f32 %v1569, %v1633
        %1635 = vmatmul.f32.gmra.mxu0 %v1596
        %v1636 = vpop.f32.mrf.mxu0
        %v1637 = vadd.f32 %v1572, %v1636
        %1638 = vmatmul.f32.gmra.mxu0 %v1599
        %v1639 = vpop.f32.mrf.mxu0
        %v1640 = vadd.f32 %v1575, %v1639
        %1641 = vmatmul.f32.gmra.mxu0 %v1602
        %v1642 = vpop.f32.mrf.mxu0
        %v1643 = vadd.f32 %v1578, %v1642
        %1644 = vdwg.mxu0
        %v1645 = vperm.slane %v481, 0
        %v1646 = vadd.f32 %v1622, %v1645
        %v1647 = vadd.f32 %v1625, %v1645
        %v1648 = vadd.f32 %v1628, %v1645
        %v1649 = vadd.f32 %v1631, %v1645
        %v1650 = vadd.f32 %v1634, %v1645
        %v1651 = vadd.f32 %v1637, %v1645
        %v1652 = vadd.f32 %v1640, %v1645
        %v1653 = vadd.f32 %v1643, %v1645
        %s1654 = scalar_lea.vmem %s5, 232
        %v1655 = vld [vmem:[%s1654] sm:$0xff]
        %v1656 = vld [vmem:[%s1654 + $0x8] sm:$0xff]
        %v1657 = vld [vmem:[%s1654 + $0x10] sm:$0xff]
        %v1658 = vld [vmem:[%s1654 + $0x18] sm:$0xff]
        %v1659 = vld [vmem:[%s1654 + $0x20] sm:$0xff]
        %v1660 = vld [vmem:[%s1654 + $0x28] sm:$0xff]
        %v1661 = vld [vmem:[%s1654 + $0x30] sm:$0xff]
        %v1662 = vld [vmem:[%s1654 + $0x38] sm:$0xff]
        %v1663 = vld [vmem:[%s1654 + $0x40] sm:$0xff]
        %v1664 = vld [vmem:[%s1654 + $0x48] sm:$0xff]
        %v1665 = vld [vmem:[%s1654 + $0x50] sm:$0xff]
        %v1666 = vld [vmem:[%s1654 + $0x58] sm:$0xff]
        %v1667 = vld [vmem:[%s1654 + $0x60] sm:$0xff]
        %v1668 = vld [vmem:[%s1654 + $0x68] sm:$0xff]
        %v1669 = vld [vmem:[%s1654 + $0x70] sm:$0xff]
        %v1670 = vld [vmem:[%s1654 + $0x78] sm:$0xff]
        %v1671 = vld [vmem:[%s1654 + $0x80] sm:$0xff]
        %v1672 = vld [vmem:[%s1654 + $0x88] sm:$0xff]
        %v1673 = vld [vmem:[%s1654 + $0x90] sm:$0xff]
        %v1674 = vld [vmem:[%s1654 + $0x98] sm:$0xff]
        %v1675 = vld [vmem:[%s1654 + $0xa0] sm:$0xff]
        %v1676 = vld [vmem:[%s1654 + $0xa8] sm:$0xff]
        %v1677 = vld [vmem:[%s1654 + $0xb0] sm:$0xff]
        %v1678 = vld [vmem:[%s1654 + $0xb8] sm:$0xff]
        %v1679 = vld [vmem:[%s1654 + $0xc0] sm:$0xff]
        %v1680 = vld [vmem:[%s1654 + $0xc8] sm:$0xff]
        %v1681 = vld [vmem:[%s1654 + $0xd0] sm:$0xff]
        %v1682 = vld [vmem:[%s1654 + $0xd8] sm:$0xff]
        %v1683 = vld [vmem:[%s1654 + $0xe0] sm:$0x1]
        %v1684 = vld [vmem:[%s1654 + $0xe1] sm:$0x1]
        %v1685 = vld [vmem:[%s1654 + $0xe2] sm:$0x1]
        %v1686 = vld [vmem:[%s1654 + $0xe3] sm:$0x1]
        %v1687 = vld [vmem:[%s1654 + $0xe4] sm:$0x1]
        %s1688 = sld [smem:[#allocation2 + $0x80]]
        %s1689 = sld [smem:[#allocation2 + $0x81]]
        %s1690 = sld [smem:[#allocation2 + $0x82]]
        %s1691 = sld [smem:[#allocation2 + $0x83]]
        %s1692 = sld [smem:[#allocation2 + $0x84]]
        %v1693 = vstv %s1688
        %v1694 = vsub.f32 %v528, %v1693
        %v1695 = vsub.f32 %v529, %v1693
        %v1696 = vsub.f32 %v530, %v1693
        %v1697 = vsub.f32 %v531, %v1693
        %v1698 = vsub.f32 %v532, %v1693
        %v1699 = vsub.f32 %v533, %v1693
        %v1700 = vsub.f32 %v534, %v1693
        %v1701 = vsub.f32 %v535, %v1693
        %v1702 = vstv %s1689
        %v1703 = vsub.f32 %v578, %v1702
        %v1704 = vsub.f32 %v579, %v1702
        %v1705 = vsub.f32 %v580, %v1702
        %v1706 = vsub.f32 %v581, %v1702
        %v1707 = vsub.f32 %v582, %v1702
        %v1708 = vsub.f32 %v583, %v1702
        %v1709 = vsub.f32 %v584, %v1702
        %v1710 = vsub.f32 %v585, %v1702
        %v1711 = vstv %s1690
        %v1712 = vmul.f32 %v1711, %v1694
        %v1713 = vmul.f32 %v1711, %v1695
        %v1714 = vmul.f32 %v1711, %v1696
        %v1715 = vmul.f32 %v1711, %v1697
        %v1716 = vmul.f32 %v1711, %v1698
        %v1717 = vmul.f32 %v1711, %v1699
        %v1718 = vmul.f32 %v1711, %v1700
        %v1719 = vmul.f32 %v1711, %v1701
        %v1720 = vmul.f32 %v1712, %v1694
        %v1721 = vmul.f32 %v1713, %v1695
        %v1722 = vmul.f32 %v1714, %v1696
        %v1723 = vmul.f32 %v1715, %v1697
        %v1724 = vmul.f32 %v1716, %v1698
        %v1725 = vmul.f32 %v1717, %v1699
        %v1726 = vmul.f32 %v1718, %v1700
        %v1727 = vmul.f32 %v1719, %v1701
        %v1728 = vstv %s1691
        %v1729 = vmul.f32 %v1728, %v1694
        %v1730 = vmul.f32 %v1728, %v1695
        %v1731 = vmul.f32 %v1728, %v1696
        %v1732 = vmul.f32 %v1728, %v1697
        %v1733 = vmul.f32 %v1728, %v1698
        %v1734 = vmul.f32 %v1728, %v1699
        %v1735 = vmul.f32 %v1728, %v1700
        %v1736 = vmul.f32 %v1728, %v1701
        %v1737 = vmul.f32 %v1729, %v1703
        %v1738 = vmul.f32 %v1730, %v1704
        %v1739 = vmul.f32 %v1731, %v1705
        %v1740 = vmul.f32 %v1732, %v1706
        %v1741 = vmul.f32 %v1733, %v1707
        %v1742 = vmul.f32 %v1734, %v1708
        %v1743 = vmul.f32 %v1735, %v1709
        %v1744 = vmul.f32 %v1736, %v1710
        %v1745 = vadd.f32 %v1720, %v1737
        %v1746 = vadd.f32 %v1721, %v1738
        %v1747 = vadd.f32 %v1722, %v1739
        %v1748 = vadd.f32 %v1723, %v1740
        %v1749 = vadd.f32 %v1724, %v1741
        %v1750 = vadd.f32 %v1725, %v1742
        %v1751 = vadd.f32 %v1726, %v1743
        %v1752 = vadd.f32 %v1727, %v1744
        %v1753 = vstv %s1692
        %v1754 = vmul.f32 %v1753, %v1703
        %v1755 = vmul.f32 %v1753, %v1704
        %v1756 = vmul.f32 %v1753, %v1705
        %v1757 = vmul.f32 %v1753, %v1706
        %v1758 = vmul.f32 %v1753, %v1707
        %v1759 = vmul.f32 %v1753, %v1708
        %v1760 = vmul.f32 %v1753, %v1709
        %v1761 = vmul.f32 %v1753, %v1710
        %v1762 = vmul.f32 %v1754, %v1703
        %v1763 = vmul.f32 %v1755, %v1704
        %v1764 = vmul.f32 %v1756, %v1705
        %v1765 = vmul.f32 %v1757, %v1706
        %v1766 = vmul.f32 %v1758, %v1707
        %v1767 = vmul.f32 %v1759, %v1708
        %v1768 = vmul.f32 %v1760, %v1709
        %v1769 = vmul.f32 %v1761, %v1710
        %v1770 = vadd.f32 %v1745, %v1762
        %v1771 = vadd.f32 %v1746, %v1763
        %v1772 = vadd.f32 %v1747, %v1764
        %v1773 = vadd.f32 %v1748, %v1765
        %v1774 = vadd.f32 %v1749, %v1766
        %v1775 = vadd.f32 %v1750, %v1767
        %v1776 = vadd.f32 %v1751, %v1768
        %v1777 = vadd.f32 %v1752, %v1769
        %v1778 = vsub.f32 0.0, %v1770
        %v1779 = vsub.f32 0.0, %v1771
        %v1780 = vsub.f32 0.0, %v1772
        %v1781 = vsub.f32 0.0, %v1773
        %v1782 = vsub.f32 0.0, %v1774
        %v1783 = vsub.f32 0.0, %v1775
        %v1784 = vsub.f32 0.0, %v1776
        %v1785 = vsub.f32 0.0, %v1777
        %v1786 = vmul.f32 %v1778, 1.442695
        %v1787 = vpow.pop %v1786
        %v1788 = vmul.f32 %v1779, 1.442695
        %v1789 = vpow.pop %v1788
        %v1790 = vmul.f32 %v1780, 1.442695
        %v1791 = vpow.pop %v1790
        %v1792 = vmul.f32 %v1781, 1.442695
        %v1793 = vpow.pop %v1792
        %v1794 = vmul.f32 %v1782, 1.442695
        %v1795 = vpow.pop %v1794
        %v1796 = vmul.f32 %v1783, 1.442695
        %v1797 = vpow.pop %v1796
        %v1798 = vmul.f32 %v1784, 1.442695
        %v1799 = vpow.pop %v1798
        %v1800 = vmul.f32 %v1785, 1.442695
        %v1801 = vpow.pop %v1800
        %v1802 = vsel %vm686, %v1787, 0.0
        %1803 = vadd.xlane.f32.xlu0 %v1802
        %v1804 = vpop.xlane.xlu0 %1803
        %v1805 = vsel %vm686, %v1789, 0.0
        %1806 = vadd.xlane.f32.xlu0 %v1805
        %v1807 = vpop.xlane.xlu0 %1806
        %v1808 = vsel %vm686, %v1791, 0.0
        %1809 = vadd.xlane.f32.xlu0 %v1808
        %v1810 = vpop.xlane.xlu0 %1809
        %v1811 = vsel %vm686, %v1793, 0.0
        %1812 = vadd.xlane.f32.xlu0 %v1811
        %v1813 = vpop.xlane.xlu0 %1812
        %v1814 = vsel %vm686, %v1795, 0.0
        %1815 = vadd.xlane.f32.xlu0 %v1814
        %v1816 = vpop.xlane.xlu0 %1815
        %v1817 = vsel %vm686, %v1797, 0.0
        %1818 = vadd.xlane.f32.xlu0 %v1817
        %v1819 = vpop.xlane.xlu0 %1818
        %v1820 = vsel %vm686, %v1799, 0.0
        %1821 = vadd.xlane.f32.xlu0 %v1820
        %v1822 = vpop.xlane.xlu0 %1821
        %v1823 = vsel %vm686, %v1801, 0.0
        %1824 = vadd.xlane.f32.xlu0 %v1823
        %v1825 = vpop.xlane.xlu0 %1824
        %v1826 = vmax.f32 %v1804, 1e-12
        %v1827 = vmax.f32 %v1807, 1e-12
        %v1828 = vmax.f32 %v1810, 1e-12
        %v1829 = vmax.f32 %v1813, 1e-12
        %v1830 = vmax.f32 %v1816, 1e-12
        %v1831 = vmax.f32 %v1819, 1e-12
        %v1832 = vmax.f32 %v1822, 1e-12
        %v1833 = vmax.f32 %v1825, 1e-12
        %v1834 = vrcp.pop %v1826
        %v1835 = vmul.f32 %v1826, %v1834
        %v1836 = vsub.f32 1.0, %v1835
        %v1837 = vmul.f32 %v1834, %v1836
        %v1838 = vadd.f32 %v1834, %v1837
        %vm1839 = vweird.f32 %v1826
        %vm1840 = vweird.f32 %v1834
        %vm1841 = vmor %vm1839, %vm1840
        %v1842 = vsel %vm1841, %v1834, %v1838
        %v1843 = vand.u32 2147483647, %v1826
        %vm1844 = vcmp.eq.f32.partialorder %v1843, 8.507059e+37
        %v1845 = vand.u32 %v1826, 2147483648
        %v1846 = vor.u32 1.1754944e-38, %v1845
        %v1847 = vsel %vm1844, %v1846, %v1842
        %v1848 = vmul.f32 %v1787, %v1847
        %v1849 = vrcp.pop %v1827
        %v1850 = vmul.f32 %v1827, %v1849
        %v1851 = vsub.f32 1.0, %v1850
        %v1852 = vmul.f32 %v1849, %v1851
        %v1853 = vadd.f32 %v1849, %v1852
        %vm1854 = vweird.f32 %v1827
        %vm1855 = vweird.f32 %v1849
        %vm1856 = vmor %vm1854, %vm1855
        %v1857 = vsel %vm1856, %v1849, %v1853
        %v1858 = vand.u32 2147483647, %v1827
        %vm1859 = vcmp.eq.f32.partialorder %v1858, 8.507059e+37
        %v1860 = vand.u32 %v1827, 2147483648
        %v1861 = vor.u32 1.1754944e-38, %v1860
        %v1862 = vsel %vm1859, %v1861, %v1857
        %v1863 = vmul.f32 %v1789, %v1862
        %v1864 = vrcp.pop %v1828
        %v1865 = vmul.f32 %v1828, %v1864
        %v1866 = vsub.f32 1.0, %v1865
        %v1867 = vmul.f32 %v1864, %v1866
        %v1868 = vadd.f32 %v1864, %v1867
        %vm1869 = vweird.f32 %v1828
        %vm1870 = vweird.f32 %v1864
        %vm1871 = vmor %vm1869, %vm1870
        %v1872 = vsel %vm1871, %v1864, %v1868
        %v1873 = vand.u32 2147483647, %v1828
        %vm1874 = vcmp.eq.f32.partialorder %v1873, 8.507059e+37
        %v1875 = vand.u32 %v1828, 2147483648
        %v1876 = vor.u32 1.1754944e-38, %v1875
        %v1877 = vsel %vm1874, %v1876, %v1872
        %v1878 = vmul.f32 %v1791, %v1877
        %v1879 = vrcp.pop %v1829
        %v1880 = vmul.f32 %v1829, %v1879
        %v1881 = vsub.f32 1.0, %v1880
        %v1882 = vmul.f32 %v1879, %v1881
        %v1883 = vadd.f32 %v1879, %v1882
        %vm1884 = vweird.f32 %v1829
        %vm1885 = vweird.f32 %v1879
        %vm1886 = vmor %vm1884, %vm1885
        %v1887 = vsel %vm1886, %v1879, %v1883
        %v1888 = vand.u32 2147483647, %v1829
        %vm1889 = vcmp.eq.f32.partialorder %v1888, 8.507059e+37
        %v1890 = vand.u32 %v1829, 2147483648
        %v1891 = vor.u32 1.1754944e-38, %v1890
        %v1892 = vsel %vm1889, %v1891, %v1887
        %v1893 = vmul.f32 %v1793, %v1892
        %v1894 = vrcp.pop %v1830
        %v1895 = vmul.f32 %v1830, %v1894
        %v1896 = vsub.f32 1.0, %v1895
        %v1897 = vmul.f32 %v1894, %v1896
        %v1898 = vadd.f32 %v1894, %v1897
        %vm1899 = vweird.f32 %v1830
        %vm1900 = vweird.f32 %v1894
        %vm1901 = vmor %vm1899, %vm1900
        %v1902 = vsel %vm1901, %v1894, %v1898
        %v1903 = vand.u32 2147483647, %v1830
        %vm1904 = vcmp.eq.f32.partialorder %v1903, 8.507059e+37
        %v1905 = vand.u32 %v1830, 2147483648
        %v1906 = vor.u32 1.1754944e-38, %v1905
        %v1907 = vsel %vm1904, %v1906, %v1902
        %v1908 = vmul.f32 %v1795, %v1907
        %v1909 = vrcp.pop %v1831
        %v1910 = vmul.f32 %v1831, %v1909
        %v1911 = vsub.f32 1.0, %v1910
        %v1912 = vmul.f32 %v1909, %v1911
        %v1913 = vadd.f32 %v1909, %v1912
        %vm1914 = vweird.f32 %v1831
        %vm1915 = vweird.f32 %v1909
        %vm1916 = vmor %vm1914, %vm1915
        %v1917 = vsel %vm1916, %v1909, %v1913
        %v1918 = vand.u32 2147483647, %v1831
        %vm1919 = vcmp.eq.f32.partialorder %v1918, 8.507059e+37
        %v1920 = vand.u32 %v1831, 2147483648
        %v1921 = vor.u32 1.1754944e-38, %v1920
        %v1922 = vsel %vm1919, %v1921, %v1917
        %v1923 = vmul.f32 %v1797, %v1922
        %v1924 = vrcp.pop %v1832
        %v1925 = vmul.f32 %v1832, %v1924
        %v1926 = vsub.f32 1.0, %v1925
        %v1927 = vmul.f32 %v1924, %v1926
        %v1928 = vadd.f32 %v1924, %v1927
        %vm1929 = vweird.f32 %v1832
        %vm1930 = vweird.f32 %v1924
        %vm1931 = vmor %vm1929, %vm1930
        %v1932 = vsel %vm1931, %v1924, %v1928
        %v1933 = vand.u32 2147483647, %v1832
        %vm1934 = vcmp.eq.f32.partialorder %v1933, 8.507059e+37
        %v1935 = vand.u32 %v1832, 2147483648
        %v1936 = vor.u32 1.1754944e-38, %v1935
        %v1937 = vsel %vm1934, %v1936, %v1932
        %v1938 = vmul.f32 %v1799, %v1937
        %v1939 = vrcp.pop %v1833
        %v1940 = vmul.f32 %v1833, %v1939
        %v1941 = vsub.f32 1.0, %v1940
        %v1942 = vmul.f32 %v1939, %v1941
        %v1943 = vadd.f32 %v1939, %v1942
        %vm1944 = vweird.f32 %v1833
        %vm1945 = vweird.f32 %v1939
        %vm1946 = vmor %vm1944, %vm1945
        %v1947 = vsel %vm1946, %v1939, %v1943
        %v1948 = vand.u32 2147483647, %v1833
        %vm1949 = vcmp.eq.f32.partialorder %v1948, 8.507059e+37
        %v1950 = vand.u32 %v1833, 2147483648
        %v1951 = vor.u32 1.1754944e-38, %v1950
        %v1952 = vsel %vm1949, %v1951, %v1947
        %v1953 = vmul.f32 %v1801, %v1952
        %v1954 = vperm.slane %v1683, 0
        %v1956 = vsel %vm840, %v1646, 0
        %v1959 = vsel %vm840, %v1647, 0
        %v1962 = vsel %vm840, %v1648, 0
        %v1965 = vsel %vm840, %v1649, 0
        %v1968 = vsel %vm840, %v1650, 0
        %v1971 = vsel %vm840, %v1651, 0
        %v1974 = vsel %vm840, %v1652, 0
        %v1977 = vsel %vm840, %v1653, 0
        %1979 = vmatpush.msra.mxu0 0.0
        %1980 = vmatpush.msra.mxu0 0.0
        %1981 = vmatpush.msra.mxu0 0.0
        %1982 = vmatpush.msra.mxu0 0.0
        %1983 = vmatpush.msra.mxu0 0.0
        %1984 = vmatpush.msra.mxu0 0.0
        %1985 = vmatpush.msra.mxu0 0.0
        %1986 = vmatpush.msra.mxu0 0.0
        %1987 = vmatpush.msra.mxu0 0.0
        %1988 = vmatpush.msra.mxu0 0.0
        %1989 = vmatpush.msra.mxu0 0.0
        %1990 = vmatpush.msra.mxu0 0.0
        %1991 = vmatpush.msra.mxu0 %v1658
        %1992 = vmatpush.msra.mxu0 %v1657
        %1993 = vmatpush.msra.mxu0 %v1656
        %1994 = vmatpush.msra.mxu0 %v1655
        %1995 = vmatmul.f32.gmra.mxu0 %v1956
        %v1996 = vpop.f32.mrf.mxu0
        %v1997 = vadd.f32 %v1954, %v1996
        %1998 = vmatmul.f32.gmra.mxu0 %v1959
        %v1999 = vpop.f32.mrf.mxu0
        %v2000 = vadd.f32 %v1954, %v1999
        %2001 = vmatmul.f32.gmra.mxu0 %v1962
        %v2002 = vpop.f32.mrf.mxu0
        %v2003 = vadd.f32 %v1954, %v2002
        %2004 = vmatmul.f32.gmra.mxu0 %v1965
        %v2005 = vpop.f32.mrf.mxu0
        %v2006 = vadd.f32 %v1954, %v2005
        %2007 = vmatmul.f32.gmra.mxu0 %v1968
        %v2008 = vpop.f32.mrf.mxu0
        %v2009 = vadd.f32 %v1954, %v2008
        %2010 = vmatmul.f32.gmra.mxu0 %v1971
        %v2011 = vpop.f32.mrf.mxu0
        %v2012 = vadd.f32 %v1954, %v2011
        %2013 = vmatmul.f32.gmra.mxu0 %v1974
        %v2014 = vpop.f32.mrf.mxu0
        %v2015 = vadd.f32 %v1954, %v2014
        %2016 = vmatmul.f32.gmra.mxu0 %v1977
        %v2017 = vpop.f32.mrf.mxu0
        %v2018 = vadd.f32 %v1954, %v2017
        %2019 = vdwg.mxu0
        %v2020 = vmax.f32 %v1997, 0.0
        %v2021 = vmax.f32 %v2000, 0.0
        %v2022 = vmax.f32 %v2003, 0.0
        %v2023 = vmax.f32 %v2006, 0.0
        %v2024 = vmax.f32 %v2009, 0.0
        %v2025 = vmax.f32 %v2012, 0.0
        %v2026 = vmax.f32 %v2015, 0.0
        %v2027 = vmax.f32 %v2018, 0.0
        %v2028 = vperm.slane %v1684, 0
        %v2030 = vsel %vm686, %v2020, 0
        %v2033 = vsel %vm686, %v2021, 0
        %v2036 = vsel %vm686, %v2022, 0
        %v2039 = vsel %vm686, %v2023, 0
        %v2042 = vsel %vm686, %v2024, 0
        %v2045 = vsel %vm686, %v2025, 0
        %v2048 = vsel %vm686, %v2026, 0
        %v2051 = vsel %vm686, %v2027, 0
        %2053 = vmatpush.msra.mxu0 0.0
        %2054 = vmatpush.msra.mxu0 0.0
        %2055 = vmatpush.msra.mxu0 0.0
        %2056 = vmatpush.msra.mxu0 0.0
        %2057 = vmatpush.msra.mxu0 0.0
        %2058 = vmatpush.msra.mxu0 0.0
        %2059 = vmatpush.msra.mxu0 0.0
        %2060 = vmatpush.msra.mxu0 0.0
        %2061 = vmatpush.msra.mxu0 %v1666
        %2062 = vmatpush.msra.mxu0 %v1665
        %2063 = vmatpush.msra.mxu0 %v1664
        %2064 = vmatpush.msra.mxu0 %v1663
        %2065 = vmatpush.msra.mxu0 %v1662
        %2066 = vmatpush.msra.mxu0 %v1661
        %2067 = vmatpush.msra.mxu0 %v1660
        %2068 = vmatpush.msra.mxu0 %v1659
        %2069 = vmatmul.f32.gmra.mxu0 %v2030
        %v2070 = vpop.f32.mrf.mxu0
        %v2071 = vadd.f32 %v2028, %v2070
        %2072 = vmatmul.f32.gmra.mxu0 %v2033
        %v2073 = vpop.f32.mrf.mxu0
        %v2074 = vadd.f32 %v2028, %v2073
        %2075 = vmatmul.f32.gmra.mxu0 %v2036
        %v2076 = vpop.f32.mrf.mxu0
        %v2077 = vadd.f32 %v2028, %v2076
        %2078 = vmatmul.f32.gmra.mxu0 %v2039
        %v2079 = vpop.f32.mrf.mxu0
        %v2080 = vadd.f32 %v2028, %v2079
        %2081 = vmatmul.f32.gmra.mxu0 %v2042
        %v2082 = vpop.f32.mrf.mxu0
        %v2083 = vadd.f32 %v2028, %v2082
        %2084 = vmatmul.f32.gmra.mxu0 %v2045
        %v2085 = vpop.f32.mrf.mxu0
        %v2086 = vadd.f32 %v2028, %v2085
        %2087 = vmatmul.f32.gmra.mxu0 %v2048
        %v2088 = vpop.f32.mrf.mxu0
        %v2089 = vadd.f32 %v2028, %v2088
        %2090 = vmatmul.f32.gmra.mxu0 %v2051
        %v2091 = vpop.f32.mrf.mxu0
        %v2092 = vadd.f32 %v2028, %v2091
        %2093 = vdwg.mxu0
        %v2095 = vsel %vm840, %v2071, 0
        %v2098 = vsel %vm840, %v2074, 0
        %v2101 = vsel %vm840, %v2077, 0
        %v2104 = vsel %vm840, %v2080, 0
        %v2107 = vsel %vm840, %v2083, 0
        %v2110 = vsel %vm840, %v2086, 0
        %v2113 = vsel %vm840, %v2089, 0
        %v2116 = vsel %vm840, %v2092, 0
        %2118 = vmatpush.xpose.msra.mxu0 0.0
        %2119 = vmatpush.xpose.msra.mxu0 0.0
        %2120 = vmatpush.xpose.msra.mxu0 0.0
        %2121 = vmatpush.xpose.msra.mxu0 0.0
        %2122 = vmatpush.xpose.msra.mxu0 0.0
        %2123 = vmatpush.xpose.msra.mxu0 0.0
        %2124 = vmatpush.xpose.msra.mxu0 0.0
        %2125 = vmatpush.xpose.msra.mxu0 0.0
        %2126 = vmatpush.xpose.msra.mxu0 %v2116
        %2127 = vmatpush.xpose.msra.mxu0 %v2113
        %2128 = vmatpush.xpose.msra.mxu0 %v2110
        %2129 = vmatpush.xpose.msra.mxu0 %v2107
        %2130 = vmatpush.xpose.msra.mxu0 %v2104
        %2131 = vmatpush.xpose.msra.mxu0 %v2101
        %2132 = vmatpush.xpose.msra.mxu0 %v2098
        %2133 = vmatpush.xpose.msra.mxu0 %v2095
        %2134 = vmatmul.f32.gmra.mxu0 %v2095
        %v2135 = vpop.f32.mrf.mxu0
        %v2136 = vadd.f32 0.0, %v2135
        %2137 = vmatmul.f32.gmra.mxu0 %v2098
        %v2138 = vpop.f32.mrf.mxu0
        %v2139 = vadd.f32 0.0, %v2138
        %2140 = vmatmul.f32.gmra.mxu0 %v2101
        %v2141 = vpop.f32.mrf.mxu0
        %v2142 = vadd.f32 0.0, %v2141
        %2143 = vmatmul.f32.gmra.mxu0 %v2104
        %v2144 = vpop.f32.mrf.mxu0
        %v2145 = vadd.f32 0.0, %v2144
        %2146 = vmatmul.f32.gmra.mxu0 %v2107
        %v2147 = vpop.f32.mrf.mxu0
        %v2148 = vadd.f32 0.0, %v2147
        %2149 = vmatmul.f32.gmra.mxu0 %v2110
        %v2150 = vpop.f32.mrf.mxu0
        %v2151 = vadd.f32 0.0, %v2150
        %2152 = vmatmul.f32.gmra.mxu0 %v2113
        %v2153 = vpop.f32.mrf.mxu0
        %v2154 = vadd.f32 0.0, %v2153
        %2155 = vmatmul.f32.gmra.mxu0 %v2116
        %v2156 = vpop.f32.mrf.mxu0
        %v2157 = vadd.f32 0.0, %v2156
        %2158 = vdwg.mxu0
        %v2159 = vsel %vm686, %v2136, -inf
        %2160 = vmax.xlane.f32.xlu0 %v2159
        %v2161 = vpop.xlane.xlu0 %2160
        %v2162 = vsel %vm686, %v2139, -inf
        %2163 = vmax.xlane.f32.xlu0 %v2162
        %v2164 = vpop.xlane.xlu0 %2163
        %v2165 = vsel %vm686, %v2142, -inf
        %2166 = vmax.xlane.f32.xlu0 %v2165
        %v2167 = vpop.xlane.xlu0 %2166
        %v2168 = vsel %vm686, %v2145, -inf
        %2169 = vmax.xlane.f32.xlu0 %v2168
        %v2170 = vpop.xlane.xlu0 %2169
        %v2171 = vsel %vm686, %v2148, -inf
        %2172 = vmax.xlane.f32.xlu0 %v2171
        %v2173 = vpop.xlane.xlu0 %2172
        %v2174 = vsel %vm686, %v2151, -inf
        %2175 = vmax.xlane.f32.xlu0 %v2174
        %v2176 = vpop.xlane.xlu0 %2175
        %v2177 = vsel %vm686, %v2154, -inf
        %2178 = vmax.xlane.f32.xlu0 %v2177
        %v2179 = vpop.xlane.xlu0 %2178
        %v2180 = vsel %vm686, %v2157, -inf
        %2181 = vmax.xlane.f32.xlu0 %v2180
        %v2182 = vpop.xlane.xlu0 %2181
        %v2183 = vsub.f32 %v2136, %v2161
        %v2184 = vsub.f32 %v2139, %v2164
        %v2185 = vsub.f32 %v2142, %v2167
        %v2186 = vsub.f32 %v2145, %v2170
        %v2187 = vsub.f32 %v2148, %v2173
        %v2188 = vsub.f32 %v2151, %v2176
        %v2189 = vsub.f32 %v2154, %v2179
        %v2190 = vsub.f32 %v2157, %v2182
        %v2191 = vmul.f32 %v2183, 1.442695
        %v2192 = vpow.pop %v2191
        %v2193 = vmul.f32 %v2184, 1.442695
        %v2194 = vpow.pop %v2193
        %v2195 = vmul.f32 %v2185, 1.442695
        %v2196 = vpow.pop %v2195
        %v2197 = vmul.f32 %v2186, 1.442695
        %v2198 = vpow.pop %v2197
        %v2199 = vmul.f32 %v2187, 1.442695
        %v2200 = vpow.pop %v2199
        %v2201 = vmul.f32 %v2188, 1.442695
        %v2202 = vpow.pop %v2201
        %v2203 = vmul.f32 %v2189, 1.442695
        %v2204 = vpow.pop %v2203
        %v2205 = vmul.f32 %v2190, 1.442695
        %v2206 = vpow.pop %v2205
        %v2207 = vsel %vm686, %v2192, 0.0
        %2208 = vadd.xlane.f32.xlu0 %v2207
        %v2209 = vpop.xlane.xlu0 %2208
        %v2210 = vsel %vm686, %v2194, 0.0
        %2211 = vadd.xlane.f32.xlu0 %v2210
        %v2212 = vpop.xlane.xlu0 %2211
        %v2213 = vsel %vm686, %v2196, 0.0
        %2214 = vadd.xlane.f32.xlu0 %v2213
        %v2215 = vpop.xlane.xlu0 %2214
        %v2216 = vsel %vm686, %v2198, 0.0
        %2217 = vadd.xlane.f32.xlu0 %v2216
        %v2218 = vpop.xlane.xlu0 %2217
        %v2219 = vsel %vm686, %v2200, 0.0
        %2220 = vadd.xlane.f32.xlu0 %v2219
        %v2221 = vpop.xlane.xlu0 %2220
        %v2222 = vsel %vm686, %v2202, 0.0
        %2223 = vadd.xlane.f32.xlu0 %v2222
        %v2224 = vpop.xlane.xlu0 %2223
        %v2225 = vsel %vm686, %v2204, 0.0
        %2226 = vadd.xlane.f32.xlu0 %v2225
        %v2227 = vpop.xlane.xlu0 %2226
        %v2228 = vsel %vm686, %v2206, 0.0
        %2229 = vadd.xlane.f32.xlu0 %v2228
        %v2230 = vpop.xlane.xlu0 %2229
        %v2231 = vrcp.pop %v2209
        %v2232 = vmul.f32 %v2209, %v2231
        %v2233 = vsub.f32 1.0, %v2232
        %v2234 = vmul.f32 %v2231, %v2233
        %v2235 = vadd.f32 %v2231, %v2234
        %vm2236 = vweird.f32 %v2209
        %vm2237 = vweird.f32 %v2231
        %vm2238 = vmor %vm2236, %vm2237
        %v2239 = vsel %vm2238, %v2231, %v2235
        %v2240 = vand.u32 2147483647, %v2209
        %vm2241 = vcmp.eq.f32.partialorder %v2240, 8.507059e+37
        %v2242 = vand.u32 %v2209, 2147483648
        %v2243 = vor.u32 1.1754944e-38, %v2242
        %v2244 = vsel %vm2241, %v2243, %v2239
        %v2245 = vmul.f32 %v2192, %v2244
        %v2246 = vrcp.pop %v2212
        %v2247 = vmul.f32 %v2212, %v2246
        %v2248 = vsub.f32 1.0, %v2247
        %v2249 = vmul.f32 %v2246, %v2248
        %v2250 = vadd.f32 %v2246, %v2249
        %vm2251 = vweird.f32 %v2212
        %vm2252 = vweird.f32 %v2246
        %vm2253 = vmor %vm2251, %vm2252
        %v2254 = vsel %vm2253, %v2246, %v2250
        %v2255 = vand.u32 2147483647, %v2212
        %vm2256 = vcmp.eq.f32.partialorder %v2255, 8.507059e+37
        %v2257 = vand.u32 %v2212, 2147483648
        %v2258 = vor.u32 1.1754944e-38, %v2257
        %v2259 = vsel %vm2256, %v2258, %v2254
        %v2260 = vmul.f32 %v2194, %v2259
        %v2261 = vrcp.pop %v2215
        %v2262 = vmul.f32 %v2215, %v2261
        %v2263 = vsub.f32 1.0, %v2262
        %v2264 = vmul.f32 %v2261, %v2263
        %v2265 = vadd.f32 %v2261, %v2264
        %vm2266 = vweird.f32 %v2215
        %vm2267 = vweird.f32 %v2261
        %vm2268 = vmor %vm2266, %vm2267
        %v2269 = vsel %vm2268, %v2261, %v2265
        %v2270 = vand.u32 2147483647, %v2215
        %vm2271 = vcmp.eq.f32.partialorder %v2270, 8.507059e+37
        %v2272 = vand.u32 %v2215, 2147483648
        %v2273 = vor.u32 1.1754944e-38, %v2272
        %v2274 = vsel %vm2271, %v2273, %v2269
        %v2275 = vmul.f32 %v2196, %v2274
        %v2276 = vrcp.pop %v2218
        %v2277 = vmul.f32 %v2218, %v2276
        %v2278 = vsub.f32 1.0, %v2277
        %v2279 = vmul.f32 %v2276, %v2278
        %v2280 = vadd.f32 %v2276, %v2279
        %vm2281 = vweird.f32 %v2218
        %vm2282 = vweird.f32 %v2276
        %vm2283 = vmor %vm2281, %vm2282
        %v2284 = vsel %vm2283, %v2276, %v2280
        %v2285 = vand.u32 2147483647, %v2218
        %vm2286 = vcmp.eq.f32.partialorder %v2285, 8.507059e+37
        %v2287 = vand.u32 %v2218, 2147483648
        %v2288 = vor.u32 1.1754944e-38, %v2287
        %v2289 = vsel %vm2286, %v2288, %v2284
        %v2290 = vmul.f32 %v2198, %v2289
        %v2291 = vrcp.pop %v2221
        %v2292 = vmul.f32 %v2221, %v2291
        %v2293 = vsub.f32 1.0, %v2292
        %v2294 = vmul.f32 %v2291, %v2293
        %v2295 = vadd.f32 %v2291, %v2294
        %vm2296 = vweird.f32 %v2221
        %vm2297 = vweird.f32 %v2291
        %vm2298 = vmor %vm2296, %vm2297
        %v2299 = vsel %vm2298, %v2291, %v2295
        %v2300 = vand.u32 2147483647, %v2221
        %vm2301 = vcmp.eq.f32.partialorder %v2300, 8.507059e+37
        %v2302 = vand.u32 %v2221, 2147483648
        %v2303 = vor.u32 1.1754944e-38, %v2302
        %v2304 = vsel %vm2301, %v2303, %v2299
        %v2305 = vmul.f32 %v2200, %v2304
        %v2306 = vrcp.pop %v2224
        %v2307 = vmul.f32 %v2224, %v2306
        %v2308 = vsub.f32 1.0, %v2307
        %v2309 = vmul.f32 %v2306, %v2308
        %v2310 = vadd.f32 %v2306, %v2309
        %vm2311 = vweird.f32 %v2224
        %vm2312 = vweird.f32 %v2306
        %vm2313 = vmor %vm2311, %vm2312
        %v2314 = vsel %vm2313, %v2306, %v2310
        %v2315 = vand.u32 2147483647, %v2224
        %vm2316 = vcmp.eq.f32.partialorder %v2315, 8.507059e+37
        %v2317 = vand.u32 %v2224, 2147483648
        %v2318 = vor.u32 1.1754944e-38, %v2317
        %v2319 = vsel %vm2316, %v2318, %v2314
        %v2320 = vmul.f32 %v2202, %v2319
        %v2321 = vrcp.pop %v2227
        %v2322 = vmul.f32 %v2227, %v2321
        %v2323 = vsub.f32 1.0, %v2322
        %v2324 = vmul.f32 %v2321, %v2323
        %v2325 = vadd.f32 %v2321, %v2324
        %vm2326 = vweird.f32 %v2227
        %vm2327 = vweird.f32 %v2321
        %vm2328 = vmor %vm2326, %vm2327
        %v2329 = vsel %vm2328, %v2321, %v2325
        %v2330 = vand.u32 2147483647, %v2227
        %vm2331 = vcmp.eq.f32.partialorder %v2330, 8.507059e+37
        %v2332 = vand.u32 %v2227, 2147483648
        %v2333 = vor.u32 1.1754944e-38, %v2332
        %v2334 = vsel %vm2331, %v2333, %v2329
        %v2335 = vmul.f32 %v2204, %v2334
        %v2336 = vrcp.pop %v2230
        %v2337 = vmul.f32 %v2230, %v2336
        %v2338 = vsub.f32 1.0, %v2337
        %v2339 = vmul.f32 %v2336, %v2338
        %v2340 = vadd.f32 %v2336, %v2339
        %vm2341 = vweird.f32 %v2230
        %vm2342 = vweird.f32 %v2336
        %vm2343 = vmor %vm2341, %vm2342
        %v2344 = vsel %vm2343, %v2336, %v2340
        %v2345 = vand.u32 2147483647, %v2230
        %vm2346 = vcmp.eq.f32.partialorder %v2345, 8.507059e+37
        %v2347 = vand.u32 %v2230, 2147483648
        %v2348 = vor.u32 1.1754944e-38, %v2347
        %v2349 = vsel %vm2346, %v2348, %v2344
        %v2350 = vmul.f32 %v2206, %v2349
        %v2352 = vsel %vm686, %v2245, 0
        %v2355 = vsel %vm686, %v2260, 0
        %v2358 = vsel %vm686, %v2275, 0
        %v2361 = vsel %vm686, %v2290, 0
        %v2364 = vsel %vm686, %v2305, 0
        %v2367 = vsel %vm686, %v2320, 0
        %v2370 = vsel %vm686, %v2335, 0
        %v2373 = vsel %vm686, %v2350, 0
        %2375 = vmatpush.msra.mxu0 0.0
        %2376 = vmatpush.msra.mxu0 0.0
        %2377 = vmatpush.msra.mxu0 0.0
        %2378 = vmatpush.msra.mxu0 0.0
        %2379 = vmatpush.msra.mxu0 0.0
        %2380 = vmatpush.msra.mxu0 0.0
        %2381 = vmatpush.msra.mxu0 0.0
        %2382 = vmatpush.msra.mxu0 0.0
        %2383 = vmatpush.msra.mxu0 %v1653
        %2384 = vmatpush.msra.mxu0 %v1652
        %2385 = vmatpush.msra.mxu0 %v1651
        %2386 = vmatpush.msra.mxu0 %v1650
        %2387 = vmatpush.msra.mxu0 %v1649
        %2388 = vmatpush.msra.mxu0 %v1648
        %2389 = vmatpush.msra.mxu0 %v1647
        %2390 = vmatpush.msra.mxu0 %v1646
        %2391 = vmatmul.f32.gmra.mxu0 %v2352
        %v2392 = vpop.f32.mrf.mxu0
        %v2393 = vadd.f32 0.0, %v2392
        %2394 = vmatmul.f32.gmra.mxu0 %v2355
        %v2395 = vpop.f32.mrf.mxu0
        %v2396 = vadd.f32 0.0, %v2395
        %2397 = vmatmul.f32.gmra.mxu0 %v2358
        %v2398 = vpop.f32.mrf.mxu0
        %v2399 = vadd.f32 0.0, %v2398
        %2400 = vmatmul.f32.gmra.mxu0 %v2361
        %v2401 = vpop.f32.mrf.mxu0
        %v2402 = vadd.f32 0.0, %v2401
        %2403 = vmatmul.f32.gmra.mxu0 %v2364
        %v2404 = vpop.f32.mrf.mxu0
        %v2405 = vadd.f32 0.0, %v2404
        %2406 = vmatmul.f32.gmra.mxu0 %v2367
        %v2407 = vpop.f32.mrf.mxu0
        %v2408 = vadd.f32 0.0, %v2407
        %2409 = vmatmul.f32.gmra.mxu0 %v2370
        %v2410 = vpop.f32.mrf.mxu0
        %v2411 = vadd.f32 0.0, %v2410
        %2412 = vmatmul.f32.gmra.mxu0 %v2373
        %v2413 = vpop.f32.mrf.mxu0
        %v2414 = vadd.f32 0.0, %v2413
        %2415 = vdwg.mxu0
        %v2417 = vsel %vm686, %v1848, 0
        %v2420 = vsel %vm686, %v1863, 0
        %v2423 = vsel %vm686, %v1878, 0
        %v2426 = vsel %vm686, %v1893, 0
        %v2429 = vsel %vm686, %v1908, 0
        %v2432 = vsel %vm686, %v1923, 0
        %v2435 = vsel %vm686, %v1938, 0
        %v2438 = vsel %vm686, %v1953, 0
        %2440 = vmatpush.msra.mxu0 0.0
        %2441 = vmatpush.msra.mxu0 0.0
        %2442 = vmatpush.msra.mxu0 0.0
        %2443 = vmatpush.msra.mxu0 0.0
        %2444 = vmatpush.msra.mxu0 0.0
        %2445 = vmatpush.msra.mxu0 0.0
        %2446 = vmatpush.msra.mxu0 0.0
        %2447 = vmatpush.msra.mxu0 0.0
        %2448 = vmatpush.msra.mxu0 %v1653
        %2449 = vmatpush.msra.mxu0 %v1652
        %2450 = vmatpush.msra.mxu0 %v1651
        %2451 = vmatpush.msra.mxu0 %v1650
        %2452 = vmatpush.msra.mxu0 %v1649
        %2453 = vmatpush.msra.mxu0 %v1648
        %2454 = vmatpush.msra.mxu0 %v1647
        %2455 = vmatpush.msra.mxu0 %v1646
        %2456 = vmatmul.f32.gmra.mxu0 %v2417
        %v2457 = vpop.f32.mrf.mxu0
        %v2458 = vadd.f32 0.0, %v2457
        %2459 = vmatmul.f32.gmra.mxu0 %v2420
        %v2460 = vpop.f32.mrf.mxu0
        %v2461 = vadd.f32 0.0, %v2460
        %2462 = vmatmul.f32.gmra.mxu0 %v2423
        %v2463 = vpop.f32.mrf.mxu0
        %v2464 = vadd.f32 0.0, %v2463
        %2465 = vmatmul.f32.gmra.mxu0 %v2426
        %v2466 = vpop.f32.mrf.mxu0
        %v2467 = vadd.f32 0.0, %v2466
        %2468 = vmatmul.f32.gmra.mxu0 %v2429
        %v2469 = vpop.f32.mrf.mxu0
        %v2470 = vadd.f32 0.0, %v2469
        %2471 = vmatmul.f32.gmra.mxu0 %v2432
        %v2472 = vpop.f32.mrf.mxu0
        %v2473 = vadd.f32 0.0, %v2472
        %2474 = vmatmul.f32.gmra.mxu0 %v2435
        %v2475 = vpop.f32.mrf.mxu0
        %v2476 = vadd.f32 0.0, %v2475
        %2477 = vmatmul.f32.gmra.mxu0 %v2438
        %v2478 = vpop.f32.mrf.mxu0
        %v2479 = vadd.f32 0.0, %v2478
        %2480 = vdwg.mxu0
        %v2481 = vperm.slane %v1685, 0
        %v2483 = vsel %vm840, %v2393, 0
        %v2486 = vsel %vm840, %v2396, 0
        %v2489 = vsel %vm840, %v2399, 0
        %v2492 = vsel %vm840, %v2402, 0
        %v2495 = vsel %vm840, %v2405, 0
        %v2498 = vsel %vm840, %v2408, 0
        %v2501 = vsel %vm840, %v2411, 0
        %v2504 = vsel %vm840, %v2414, 0
        %2506 = vmatpush.msra.mxu0 0.0
        %2507 = vmatpush.msra.mxu0 0.0
        %2508 = vmatpush.msra.mxu0 0.0
        %2509 = vmatpush.msra.mxu0 0.0
        %2510 = vmatpush.msra.mxu0 0.0
        %2511 = vmatpush.msra.mxu0 0.0
        %2512 = vmatpush.msra.mxu0 0.0
        %2513 = vmatpush.msra.mxu0 0.0
        %2514 = vmatpush.msra.mxu0 0.0
        %2515 = vmatpush.msra.mxu0 0.0
        %2516 = vmatpush.msra.mxu0 0.0
        %2517 = vmatpush.msra.mxu0 0.0
        %2518 = vmatpush.msra.mxu0 %v1670
        %2519 = vmatpush.msra.mxu0 %v1669
        %2520 = vmatpush.msra.mxu0 %v1668
        %2521 = vmatpush.msra.mxu0 %v1667
        %2522 = vmatmul.f32.gmra.mxu0 %v2483
        %v2523 = vpop.f32.mrf.mxu0
        %v2524 = vadd.f32 %v2481, %v2523
        %2525 = vmatmul.f32.gmra.mxu0 %v2486
        %v2526 = vpop.f32.mrf.mxu0
        %v2527 = vadd.f32 %v2481, %v2526
        %2528 = vmatmul.f32.gmra.mxu0 %v2489
        %v2529 = vpop.f32.mrf.mxu0
        %v2530 = vadd.f32 %v2481, %v2529
        %2531 = vmatmul.f32.gmra.mxu0 %v2492
        %v2532 = vpop.f32.mrf.mxu0
        %v2533 = vadd.f32 %v2481, %v2532
        %2534 = vmatmul.f32.gmra.mxu0 %v2495
        %v2535 = vpop.f32.mrf.mxu0
        %v2536 = vadd.f32 %v2481, %v2535
        %2537 = vmatmul.f32.gmra.mxu0 %v2498
        %v2538 = vpop.f32.mrf.mxu0
        %v2539 = vadd.f32 %v2481, %v2538
        %2540 = vmatmul.f32.gmra.mxu0 %v2501
        %v2541 = vpop.f32.mrf.mxu0
        %v2542 = vadd.f32 %v2481, %v2541
        %2543 = vmatmul.f32.gmra.mxu0 %v2504
        %v2544 = vpop.f32.mrf.mxu0
        %v2545 = vadd.f32 %v2481, %v2544
        %2546 = vdwg.mxu0
        %v2547 = vmax.f32 %v2524, 0.0
        %v2548 = vmax.f32 %v2527, 0.0
        %v2549 = vmax.f32 %v2530, 0.0
        %v2550 = vmax.f32 %v2533, 0.0
        %v2551 = vmax.f32 %v2536, 0.0
        %v2552 = vmax.f32 %v2539, 0.0
        %v2553 = vmax.f32 %v2542, 0.0
        %v2554 = vmax.f32 %v2545, 0.0
        %v2555 = vperm.slane %v1686, 0
        %v2557 = vsel %vm840, %v2458, 0
        %v2560 = vsel %vm840, %v2461, 0
        %v2563 = vsel %vm840, %v2464, 0
        %v2566 = vsel %vm840, %v2467, 0
        %v2569 = vsel %vm840, %v2470, 0
        %v2572 = vsel %vm840, %v2473, 0
        %v2575 = vsel %vm840, %v2476, 0
        %v2578 = vsel %vm840, %v2479, 0
        %2580 = vmatpush.msra.mxu0 0.0
        %2581 = vmatpush.msra.mxu0 0.0
        %2582 = vmatpush.msra.mxu0 0.0
        %2583 = vmatpush.msra.mxu0 0.0
        %2584 = vmatpush.msra.mxu0 0.0
        %2585 = vmatpush.msra.mxu0 0.0
        %2586 = vmatpush.msra.mxu0 0.0
        %2587 = vmatpush.msra.mxu0 0.0
        %2588 = vmatpush.msra.mxu0 0.0
        %2589 = vmatpush.msra.mxu0 0.0
        %2590 = vmatpush.msra.mxu0 0.0
        %2591 = vmatpush.msra.mxu0 0.0
        %2592 = vmatpush.msra.mxu0 %v1674
        %2593 = vmatpush.msra.mxu0 %v1673
        %2594 = vmatpush.msra.mxu0 %v1672
        %2595 = vmatpush.msra.mxu0 %v1671
        %2596 = vmatmul.f32.gmra.mxu0 %v2557
        %v2597 = vpop.f32.mrf.mxu0
        %v2598 = vadd.f32 %v2555, %v2597
        %2599 = vmatmul.f32.gmra.mxu0 %v2560
        %v2600 = vpop.f32.mrf.mxu0
        %v2601 = vadd.f32 %v2555, %v2600
        %2602 = vmatmul.f32.gmra.mxu0 %v2563
        %v2603 = vpop.f32.mrf.mxu0
        %v2604 = vadd.f32 %v2555, %v2603
        %2605 = vmatmul.f32.gmra.mxu0 %v2566
        %v2606 = vpop.f32.mrf.mxu0
        %v2607 = vadd.f32 %v2555, %v2606
        %2608 = vmatmul.f32.gmra.mxu0 %v2569
        %v2609 = vpop.f32.mrf.mxu0
        %v2610 = vadd.f32 %v2555, %v2609
        %2611 = vmatmul.f32.gmra.mxu0 %v2572
        %v2612 = vpop.f32.mrf.mxu0
        %v2613 = vadd.f32 %v2555, %v2612
        %2614 = vmatmul.f32.gmra.mxu0 %v2575
        %v2615 = vpop.f32.mrf.mxu0
        %v2616 = vadd.f32 %v2555, %v2615
        %2617 = vmatmul.f32.gmra.mxu0 %v2578
        %v2618 = vpop.f32.mrf.mxu0
        %v2619 = vadd.f32 %v2555, %v2618
        %2620 = vdwg.mxu0
        %v2621 = vmax.f32 %v2598, 0.0
        %v2622 = vmax.f32 %v2601, 0.0
        %v2623 = vmax.f32 %v2604, 0.0
        %v2624 = vmax.f32 %v2607, 0.0
        %v2625 = vmax.f32 %v2610, 0.0
        %v2626 = vmax.f32 %v2613, 0.0
        %v2627 = vmax.f32 %v2616, 0.0
        %v2628 = vmax.f32 %v2619, 0.0
        %v2630 = vsel %vm840, %v2621, 0
        %v2633 = vsel %vm840, %v2622, 0
        %v2636 = vsel %vm840, %v2623, 0
        %v2639 = vsel %vm840, %v2624, 0
        %v2642 = vsel %vm840, %v2625, 0
        %v2645 = vsel %vm840, %v2626, 0
        %v2648 = vsel %vm840, %v2627, 0
        %v2651 = vsel %vm840, %v2628, 0
        %2653 = vmatpush.msra.mxu0 0.0
        %2654 = vmatpush.msra.mxu0 0.0
        %2655 = vmatpush.msra.mxu0 0.0
        %2656 = vmatpush.msra.mxu0 0.0
        %2657 = vmatpush.msra.mxu0 0.0
        %2658 = vmatpush.msra.mxu0 0.0
        %2659 = vmatpush.msra.mxu0 0.0
        %2660 = vmatpush.msra.mxu0 0.0
        %2661 = vmatpush.msra.mxu0 0.0
        %2662 = vmatpush.msra.mxu0 0.0
        %2663 = vmatpush.msra.mxu0 0.0
        %2664 = vmatpush.msra.mxu0 0.0
        %2665 = vmatpush.msra.mxu0 %v1682
        %2666 = vmatpush.msra.mxu0 %v1681
        %2667 = vmatpush.msra.mxu0 %v1680
        %2668 = vmatpush.msra.mxu0 %v1679
        %2669 = vmatmul.f32.gmra.mxu0 %v2630
        %v2670 = vpop.f32.mrf.mxu0
        %v2671 = vadd.f32 0.0, %v2670
        %2672 = vmatmul.f32.gmra.mxu0 %v2633
        %v2673 = vpop.f32.mrf.mxu0
        %v2674 = vadd.f32 0.0, %v2673
        %2675 = vmatmul.f32.gmra.mxu0 %v2636
        %v2676 = vpop.f32.mrf.mxu0
        %v2677 = vadd.f32 0.0, %v2676
        %2678 = vmatmul.f32.gmra.mxu0 %v2639
        %v2679 = vpop.f32.mrf.mxu0
        %v2680 = vadd.f32 0.0, %v2679
        %2681 = vmatmul.f32.gmra.mxu0 %v2642
        %v2682 = vpop.f32.mrf.mxu0
        %v2683 = vadd.f32 0.0, %v2682
        %2684 = vmatmul.f32.gmra.mxu0 %v2645
        %v2685 = vpop.f32.mrf.mxu0
        %v2686 = vadd.f32 0.0, %v2685
        %2687 = vmatmul.f32.gmra.mxu0 %v2648
        %v2688 = vpop.f32.mrf.mxu0
        %v2689 = vadd.f32 0.0, %v2688
        %2690 = vmatmul.f32.gmra.mxu0 %v2651
        %v2691 = vpop.f32.mrf.mxu0
        %v2692 = vadd.f32 0.0, %v2691
        %2693 = vdwg.mxu0
        %v2695 = vsel %vm840, %v2547, 0
        %v2698 = vsel %vm840, %v2548, 0
        %v2701 = vsel %vm840, %v2549, 0
        %v2704 = vsel %vm840, %v2550, 0
        %v2707 = vsel %vm840, %v2551, 0
        %v2710 = vsel %vm840, %v2552, 0
        %v2713 = vsel %vm840, %v2553, 0
        %v2716 = vsel %vm840, %v2554, 0
        %2718 = vmatpush.msra.mxu0 0.0
        %2719 = vmatpush.msra.mxu0 0.0
        %2720 = vmatpush.msra.mxu0 0.0
        %2721 = vmatpush.msra.mxu0 0.0
        %2722 = vmatpush.msra.mxu0 0.0
        %2723 = vmatpush.msra.mxu0 0.0
        %2724 = vmatpush.msra.mxu0 0.0
        %2725 = vmatpush.msra.mxu0 0.0
        %2726 = vmatpush.msra.mxu0 0.0
        %2727 = vmatpush.msra.mxu0 0.0
        %2728 = vmatpush.msra.mxu0 0.0
        %2729 = vmatpush.msra.mxu0 0.0
        %2730 = vmatpush.msra.mxu0 %v1678
        %2731 = vmatpush.msra.mxu0 %v1677
        %2732 = vmatpush.msra.mxu0 %v1676
        %2733 = vmatpush.msra.mxu0 %v1675
        %2734 = vmatmul.f32.gmra.mxu0 %v2695
        %v2735 = vpop.f32.mrf.mxu0
        %v2736 = vadd.f32 %v2671, %v2735
        %2737 = vmatmul.f32.gmra.mxu0 %v2698
        %v2738 = vpop.f32.mrf.mxu0
        %v2739 = vadd.f32 %v2674, %v2738
        %2740 = vmatmul.f32.gmra.mxu0 %v2701
        %v2741 = vpop.f32.mrf.mxu0
        %v2742 = vadd.f32 %v2677, %v2741
        %2743 = vmatmul.f32.gmra.mxu0 %v2704
        %v2744 = vpop.f32.mrf.mxu0
        %v2745 = vadd.f32 %v2680, %v2744
        %2746 = vmatmul.f32.gmra.mxu0 %v2707
        %v2747 = vpop.f32.mrf.mxu0
        %v2748 = vadd.f32 %v2683, %v2747
        %2749 = vmatmul.f32.gmra.mxu0 %v2710
        %v2750 = vpop.f32.mrf.mxu0
        %v2751 = vadd.f32 %v2686, %v2750
        %2752 = vmatmul.f32.gmra.mxu0 %v2713
        %v2753 = vpop.f32.mrf.mxu0
        %v2754 = vadd.f32 %v2689, %v2753
        %2755 = vmatmul.f32.gmra.mxu0 %v2716
        %v2756 = vpop.f32.mrf.mxu0
        %v2757 = vadd.f32 %v2692, %v2756
        %2758 = vdwg.mxu0
        %v2759 = vperm.slane %v1687, 0
        %v2760 = vadd.f32 %v2736, %v2759
        %v2761 = vadd.f32 %v2739, %v2759
        %v2762 = vadd.f32 %v2742, %v2759
        %v2763 = vadd.f32 %v2745, %v2759
        %v2764 = vadd.f32 %v2748, %v2759
        %v2765 = vadd.f32 %v2751, %v2759
        %v2766 = vadd.f32 %v2754, %v2759
        %v2767 = vadd.f32 %v2757, %v2759
        %v2768 = vperm.slane %v286, 0
        %v2770 = vsel %vm840, %v2760, 0
        %v2773 = vsel %vm840, %v2761, 0
        %v2776 = vsel %vm840, %v2762, 0
        %v2779 = vsel %vm840, %v2763, 0
        %v2782 = vsel %vm840, %v2764, 0
        %v2785 = vsel %vm840, %v2765, 0
        %v2788 = vsel %vm840, %v2766, 0
        %v2791 = vsel %vm840, %v2767, 0
        %2793 = vmatpush.msra.mxu0 0.0
        %2794 = vmatpush.msra.mxu0 0.0
        %2795 = vmatpush.msra.mxu0 0.0
        %2796 = vmatpush.msra.mxu0 0.0
        %2797 = vmatpush.msra.mxu0 0.0
        %2798 = vmatpush.msra.mxu0 0.0
        %2799 = vmatpush.msra.mxu0 0.0
        %2800 = vmatpush.msra.mxu0 0.0
        %2801 = vmatpush.msra.mxu0 0.0
        %2802 = vmatpush.msra.mxu0 0.0
        %2803 = vmatpush.msra.mxu0 0.0
        %2804 = vmatpush.msra.mxu0 0.0
        %2805 = vmatpush.msra.mxu0 %v274
        %2806 = vmatpush.msra.mxu0 %v273
        %2807 = vmatpush.msra.mxu0 %v272
        %2808 = vmatpush.msra.mxu0 %v271
        %2809 = vmatmul.f32.gmra.mxu0 %v2770
        %v2810 = vpop.f32.mrf.mxu0
        %v2811 = vadd.f32 %v2768, %v2810
        %2812 = vmatmul.f32.gmra.mxu0 %v2773
        %v2813 = vpop.f32.mrf.mxu0
        %v2814 = vadd.f32 %v2768, %v2813
        %2815 = vmatmul.f32.gmra.mxu0 %v2776
        %v2816 = vpop.f32.mrf.mxu0
        %v2817 = vadd.f32 %v2768, %v2816
        %2818 = vmatmul.f32.gmra.mxu0 %v2779
        %v2819 = vpop.f32.mrf.mxu0
        %v2820 = vadd.f32 %v2768, %v2819
        %2821 = vmatmul.f32.gmra.mxu0 %v2782
        %v2822 = vpop.f32.mrf.mxu0
        %v2823 = vadd.f32 %v2768, %v2822
        %2824 = vmatmul.f32.gmra.mxu0 %v2785
        %v2825 = vpop.f32.mrf.mxu0
        %v2826 = vadd.f32 %v2768, %v2825
        %2827 = vmatmul.f32.gmra.mxu0 %v2788
        %v2828 = vpop.f32.mrf.mxu0
        %v2829 = vadd.f32 %v2768, %v2828
        %2830 = vmatmul.f32.gmra.mxu0 %v2791
        %v2831 = vpop.f32.mrf.mxu0
        %v2832 = vadd.f32 %v2768, %v2831
        %2833 = vdwg.mxu0
        %v2834 = vmax.f32 %v2811, 0.0
        %v2835 = vmax.f32 %v2814, 0.0
        %v2836 = vmax.f32 %v2817, 0.0
        %v2837 = vmax.f32 %v2820, 0.0
        %v2838 = vmax.f32 %v2823, 0.0
        %v2839 = vmax.f32 %v2826, 0.0
        %v2840 = vmax.f32 %v2829, 0.0
        %v2841 = vmax.f32 %v2832, 0.0
        %v2842 = vperm.slane %v287, 0
        %v2844 = vsel %vm686, %v2834, 0
        %v2847 = vsel %vm686, %v2835, 0
        %v2850 = vsel %vm686, %v2836, 0
        %v2853 = vsel %vm686, %v2837, 0
        %v2856 = vsel %vm686, %v2838, 0
        %v2859 = vsel %vm686, %v2839, 0
        %v2862 = vsel %vm686, %v2840, 0
        %v2865 = vsel %vm686, %v2841, 0
        %2867 = vmatpush.msra.mxu0 0.0
        %2868 = vmatpush.msra.mxu0 0.0
        %2869 = vmatpush.msra.mxu0 0.0
        %2870 = vmatpush.msra.mxu0 0.0
        %2871 = vmatpush.msra.mxu0 0.0
        %2872 = vmatpush.msra.mxu0 0.0
        %2873 = vmatpush.msra.mxu0 0.0
        %2874 = vmatpush.msra.mxu0 0.0
        %2875 = vmatpush.msra.mxu0 %v282
        %2876 = vmatpush.msra.mxu0 %v281
        %2877 = vmatpush.msra.mxu0 %v280
        %2878 = vmatpush.msra.mxu0 %v279
        %2879 = vmatpush.msra.mxu0 %v278
        %2880 = vmatpush.msra.mxu0 %v277
        %2881 = vmatpush.msra.mxu0 %v276
        %2882 = vmatpush.msra.mxu0 %v275
        %2883 = vmatmul.f32.gmra.mxu0 %v2844
        %v2884 = vpop.f32.mrf.mxu0
        %v2885 = vadd.f32 %v2842, %v2884
        %2886 = vmatmul.f32.gmra.mxu0 %v2847
        %v2887 = vpop.f32.mrf.mxu0
        %v2888 = vadd.f32 %v2842, %v2887
        %2889 = vmatmul.f32.gmra.mxu0 %v2850
        %v2890 = vpop.f32.mrf.mxu0
        %v2891 = vadd.f32 %v2842, %v2890
        %2892 = vmatmul.f32.gmra.mxu0 %v2853
        %v2893 = vpop.f32.mrf.mxu0
        %v2894 = vadd.f32 %v2842, %v2893
        %2895 = vmatmul.f32.gmra.mxu0 %v2856
        %v2896 = vpop.f32.mrf.mxu0
        %v2897 = vadd.f32 %v2842, %v2896
        %2898 = vmatmul.f32.gmra.mxu0 %v2859
        %v2899 = vpop.f32.mrf.mxu0
        %v2900 = vadd.f32 %v2842, %v2899
        %2901 = vmatmul.f32.gmra.mxu0 %v2862
        %v2902 = vpop.f32.mrf.mxu0
        %v2903 = vadd.f32 %v2842, %v2902
        %2904 = vmatmul.f32.gmra.mxu0 %v2865
        %v2905 = vpop.f32.mrf.mxu0
        %v2906 = vadd.f32 %v2842, %v2905
        %2907 = vdwg.mxu0
        %2909 = vset.pattern.permute.xlu0 0
        %2910 = vperm.xlu0 %2909, %v288
        %v2911 = vpop.permute.xlu0 %2910
        %v2914 = vsel %vm840, %v283, 0
        %v2917 = vsel %vm840, %v2885, 0
        %v2920 = vsel %vm840, %v2888, 0
        %v2923 = vsel %vm840, %v2891, 0
        %v2926 = vsel %vm840, %v2894, 0
        %v2929 = vsel %vm840, %v2897, 0
        %v2932 = vsel %vm840, %v2900, 0
        %v2935 = vsel %vm840, %v2903, 0
        %v2938 = vsel %vm840, %v2906, 0
        %2940 = vmatpush.xpose.msra.mxu0 0.0
        %2941 = vmatpush.xpose.msra.mxu0 0.0
        %2942 = vmatpush.xpose.msra.mxu0 0.0
        %2943 = vmatpush.xpose.msra.mxu0 0.0
        %2944 = vmatpush.xpose.msra.mxu0 0.0
        %2945 = vmatpush.xpose.msra.mxu0 0.0
        %2946 = vmatpush.xpose.msra.mxu0 0.0
        %2947 = vmatpush.xpose.msra.mxu0 0.0
        %2948 = vmatpush.xpose.msra.mxu0 %v2938
        %2949 = vmatpush.xpose.msra.mxu0 %v2935
        %2950 = vmatpush.xpose.msra.mxu0 %v2932
        %2951 = vmatpush.xpose.msra.mxu0 %v2929
        %2952 = vmatpush.xpose.msra.mxu0 %v2926
        %2953 = vmatpush.xpose.msra.mxu0 %v2923
        %2954 = vmatpush.xpose.msra.mxu0 %v2920
        %2955 = vmatpush.xpose.msra.mxu0 %v2917
        %2956 = vmatmul.f32.gmra.mxu0 %v2914
        %v2957 = vpop.f32.mrf.mxu0
        %v2958 = vadd.f32 %v2911, %v2957
        %2959 = vdwg.mxu0
        %vm2960 = vcmask 516096
        %v2961 = vsel %vm2960, %v2958, -inf
        %2962 = vmax.xlane.f32.xlu0 %v2961
        %v2963 = vpop.xlane.xlu0 %2962
        %v2964 = vsub.f32 %v2958, %v2963
        %v2965 = vmul.f32 %v2964, 1.442695
        %v2966 = vpow.pop %v2965
        %v2967 = vsel %vm2960, %v2966, 0.0
        %2968 = vadd.xlane.f32.xlu0 %v2967
        %v2969 = vpop.xlane.xlu0 %2968
        %v2970 = vrcp.pop %v2969
        %v2971 = vmul.f32 %v2969, %v2970
        %v2972 = vsub.f32 1.0, %v2971
        %v2973 = vmul.f32 %v2970, %v2972
        %v2974 = vadd.f32 %v2970, %v2973
        %vm2975 = vweird.f32 %v2969
        %vm2976 = vweird.f32 %v2970
        %vm2977 = vmor %vm2975, %vm2976
        %v2978 = vsel %vm2977, %v2970, %v2974
        %v2979 = vand.u32 2147483647, %v2969
        %vm2980 = vcmp.eq.f32.partialorder %v2979, 8.507059e+37
        %v2981 = vand.u32 %v2969, 2147483648
        %v2982 = vor.u32 1.1754944e-38, %v2981
        %v2983 = vsel %vm2980, %v2982, %v2978
        %v2984 = vmul.f32 %v2966, %v2983
        %v2986 = vsel %vm686, %v2984, 0
        %2988 = vmatpush.msra.mxu0 0.0
        %2989 = vmatpush.msra.mxu0 0.0
        %2990 = vmatpush.msra.mxu0 0.0
        %2991 = vmatpush.msra.mxu0 0.0
        %2992 = vmatpush.msra.mxu0 0.0
        %2993 = vmatpush.msra.mxu0 0.0
        %2994 = vmatpush.msra.mxu0 0.0
        %2995 = vmatpush.msra.mxu0 0.0
        %2996 = vmatpush.msra.mxu0 %v2767
        %2997 = vmatpush.msra.mxu0 %v2766
        %2998 = vmatpush.msra.mxu0 %v2765
        %2999 = vmatpush.msra.mxu0 %v2764
        %3000 = vmatpush.msra.mxu0 %v2763
        %3001 = vmatpush.msra.mxu0 %v2762
        %3002 = vmatpush.msra.mxu0 %v2761
        %3003 = vmatpush.msra.mxu0 %v2760
        %3004 = vmatmul.f32.gmra.mxu0 %v2986
        %v3005 = vpop.f32.mrf.mxu0
        %v3006 = vadd.f32 0.0, %v3005
        %3007 = vdwg.mxu0
        %v3008 = vmul.f32 %v3006, %v3006
        %vm3009 = vcmask 253952
        %v3010 = vsel %vm3009, %v3008, 0.0
        %3011 = vadd.xlane.f32.xlu0 %v3010
        %v3012 = vpop.xlane.xlu0 %3011
        %v3013 = vrsqrt.pop %v3012
        %v3014 = vmul.f32 %v3013, %v3012
        %v3015 = vmul.f32 %v3014, %v3013
        %v3016 = vmul.f32 0.5, %v3015
        %v3017 = vsub.f32 1.5, %v3016
        %v3018 = vmul.f32 %v3013, %v3017
        %v3019 = vmul.f32 %v3012, %v3018
        %vm3020 = vcmp.eq.f32.partialorder %v3012, inf
        %v3021 = vsel %vm3020, %v3012, %v3019
        %vm3022 = vcmp.eq.f32.partialorder %v3012, 0.0
        %v3023 = vand.u32 %v3012, 2147483648
        %v3024 = vsel %vm3022, %v3023, %v3021
        %v3025 = vmax.f32 %v3024, 1e-12
        %v3026 = vrcp.pop %v3025
        %v3027 = vmul.f32 %v3025, %v3026
        %v3028 = vsub.f32 1.0, %v3027
        %v3029 = vmul.f32 %v3026, %v3028
        %v3030 = vadd.f32 %v3026, %v3029
        %vm3031 = vweird.f32 %v3025
        %vm3032 = vweird.f32 %v3026
        %vm3033 = vmor %vm3031, %vm3032
        %v3034 = vsel %vm3033, %v3026, %v3030
        %v3035 = vand.u32 2147483647, %v3025
        %vm3036 = vcmp.eq.f32.partialorder %v3035, 8.507059e+37
        %v3037 = vand.u32 %v3025, 2147483648
        %v3038 = vor.u32 1.1754944e-38, %v3037
        %v3039 = vsel %vm3036, %v3038, %v3034
        %v3040 = vmul.f32 %v3006, %v3039
        %3041 = vst.msk [vmem:[%s257] sm:$0x1] %vm3009, %v3040
        %s3042 = sand.u32 %s160, 1
        %s3043 = scalar_lea.sflag [#allocation3], %s3042
        %s3044 = sand.u32 %s160, 1
        %s3045 = scalar_lea.vmem [#allocation5], %s3044
        // Predicated region
        $region49: #{graph_layer_forward.1} parent=43 // pred_check
          %p3046 = pneg %p170
        $region50: #{graph_layer_forward.1} parent=43 // pred_check_branch
          %3048 = sbr.rel (%p3046) target = $region52
        $region51: #{graph_layer_forward.1} parent=43 // pred_region
          %3050 = vsyncadd %s3043, 0
          %s3051 = scalar_lea.hbm %s6, %s21
          %s3053 = sshll.u32 %s3045, 4
          %s3054 = int_to_ptr.vmem [resolvable:$true] %s3053
          %s3055 = sshll.u32 %s3051, 4
          %s3056 = int_to_ptr.hbm [resolvable:$true] %s3055
          %3058 = dma.vmem_to_hbm [thread:$0]  %s3054, 16, %s3056, %s3043
        $region52: #{graph_layer_forward.1} parent=43 // pred_fallthru
          _
      $region44: #{graph_layer_forward.1} parent=5 // pred_fallthru
        _
      %p3059 = scmp.le.s32.totalorder 2, %s16
      // Predicated region
      $region53: #{graph_layer_forward.1} parent=5 // pred_check
        %p3060 = pneg %p3059
      $region54: #{graph_layer_forward.1} parent=5 // pred_check_branch
        %3062 = sbr.rel (%p3060) target = $region56
      $region55: #{graph_layer_forward.1} parent=5 // pred_region
        %s3063 = ssub.s32 %s16, 2
        // Predicated region
        $region57: #{graph_layer_forward.1} parent=55 // pred_check
          %p3064 = pneg %p176
        $region58: #{graph_layer_forward.1} parent=55 // pred_check_branch
          %3066 = sbr.rel (%p3064) target = $region60
        $region59: #{graph_layer_forward.1} parent=55 // pred_region
          %s3067 = sand.u32 %s161, 1
          %s3068 = scalar_lea.sflag [#allocation3], %s3067
          %s3069 = sand.u32 %s161, 1
          %s3070 = scalar_lea.vmem [#allocation5], %s3069
          %3072 = dma.done %s3068, 16
        $region60: #{graph_layer_forward.1} parent=55 // pred_fallthru
          _
      $region56: #{graph_layer_forward.1} parent=5 // pred_fallthru
        _
    $region6: #{graph_layer_forward.1} parent=1 // loop_footer
      %s20 = sadd.s32 1, %s16
    $region7: #{graph_layer_forward.1} parent=1 // loop_footer_branch
      %15 = sbr.rel target = $region3
    $region8: #{graph_layer_forward.1} parent=1 // loop_exit
      _
    %3073 = vsyncpa [#allocation3], 1
    %s3074 = scalar_lea.sflag [#allocation3], 1
    %3075 = vsyncpa %s3074, 1
    %3076 = vsyncpa [#allocation4], 1
    %s3077 = scalar_lea.sflag [#allocation4], 1
    %3078 = vsyncpa %s3077, 1

</llo_original>
